<compile_context>
chip_gen: v7x
topology: tpu7x:2x2x1
jax: 0.10.0
libtpu: 0.0.40
codegen_flags: <defaults>
</compile_context>

<pallas_src>
import jax
import jax.numpy as jnp
from jax.experimental import pallas as pl
from jax.experimental.pallas import tpu as pltpu


# ----------------------------------------------------------------------------- #
# Pallas kernel
# ----------------------------------------------------------------------------- #
def _make_lstm_kernel(BB, TC, H, OUT, has_proj, compute_dtype):
    """Build the kernel body.  BB = batch-block size, TC = time-chunk length."""
    H2, H8 = 2 * H, 8 * H

    def kernel(xr_ref, xi_ref, wih_ref, whh_ref, b_ref, *rest):
        if has_proj:
            (wpr_ref, bpr_ref, wpi_ref, bpi_ref,
             yr_ref, yi_ref, h_ref, c_ref, gx_ref, hbuf_ref) = rest
        else:
            yr_ref, yi_ref, h_ref, c_ref, gx_ref, hbuf_ref = rest

        # Fresh recurrent state at the start of each batch block's time sweep.
        @pl.when(pl.program_id(1) == 0)
        def _():
            h_ref[...] = jnp.zeros_like(h_ref)
            c_ref[...] = jnp.zeros_like(c_ref)

        # ---- hoisted input projection: one chunk-wide MXU matmul, bias folded ----
        # Rows: [real-part batch ; imag-part batch].  Columns (gate-grouped over the
        # two LSTMs): [i_r i_i | f_r f_i | g_r g_i | o_r o_i], each block H wide.
        x = jnp.concatenate([xr_ref[...], xi_ref[...]], axis=0)   # (2BB, TC, D)
        x2 = x.reshape(2 * BB * TC, x.shape[-1]).astype(compute_dtype)
        gx = jnp.dot(x2, wih_ref[...], preferred_element_type=jnp.float32)
        gx_ref[...] = gx.reshape(2 * BB, TC, H8) + b_ref[...]     # (2BB, TC, 8H)

        whh = whh_ref[...]            # (2H, 8H): both LSTMs' recurrent weights, fused
        h = h_ref[...]                # (2BB, 2H) = [h_real_lstm | h_imag_lstm]
        c = c_ref[...]                # (2BB, 2H) = [c_real_lstm | c_imag_lstm]

        # ---- serial recurrence: one fused h @ Whh matmul + gate math per step ----
        for tt in range(TC):          # static unroll; the chunk grid bounds live ranges
            g = gx_ref[:, tt, :] + jnp.dot(h.astype(compute_dtype), whh,
                                           preferred_element_type=jnp.float32)
            i_g = jax.nn.sigmoid(g[:, 0:H2])          # input gates  (both LSTMs)
            f_g = jax.nn.sigmoid(g[:, H2:2 * H2])     # forget gates
            g_g = jnp.tanh(g[:, 2 * H2:3 * H2])       # cell candidates
            o_g = jax.nn.sigmoid(g[:, 3 * H2:4 * H2])  # output gates
            c = f_g * c + i_g * g_g
            h = o_g * jnp.tanh(c)
            hbuf_ref[:, tt, :] = h                    # stage hidden for the epilogue
        h_ref[...] = h
        c_ref[...] = c

        # ---- chunk epilogue: complex recombination + fused projection, block store ----
        hs = hbuf_ref[...]                            # (2BB, TC, 2H)
        r2r = hs[0:BB, :, 0:H]                        # real_lstm(real)
        r2i = hs[0:BB, :, H:H2]                       # imag_lstm(real)
        i2r = hs[BB:2 * BB, :, 0:H]                   # real_lstm(imag)
        i2i = hs[BB:2 * BB, :, H:H2]                  # imag_lstm(imag)
        real_o = r2r - i2i                            # (BB, TC, H)
        imag_o = i2r + r2i
        if has_proj:
            real_o = (jnp.dot(real_o.reshape(BB * TC, H).astype(compute_dtype),
                              wpr_ref[...], preferred_element_type=jnp.float32)
                      + bpr_ref[...]).reshape(BB, TC, OUT)
            imag_o = (jnp.dot(imag_o.reshape(BB * TC, H).astype(compute_dtype),
                              wpi_ref[...], preferred_element_type=jnp.float32)
                      + bpi_ref[...]).reshape(BB, TC, OUT)
        yr_ref[...] = real_o                          # single full-block store per chunk
        yi_ref[...] = imag_o

    return kernel


# ----------------------------------------------------------------------------- #
# Weight packing (done once in the wrapper; tiny arrays)
# ----------------------------------------------------------------------------- #
def _prep_weights(params, compute_dtype):
    pr, pi = params["real"], params["imag"]
    H = pr["w_hh"].shape[1]

    def gate_blocks(w):   # torch (4H, in) -> four (in, H) blocks in i, f, g, o order
        return [w[g * H:(g + 1) * H, :].T for g in range(4)]

    wih_r, wih_i = gate_blocks(pr["w_ih"]), gate_blocks(pi["w_ih"])
    whh_r, whh_i = gate_blocks(pr["w_hh"]), gate_blocks(pi["w_hh"])
    b_r = pr["b_ih"] + pr["b_hh"]
    b_i = pi["b_ih"] + pi["b_hh"]

    # Input weights of both LSTMs fused on the output axis: (D, 8H).
    wih_cat = jnp.concatenate(
        [jnp.concatenate([wih_r[g], wih_i[g]], axis=1) for g in range(4)], axis=1)

    # Recurrent weights fused into one (2H, 8H) matrix (block structure) so the
    # serial loop issues a single MXU op: rows 0:H act on real_lstm's h, H:2H on
    # imag_lstm's h.
    zeros = jnp.zeros((H, H), jnp.float32)
    whh_bd = jnp.concatenate(
        [jnp.block([[whh_r[g], zeros], [zeros, whh_i[g]]]) for g in range(4)], axis=1)

    b_cat = jnp.concatenate(
        [jnp.concatenate([b_r[g * H:(g + 1) * H], b_i[g * H:(g + 1) * H]])
         for g in range(4)])[None, :]                                   # (1, 8H)

    proj = None
    if params.get("proj") is not None:
        pp = params["proj"]
        proj = (pp["r_w"].T.astype(compute_dtype), pp["r_b"][None, :].astype(jnp.float32),
                pp["i_w"].T.astype(compute_dtype), pp["i_b"][None, :].astype(jnp.float32))
    return (wih_cat.astype(compute_dtype), whh_bd.astype(compute_dtype),
            b_cat.astype(jnp.float32), proj)


def _pick_time_chunk(T, target):
    # A chunk that is a multiple of 16 keeps every block's second-minor dim a valid
    # sublane tiling for both f32 and bf16; otherwise fall back to a single chunk
    # (block == full sequence is always a legal blocking).
    for tc in range(min(target, T), 15, -1):
        if tc % 16 == 0 and T % tc == 0:
            return tc
    return T


# ----------------------------------------------------------------------------- #
# Forward (Pallas)
# ----------------------------------------------------------------------------- #
def complex_lstm_forward(x, params, *, time_chunk=16, compute_dtype=jnp.bfloat16):
    """x: complex64 (B, T, D), batch_first. Returns complex64 (B, T, H or P)."""
    real = jnp.real(x).astype(jnp.float32)
    imag = jnp.imag(x).astype(jnp.float32)
    B, T, D = real.shape
    H = params["real"]["w_hh"].shape[1]
    has_proj = params.get("proj") is not None
    OUT = params["proj"]["r_w"].shape[0] if has_proj else H

    TC = _pick_time_chunk(T, time_chunk)
    nt = T // TC

    wih_cat, whh_bd, b_cat, proj_w = _prep_weights(params, compute_dtype)

    # Stream inputs at matmul precision (halves x HBM traffic when bf16).
    xr = real.astype(compute_dtype)
    xi = imag.astype(compute_dtype)

    # Batch blocking: rows of the stacked [real; imag] batch are independent, so the
    # leading grid axis is "parallel" (megacore / v7x 2-TC split for larger batches).
    BB = B
    nb = B // BB

    x_spec = pl.BlockSpec((BB, TC, D), lambda b, t: (b, t, 0))
    y_spec = pl.BlockSpec((BB, TC, OUT), lambda b, t: (b, t, 0))

    def full(a):  # small weight arrays: whole-array VMEM-resident blocks
        return pl.BlockSpec(a.shape, lambda b, t, _nd=a.ndim: (0,) * _nd)

    inputs = [xr, xi, wih_cat, whh_bd, b_cat]
    in_specs = [x_spec, x_spec, full(wih_cat), full(whh_bd), full(b_cat)]
    if has_proj:
        wpr, bpr, wpi, bpi = proj_w
        inputs += [wpr, bpr, wpi, bpi]
        in_specs += [full(wpr), full(bpr), full(wpi), full(bpi)]

    kernel = _make_lstm_kernel(BB, TC, H, OUT, has_proj, compute_dtype)

    yr, yi = pl.pallas_call(
        kernel,
        grid=(nb, nt),
        in_specs=in_specs,
        out_specs=(y_spec, y_spec),
        out_shape=(jax.ShapeDtypeStruct((B, T, OUT), jnp.float32),
                   jax.ShapeDtypeStruct((B, T, OUT), jnp.float32)),
        scratch_shapes=[
            pltpu.VMEM((2 * BB, 2 * H), jnp.float32),       # h carry (both LSTMs)
            pltpu.VMEM((2 * BB, 2 * H), jnp.float32),       # c carry
            pltpu.VMEM((2 * BB, TC, 8 * H), jnp.float32),   # per-chunk input gates
            pltpu.VMEM((2 * BB, TC, 2 * H), jnp.float32),   # per-chunk hidden staging
        ],
        compiler_params=pltpu.CompilerParams(
            dimension_semantics=("parallel", "arbitrary"),
            vmem_limit_bytes=32 * 1024 * 1024),
    )(*inputs)

    return jax.lax.complex(yr, yi)


# ----------------------------------------------------------------------------- #
# Parameters (deterministic, PyTorch-style uniform init)
# ----------------------------------------------------------------------------- #
def init_params(key, input_size, hidden_size, projection_dim=None):
    D, H = input_size, hidden_size
    k = 1.0 / (H ** 0.5)
    keys = jax.random.split(key, 12)

    def lstm_p(ks):
        return {
            "w_ih": jax.random.uniform(ks[0], (4 * H, D), jnp.float32, -k, k),
            "w_hh": jax.random.uniform(ks[1], (4 * H, H), jnp.float32, -k, k),
            "b_ih": jax.random.uniform(ks[2], (4 * H,), jnp.float32, -k, k),
            "b_hh": jax.random.uniform(ks[3], (4 * H,), jnp.float32, -k, k),
        }

    params = {"real": lstm_p(keys[0:4]), "imag": lstm_p(keys[4:8]), "proj": None}
    if projection_dim is not None:
        P = projection_dim
        kl = 1.0 / (H ** 0.5)  # in_features = hidden_size * num_directions (=1)
        params["proj"] = {
            "r_w": jax.random.uniform(keys[8], (P, H), jnp.float32, -kl, kl),
            "r_b": jax.random.uniform(keys[9], (P,), jnp.float32, -kl, kl),
            "i_w": jax.random.uniform(keys[10], (P, H), jnp.float32, -kl, kl),
            "i_b": jax.random.uniform(keys[11], (P,), jnp.float32, -kl, kl),
        }
    return params


# ----------------------------------------------------------------------------- #
# Pure-JAX reference (mirrors torch.nn.LSTM / torch.nn.Linear semantics)
# ----------------------------------------------------------------------------- #
def _lstm_ref(x, p):  # x: (B, T, D) batch_first
    w_ih, w_hh, b_ih, b_hh = p["w_ih"], p["w_hh"], p["b_ih"], p["b_hh"]
    H = w_hh.shape[1]
    B = x.shape[0]

    def cell(carry, x_t):
        h, c = carry
        gates = x_t @ w_ih.T + h @ w_hh.T + b_ih + b_hh
        i, f, g, o = jnp.split(gates, 4, axis=-1)
        i = jax.nn.sigmoid(i)
        f = jax.nn.sigmoid(f)
        g = jnp.tanh(g)
        o = jax.nn.sigmoid(o)
        c = f * c + i * g
        h = o * jnp.tanh(c)
        return (h, c), h

    init = (jnp.zeros((B, H), jnp.float32), jnp.zeros((B, H), jnp.float32))
    _, ys = jax.lax.scan(cell, init, jnp.swapaxes(x, 0, 1))
    return jnp.swapaxes(ys, 0, 1)


def complex_lstm_reference(x, params):
    real = jnp.real(x).astype(jnp.float32)
    imag = jnp.imag(x).astype(jnp.float32)
    r2r = _lstm_ref(real, params["real"])
    r2i = _lstm_ref(real, params["imag"])
    i2r = _lstm_ref(imag, params["real"])
    i2i = _lstm_ref(imag, params["imag"])
    real_out = r2r - i2i
    imag_out = i2r + r2i
    if params.get("proj") is not None:
        real_out = real_out @ params["proj"]["r_w"].T + params["proj"]["r_b"]
        imag_out = imag_out @ params["proj"]["i_w"].T + params["proj"]["i_b"]
    return jax.lax.complex(real_out, imag_out)


# ----------------------------------------------------------------------------- #
if __name__ == "__main__":
    B, T, D, H, P = 2, 32, 16, 32, 16   # batch, seq, input_size, hidden, projection

    key = jax.random.PRNGKey(0)
    k_x, k_p = jax.random.split(key)
    kr, ki = jax.random.split(k_x)
    real_in = jax.random.normal(kr, (B, T, D), jnp.float32)
    imag_in = jax.random.normal(ki, (B, T, D), jnp.float32)
    x = jax.lax.complex(real_in, imag_in)            # complex64, batch_first (B, T, D)

    params = init_params(k_p, input_size=D, hidden_size=H, projection_dim=P)
    params_noproj = {"real": params["real"], "imag": params["imag"], "proj": None}

    fwd = jax.jit(complex_lstm_forward, static_argnames=("time_chunk", "compute_dtype"))

    ref = complex_lstm_reference(x, params)
    ref_np = complex_lstm_reference(x, params_noproj)

    # (1) f32 matmul path: tight(ened) budget; covers MXU / transcendental impl
    #     differences accumulated over the T=32 recurrence.
    out = jax.block_until_ready(fwd(x, params, compute_dtype=jnp.float32))
    assert out.shape == (B, T, P), out.shape
    assert out.dtype == jnp.complex64, out.dtype
    err = float(jnp.max(jnp.abs(out - ref)))
    if not err < 1e-2:
        raise AssertionError(f"f32 path mismatch: max abs err = {err}")

    # (2) bf16 MXU path: deliberate bf16 error budget (inputs/weights bf16,
    #     f32 accumulation and gate math).
    out_bf = jax.block_until_ready(fwd(x, params, compute_dtype=jnp.bfloat16))
    err_bf = float(jnp.max(jnp.abs(out_bf - ref)))
    if not err_bf < 1e-1:
        raise AssertionError(f"bf16 path mismatch: max abs err = {err_bf}")

    # (3) no-projection configuration, f32.
    out_np = jax.block_until_ready(fwd(x, params_noproj, compute_dtype=jnp.float32))
    assert out_np.shape == (B, T, H), out_np.shape
    err_np = float(jnp.max(jnp.abs(out_np - ref_np)))
    if not err_np < 1e-2:
        raise AssertionError(f"no-proj path mismatch: max abs err = {err_np}")

    print("KERNEL_OK")
</pallas_src>

<mosaic_0001>
module attributes {stable_mosaic.version = 11 : i64} {
  func.func @kernel(%arg0: i32, %arg1: i32, %arg2: memref<2x16x16xf32, #tpu.memory_space<vmem>>, %arg3: memref<2x16x16xf32, #tpu.memory_space<vmem>>, %arg4: memref<16x256xf32, #tpu.memory_space<vmem>>, %arg5: memref<64x256xf32, #tpu.memory_space<vmem>>, %arg6: memref<1x256xf32, #tpu.memory_space<vmem>>, %arg7: memref<32x16xf32, #tpu.memory_space<vmem>>, %arg8: memref<1x16xf32, #tpu.memory_space<vmem>>, %arg9: memref<32x16xf32, #tpu.memory_space<vmem>>, %arg10: memref<1x16xf32, #tpu.memory_space<vmem>>, %arg11: memref<2x16x16xf32, #tpu.memory_space<vmem>>, %arg12: memref<2x16x16xf32, #tpu.memory_space<vmem>>, %arg13: memref<4x64xf32, #tpu.memory_space<vmem>>, %arg14: memref<4x64xf32, #tpu.memory_space<vmem>>, %arg15: memref<4x16x256xf32, #tpu.memory_space<vmem>>, %arg16: memref<4x16x64xf32, #tpu.memory_space<vmem>>) attributes {dimension_semantics = [#tpu.dimension_semantics<parallel>, #tpu.dimension_semantics<arbitrary>], iteration_bounds = array<i64: 1, 2>, scalar_prefetch = 0 : i64, scratch_operands = 4 : i64, tpu.core_type = #tpu.core_type<tc>, window_params = [{transform_indices = @transform_0, window_bounds = array<i64: 2, 16, 16>}, {transform_indices = @transform_1, window_bounds = array<i64: 2, 16, 16>}, {pipeline_mode = #tpu.pipeline_mode<synchronous>, transform_indices = @transform_2, window_bounds = array<i64: 16, 256>}, {pipeline_mode = #tpu.pipeline_mode<synchronous>, transform_indices = @transform_3, window_bounds = array<i64: 64, 256>}, {pipeline_mode = #tpu.pipeline_mode<synchronous>, transform_indices = @transform_4, window_bounds = array<i64: 1, 256>}, {pipeline_mode = #tpu.pipeline_mode<synchronous>, transform_indices = @transform_5, window_bounds = array<i64: 32, 16>}, {pipeline_mode = #tpu.pipeline_mode<synchronous>, transform_indices = @transform_6, window_bounds = array<i64: 1, 16>}, {pipeline_mode = #tpu.pipeline_mode<synchronous>, transform_indices = @transform_7, window_bounds = array<i64: 32, 16>}, {pipeline_mode = #tpu.pipeline_mode<synchronous>, transform_indices = @transform_8, window_bounds = array<i64: 1, 16>}, {transform_indices = @transform_9, window_bounds = array<i64: 2, 16, 16>}, {transform_indices = @transform_10, window_bounds = array<i64: 2, 16, 16>}]} {
    %c0_i32 = arith.constant 0 : i32
    %0 = arith.cmpi eq, %arg1, %c0_i32 : i32
    %1 = arith.extui %0 : i1 to i32
    %c0_i32_0 = arith.constant 0 : i32
    %2 = arith.cmpi ne, %1, %c0_i32_0 : i32
    scf.if %2 {
      %cst_187 = arith.constant 0.000000e+00 : f32
      %555 = vector.broadcast %cst_187 : f32 to vector<4x64xf32>
      %c0_188 = arith.constant 0 : index
      %c0_189 = arith.constant 0 : index
      %556 = vector.load %arg13[%c0_188, %c0_189] : memref<4x64xf32, #tpu.memory_space<vmem>>, vector<4x64xf32>
      tpu.vector_store %arg13[%c0_188, %c0_189], %555 {strides = array<i32>} : memref<4x64xf32, #tpu.memory_space<vmem>>, vector<4x64xf32>,
      %cst_190 = arith.constant 0.000000e+00 : f32
      %557 = vector.broadcast %cst_190 : f32 to vector<4x64xf32>
      %c0_191 = arith.constant 0 : index
      %c0_192 = arith.constant 0 : index
      %558 = vector.load %arg14[%c0_191, %c0_192] : memref<4x64xf32, #tpu.memory_space<vmem>>, vector<4x64xf32>
      tpu.vector_store %arg14[%c0_191, %c0_192], %557 {strides = array<i32>} : memref<4x64xf32, #tpu.memory_space<vmem>>, vector<4x64xf32>,
    } else {
    }
    %c0 = arith.constant 0 : index
    %c0_1 = arith.constant 0 : index
    %c0_2 = arith.constant 0 : index
    %3 = vector.load %arg2[%c0, %c0_1, %c0_2] : memref<2x16x16xf32, #tpu.memory_space<vmem>>, vector<2x16x16xf32>
    %c0_3 = arith.constant 0 : index
    %c0_4 = arith.constant 0 : index
    %c0_5 = arith.constant 0 : index
    %4 = vector.load %arg3[%c0_3, %c0_4, %c0_5] : memref<2x16x16xf32, #tpu.memory_space<vmem>>, vector<2x16x16xf32>
    %5 = tpu.concatenate %3, %4 in 0 : vector<2x16x16xf32>, vector<2x16x16xf32> -> vector<4x16x16xf32>
    %6 = vector.shape_cast %5 : vector<4x16x16xf32> to vector<64x16xf32>
    %c0_6 = arith.constant 0 : index
    %c0_7 = arith.constant 0 : index
    %7 = vector.load %arg4[%c0_6, %c0_7] : memref<16x256xf32, #tpu.memory_space<vmem>>, vector<16x256xf32>
    %cst = arith.constant dense<0.000000e+00> : vector<64x256xf32>
    %8 = tpu.matmul %6, %7, %cst {dimension_numbers = #tpu.dot_dimension_numbers<[1], [0], [0], [1], [0, 0, 1, 1], [], []>} : vector<64x16xf32>, vector<16x256xf32>, vector<64x256xf32> -> vector<64x256xf32>
    %9 = vector.shape_cast %8 : vector<64x256xf32> to vector<4x16x256xf32>
    %c0_8 = arith.constant 0 : index
    %c0_9 = arith.constant 0 : index
    %10 = vector.load %arg6[%c0_8, %c0_9] : memref<1x256xf32, #tpu.memory_space<vmem>>, vector<1x256xf32>
    %11 = vector.shape_cast %10 : vector<1x256xf32> to vector<1x1x256xf32>
    %12 = vector.broadcast %11 : vector<1x1x256xf32> to vector<4x16x256xf32>
    %13 = arith.addf %9, %12 : vector<4x16x256xf32>
    %c0_10 = arith.constant 0 : index
    %c0_11 = arith.constant 0 : index
    %c0_12 = arith.constant 0 : index
    %14 = vector.load %arg15[%c0_10, %c0_11, %c0_12] : memref<4x16x256xf32, #tpu.memory_space<vmem>>, vector<4x16x256xf32>
    tpu.vector_store %arg15[%c0_10, %c0_11, %c0_12], %13 {strides = array<i32>} : memref<4x16x256xf32, #tpu.memory_space<vmem>>, vector<4x16x256xf32>,
    %c0_13 = arith.constant 0 : index
    %c0_14 = arith.constant 0 : index
    %15 = vector.load %arg5[%c0_13, %c0_14] : memref<64x256xf32, #tpu.memory_space<vmem>>, vector<64x256xf32>
    %c0_15 = arith.constant 0 : index
    %c0_16 = arith.constant 0 : index
    %16 = vector.load %arg13[%c0_15, %c0_16] : memref<4x64xf32, #tpu.memory_space<vmem>>, vector<4x64xf32>
    %c0_17 = arith.constant 0 : index
    %c0_18 = arith.constant 0 : index
    %17 = vector.load %arg14[%c0_17, %c0_18] : memref<4x64xf32, #tpu.memory_space<vmem>>, vector<4x64xf32>
    %c0_19 = arith.constant 0 : index
    %c0_20 = arith.constant 0 : index
    %c0_21 = arith.constant 0 : index
    %18 = vector.load %arg15[%c0_19, %c0_20, %c0_21] : memref<4x16x256xf32, #tpu.memory_space<vmem>>, vector<4x1x256xf32>
    %19 = vector.shape_cast %18 : vector<4x1x256xf32> to vector<4x256xf32>
    %cst_22 = arith.constant dense<0.000000e+00> : vector<4x256xf32>
    %20 = tpu.matmul %16, %15, %cst_22 {dimension_numbers = #tpu.dot_dimension_numbers<[1], [0], [0], [1], [0, 0, 1, 1], [], []>} : vector<4x64xf32>, vector<64x256xf32>, vector<4x256xf32> -> vector<4x256xf32>
    %21 = arith.addf %19, %20 : vector<4x256xf32>
    %22 = vector.extract_strided_slice %21 {offsets = [0, 0], sizes = [4, 64], strides = [1, 1]} : vector<4x256xf32> to vector<4x64xf32>
    %23 = arith.negf %22 : vector<4x64xf32>
    %24 = math.exp %23 : vector<4x64xf32>
    %cst_23 = arith.constant 1.000000e+00 : f32
    %25 = vector.broadcast %cst_23 : f32 to vector<4x64xf32>
    %26 = arith.addf %25, %24 : vector<4x64xf32>
    %27 = arith.divf %25, %26 : vector<4x64xf32>
    %28 = vector.extract_strided_slice %21 {offsets = [0, 64], sizes = [4, 64], strides = [1, 1]} : vector<4x256xf32> to vector<4x64xf32>
    %29 = arith.negf %28 : vector<4x64xf32>
    %30 = math.exp %29 : vector<4x64xf32>
    %cst_24 = arith.constant 1.000000e+00 : f32
    %31 = vector.broadcast %cst_24 : f32 to vector<4x64xf32>
    %32 = arith.addf %31, %30 : vector<4x64xf32>
    %33 = arith.divf %31, %32 : vector<4x64xf32>
    %34 = vector.extract_strided_slice %21 {offsets = [0, 128], sizes = [4, 64], strides = [1, 1]} : vector<4x256xf32> to vector<4x64xf32>
    %35 = math.tanh %34 : vector<4x64xf32>
    %36 = vector.extract_strided_slice %21 {offsets = [0, 192], sizes = [4, 64], strides = [1, 1]} : vector<4x256xf32> to vector<4x64xf32>
    %37 = arith.negf %36 : vector<4x64xf32>
    %38 = math.exp %37 : vector<4x64xf32>
    %cst_25 = arith.constant 1.000000e+00 : f32
    %39 = vector.broadcast %cst_25 : f32 to vector<4x64xf32>
    %40 = arith.addf %39, %38 : vector<4x64xf32>
    %41 = arith.divf %39, %40 : vector<4x64xf32>
    %42 = arith.mulf %33, %17 : vector<4x64xf32>
    %43 = arith.mulf %27, %35 : vector<4x64xf32>
    %44 = arith.addf %42, %43 : vector<4x64xf32>
    %45 = math.tanh %44 : vector<4x64xf32>
    %46 = arith.mulf %41, %45 : vector<4x64xf32>
    %c0_26 = arith.constant 0 : index
    %c0_27 = arith.constant 0 : index
    %c0_28 = arith.constant 0 : index
    %47 = vector.load %arg16[%c0_26, %c0_27, %c0_28] : memref<4x16x64xf32, #tpu.memory_space<vmem>>, vector<4x1x64xf32>
    %48 = vector.shape_cast %47 : vector<4x1x64xf32> to vector<4x64xf32>
    %49 = vector.shape_cast %46 : vector<4x64xf32> to vector<4x1x64xf32>
    tpu.vector_store %arg16[%c0_26, %c0_27, %c0_28], %49 {strides = array<i32>} : memref<4x16x64xf32, #tpu.memory_space<vmem>>, vector<4x1x64xf32>,
    %c0_29 = arith.constant 0 : index
    %c1 = arith.constant 1 : index
    %c0_30 = arith.constant 0 : index
    %50 = vector.load %arg15[%c0_29, %c1, %c0_30] : memref<4x16x256xf32, #tpu.memory_space<vmem>>, vector<4x1x256xf32>
    %51 = vector.shape_cast %50 : vector<4x1x256xf32> to vector<4x256xf32>
    %cst_31 = arith.constant dense<0.000000e+00> : vector<4x256xf32>
    %52 = tpu.matmul %46, %15, %cst_31 {dimension_numbers = #tpu.dot_dimension_numbers<[1], [0], [0], [1], [0, 0, 1, 1], [], []>} : vector<4x64xf32>, vector<64x256xf32>, vector<4x256xf32> -> vector<4x256xf32>
    %53 = arith.addf %51, %52 : vector<4x256xf32>
    %54 = vector.extract_strided_slice %53 {offsets = [0, 0], sizes = [4, 64], strides = [1, 1]} : vector<4x256xf32> to vector<4x64xf32>
    %55 = arith.negf %54 : vector<4x64xf32>
    %56 = math.exp %55 : vector<4x64xf32>
    %cst_32 = arith.constant 1.000000e+00 : f32
    %57 = vector.broadcast %cst_32 : f32 to vector<4x64xf32>
    %58 = arith.addf %57, %56 : vector<4x64xf32>
    %59 = arith.divf %57, %58 : vector<4x64xf32>
    %60 = vector.extract_strided_slice %53 {offsets = [0, 64], sizes = [4, 64], strides = [1, 1]} : vector<4x256xf32> to vector<4x64xf32>
    %61 = arith.negf %60 : vector<4x64xf32>
    %62 = math.exp %61 : vector<4x64xf32>
    %cst_33 = arith.constant 1.000000e+00 : f32
    %63 = vector.broadcast %cst_33 : f32 to vector<4x64xf32>
    %64 = arith.addf %63, %62 : vector<4x64xf32>
    %65 = arith.divf %63, %64 : vector<4x64xf32>
    %66 = vector.extract_strided_slice %53 {offsets = [0, 128], sizes = [4, 64], strides = [1, 1]} : vector<4x256xf32> to vector<4x64xf32>
    %67 = math.tanh %66 : vector<4x64xf32>
    %68 = vector.extract_strided_slice %53 {offsets = [0, 192], sizes = [4, 64], strides = [1, 1]} : vector<4x256xf32> to vector<4x64xf32>
    %69 = arith.negf %68 : vector<4x64xf32>
    %70 = math.exp %69 : vector<4x64xf32>
    %cst_34 = arith.constant 1.000000e+00 : f32
    %71 = vector.broadcast %cst_34 : f32 to vector<4x64xf32>
    %72 = arith.addf %71, %70 : vector<4x64xf32>
    %73 = arith.divf %71, %72 : vector<4x64xf32>
    %74 = arith.mulf %65, %44 : vector<4x64xf32>
    %75 = arith.mulf %59, %67 : vector<4x64xf32>
    %76 = arith.addf %74, %75 : vector<4x64xf32>
    %77 = math.tanh %76 : vector<4x64xf32>
    %78 = arith.mulf %73, %77 : vector<4x64xf32>
    %c0_35 = arith.constant 0 : index
    %c1_36 = arith.constant 1 : index
    %c0_37 = arith.constant 0 : index
    %79 = vector.load %arg16[%c0_35, %c1_36, %c0_37] : memref<4x16x64xf32, #tpu.memory_space<vmem>>, vector<4x1x64xf32>
    %80 = vector.shape_cast %79 : vector<4x1x64xf32> to vector<4x64xf32>
    %81 = vector.shape_cast %78 : vector<4x64xf32> to vector<4x1x64xf32>
    tpu.vector_store %arg16[%c0_35, %c1_36, %c0_37], %81 {strides = array<i32>} : memref<4x16x64xf32, #tpu.memory_space<vmem>>, vector<4x1x64xf32>,
    %c0_38 = arith.constant 0 : index
    %c2 = arith.constant 2 : index
    %c0_39 = arith.constant 0 : index
    %82 = vector.load %arg15[%c0_38, %c2, %c0_39] : memref<4x16x256xf32, #tpu.memory_space<vmem>>, vector<4x1x256xf32>
    %83 = vector.shape_cast %82 : vector<4x1x256xf32> to vector<4x256xf32>
    %cst_40 = arith.constant dense<0.000000e+00> : vector<4x256xf32>
    %84 = tpu.matmul %78, %15, %cst_40 {dimension_numbers = #tpu.dot_dimension_numbers<[1], [0], [0], [1], [0, 0, 1, 1], [], []>} : vector<4x64xf32>, vector<64x256xf32>, vector<4x256xf32> -> vector<4x256xf32>
    %85 = arith.addf %83, %84 : vector<4x256xf32>
    %86 = vector.extract_strided_slice %85 {offsets = [0, 0], sizes = [4, 64], strides = [1, 1]} : vector<4x256xf32> to vector<4x64xf32>
    %87 = arith.negf %86 : vector<4x64xf32>
    %88 = math.exp %87 : vector<4x64xf32>
    %cst_41 = arith.constant 1.000000e+00 : f32
    %89 = vector.broadcast %cst_41 : f32 to vector<4x64xf32>
    %90 = arith.addf %89, %88 : vector<4x64xf32>
    %91 = arith.divf %89, %90 : vector<4x64xf32>
    %92 = vector.extract_strided_slice %85 {offsets = [0, 64], sizes = [4, 64], strides = [1, 1]} : vector<4x256xf32> to vector<4x64xf32>
    %93 = arith.negf %92 : vector<4x64xf32>
    %94 = math.exp %93 : vector<4x64xf32>
    %cst_42 = arith.constant 1.000000e+00 : f32
    %95 = vector.broadcast %cst_42 : f32 to vector<4x64xf32>
    %96 = arith.addf %95, %94 : vector<4x64xf32>
    %97 = arith.divf %95, %96 : vector<4x64xf32>
    %98 = vector.extract_strided_slice %85 {offsets = [0, 128], sizes = [4, 64], strides = [1, 1]} : vector<4x256xf32> to vector<4x64xf32>
    %99 = math.tanh %98 : vector<4x64xf32>
    %100 = vector.extract_strided_slice %85 {offsets = [0, 192], sizes = [4, 64], strides = [1, 1]} : vector<4x256xf32> to vector<4x64xf32>
    %101 = arith.negf %100 : vector<4x64xf32>
    %102 = math.exp %101 : vector<4x64xf32>
    %cst_43 = arith.constant 1.000000e+00 : f32
    %103 = vector.broadcast %cst_43 : f32 to vector<4x64xf32>
    %104 = arith.addf %103, %102 : vector<4x64xf32>
    %105 = arith.divf %103, %104 : vector<4x64xf32>
    %106 = arith.mulf %97, %76 : vector<4x64xf32>
    %107 = arith.mulf %91, %99 : vector<4x64xf32>
    %108 = arith.addf %106, %107 : vector<4x64xf32>
    %109 = math.tanh %108 : vector<4x64xf32>
    %110 = arith.mulf %105, %109 : vector<4x64xf32>
    %c0_44 = arith.constant 0 : index
    %c2_45 = arith.constant 2 : index
    %c0_46 = arith.constant 0 : index
    %111 = vector.load %arg16[%c0_44, %c2_45, %c0_46] : memref<4x16x64xf32, #tpu.memory_space<vmem>>, vector<4x1x64xf32>
    %112 = vector.shape_cast %111 : vector<4x1x64xf32> to vector<4x64xf32>
    %113 = vector.shape_cast %110 : vector<4x64xf32> to vector<4x1x64xf32>
    tpu.vector_store %arg16[%c0_44, %c2_45, %c0_46], %113 {strides = array<i32>} : memref<4x16x64xf32, #tpu.memory_space<vmem>>, vector<4x1x64xf32>,
    %c0_47 = arith.constant 0 : index
    %c3 = arith.constant 3 : index
    %c0_48 = arith.constant 0 : index
    %114 = vector.load %arg15[%c0_47, %c3, %c0_48] : memref<4x16x256xf32, #tpu.memory_space<vmem>>, vector<4x1x256xf32>
    %115 = vector.shape_cast %114 : vector<4x1x256xf32> to vector<4x256xf32>
    %cst_49 = arith.constant dense<0.000000e+00> : vector<4x256xf32>
    %116 = tpu.matmul %110, %15, %cst_49 {dimension_numbers = #tpu.dot_dimension_numbers<[1], [0], [0], [1], [0, 0, 1, 1], [], []>} : vector<4x64xf32>, vector<64x256xf32>, vector<4x256xf32> -> vector<4x256xf32>
    %117 = arith.addf %115, %116 : vector<4x256xf32>
    %118 = vector.extract_strided_slice %117 {offsets = [0, 0], sizes = [4, 64], strides = [1, 1]} : vector<4x256xf32> to vector<4x64xf32>
    %119 = arith.negf %118 : vector<4x64xf32>
    %120 = math.exp %119 : vector<4x64xf32>
    %cst_50 = arith.constant 1.000000e+00 : f32
    %121 = vector.broadcast %cst_50 : f32 to vector<4x64xf32>
    %122 = arith.addf %121, %120 : vector<4x64xf32>
    %123 = arith.divf %121, %122 : vector<4x64xf32>
    %124 = vector.extract_strided_slice %117 {offsets = [0, 64], sizes = [4, 64], strides = [1, 1]} : vector<4x256xf32> to vector<4x64xf32>
    %125 = arith.negf %124 : vector<4x64xf32>
    %126 = math.exp %125 : vector<4x64xf32>
    %cst_51 = arith.constant 1.000000e+00 : f32
    %127 = vector.broadcast %cst_51 : f32 to vector<4x64xf32>
    %128 = arith.addf %127, %126 : vector<4x64xf32>
    %129 = arith.divf %127, %128 : vector<4x64xf32>
    %130 = vector.extract_strided_slice %117 {offsets = [0, 128], sizes = [4, 64], strides = [1, 1]} : vector<4x256xf32> to vector<4x64xf32>
    %131 = math.tanh %130 : vector<4x64xf32>
    %132 = vector.extract_strided_slice %117 {offsets = [0, 192], sizes = [4, 64], strides = [1, 1]} : vector<4x256xf32> to vector<4x64xf32>
    %133 = arith.negf %132 : vector<4x64xf32>
    %134 = math.exp %133 : vector<4x64xf32>
    %cst_52 = arith.constant 1.000000e+00 : f32
    %135 = vector.broadcast %cst_52 : f32 to vector<4x64xf32>
    %136 = arith.addf %135, %134 : vector<4x64xf32>
    %137 = arith.divf %135, %136 : vector<4x64xf32>
    %138 = arith.mulf %129, %108 : vector<4x64xf32>
    %139 = arith.mulf %123, %131 : vector<4x64xf32>
    %140 = arith.addf %138, %139 : vector<4x64xf32>
    %141 = math.tanh %140 : vector<4x64xf32>
    %142 = arith.mulf %137, %141 : vector<4x64xf32>
    %c0_53 = arith.constant 0 : index
    %c3_54 = arith.constant 3 : index
    %c0_55 = arith.constant 0 : index
    %143 = vector.load %arg16[%c0_53, %c3_54, %c0_55] : memref<4x16x64xf32, #tpu.memory_space<vmem>>, vector<4x1x64xf32>
    %144 = vector.shape_cast %143 : vector<4x1x64xf32> to vector<4x64xf32>
    %145 = vector.shape_cast %142 : vector<4x64xf32> to vector<4x1x64xf32>
    tpu.vector_store %arg16[%c0_53, %c3_54, %c0_55], %145 {strides = array<i32>} : memref<4x16x64xf32, #tpu.memory_space<vmem>>, vector<4x1x64xf32>,
    %c0_56 = arith.constant 0 : index
    %c4 = arith.constant 4 : index
    %c0_57 = arith.constant 0 : index
    %146 = vector.load %arg15[%c0_56, %c4, %c0_57] : memref<4x16x256xf32, #tpu.memory_space<vmem>>, vector<4x1x256xf32>
    %147 = vector.shape_cast %146 : vector<4x1x256xf32> to vector<4x256xf32>
    %cst_58 = arith.constant dense<0.000000e+00> : vector<4x256xf32>
    %148 = tpu.matmul %142, %15, %cst_58 {dimension_numbers = #tpu.dot_dimension_numbers<[1], [0], [0], [1], [0, 0, 1, 1], [], []>} : vector<4x64xf32>, vector<64x256xf32>, vector<4x256xf32> -> vector<4x256xf32>
    %149 = arith.addf %147, %148 : vector<4x256xf32>
    %150 = vector.extract_strided_slice %149 {offsets = [0, 0], sizes = [4, 64], strides = [1, 1]} : vector<4x256xf32> to vector<4x64xf32>
    %151 = arith.negf %150 : vector<4x64xf32>
    %152 = math.exp %151 : vector<4x64xf32>
    %cst_59 = arith.constant 1.000000e+00 : f32
    %153 = vector.broadcast %cst_59 : f32 to vector<4x64xf32>
    %154 = arith.addf %153, %152 : vector<4x64xf32>
    %155 = arith.divf %153, %154 : vector<4x64xf32>
    %156 = vector.extract_strided_slice %149 {offsets = [0, 64], sizes = [4, 64], strides = [1, 1]} : vector<4x256xf32> to vector<4x64xf32>
    %157 = arith.negf %156 : vector<4x64xf32>
    %158 = math.exp %157 : vector<4x64xf32>
    %cst_60 = arith.constant 1.000000e+00 : f32
    %159 = vector.broadcast %cst_60 : f32 to vector<4x64xf32>
    %160 = arith.addf %159, %158 : vector<4x64xf32>
    %161 = arith.divf %159, %160 : vector<4x64xf32>
    %162 = vector.extract_strided_slice %149 {offsets = [0, 128], sizes = [4, 64], strides = [1, 1]} : vector<4x256xf32> to vector<4x64xf32>
    %163 = math.tanh %162 : vector<4x64xf32>
    %164 = vector.extract_strided_slice %149 {offsets = [0, 192], sizes = [4, 64], strides = [1, 1]} : vector<4x256xf32> to vector<4x64xf32>
    %165 = arith.negf %164 : vector<4x64xf32>
    %166 = math.exp %165 : vector<4x64xf32>
    %cst_61 = arith.constant 1.000000e+00 : f32
    %167 = vector.broadcast %cst_61 : f32 to vector<4x64xf32>
    %168 = arith.addf %167, %166 : vector<4x64xf32>
    %169 = arith.divf %167, %168 : vector<4x64xf32>
    %170 = arith.mulf %161, %140 : vector<4x64xf32>
    %171 = arith.mulf %155, %163 : vector<4x64xf32>
    %172 = arith.addf %170, %171 : vector<4x64xf32>
    %173 = math.tanh %172 : vector<4x64xf32>
    %174 = arith.mulf %169, %173 : vector<4x64xf32>
    %c0_62 = arith.constant 0 : index
    %c4_63 = arith.constant 4 : index
    %c0_64 = arith.constant 0 : index
    %175 = vector.load %arg16[%c0_62, %c4_63, %c0_64] : memref<4x16x64xf32, #tpu.memory_space<vmem>>, vector<4x1x64xf32>
    %176 = vector.shape_cast %175 : vector<4x1x64xf32> to vector<4x64xf32>
    %177 = vector.shape_cast %174 : vector<4x64xf32> to vector<4x1x64xf32>
    tpu.vector_store %arg16[%c0_62, %c4_63, %c0_64], %177 {strides = array<i32>} : memref<4x16x64xf32, #tpu.memory_space<vmem>>, vector<4x1x64xf32>,
    %c0_65 = arith.constant 0 : index
    %c5 = arith.constant 5 : index
    %c0_66 = arith.constant 0 : index
    %178 = vector.load %arg15[%c0_65, %c5, %c0_66] : memref<4x16x256xf32, #tpu.memory_space<vmem>>, vector<4x1x256xf32>
    %179 = vector.shape_cast %178 : vector<4x1x256xf32> to vector<4x256xf32>
    %cst_67 = arith.constant dense<0.000000e+00> : vector<4x256xf32>
    %180 = tpu.matmul %174, %15, %cst_67 {dimension_numbers = #tpu.dot_dimension_numbers<[1], [0], [0], [1], [0, 0, 1, 1], [], []>} : vector<4x64xf32>, vector<64x256xf32>, vector<4x256xf32> -> vector<4x256xf32>
    %181 = arith.addf %179, %180 : vector<4x256xf32>
    %182 = vector.extract_strided_slice %181 {offsets = [0, 0], sizes = [4, 64], strides = [1, 1]} : vector<4x256xf32> to vector<4x64xf32>
    %183 = arith.negf %182 : vector<4x64xf32>
    %184 = math.exp %183 : vector<4x64xf32>
    %cst_68 = arith.constant 1.000000e+00 : f32
    %185 = vector.broadcast %cst_68 : f32 to vector<4x64xf32>
    %186 = arith.addf %185, %184 : vector<4x64xf32>
    %187 = arith.divf %185, %186 : vector<4x64xf32>
    %188 = vector.extract_strided_slice %181 {offsets = [0, 64], sizes = [4, 64], strides = [1, 1]} : vector<4x256xf32> to vector<4x64xf32>
    %189 = arith.negf %188 : vector<4x64xf32>
    %190 = math.exp %189 : vector<4x64xf32>
    %cst_69 = arith.constant 1.000000e+00 : f32
    %191 = vector.broadcast %cst_69 : f32 to vector<4x64xf32>
    %192 = arith.addf %191, %190 : vector<4x64xf32>
    %193 = arith.divf %191, %192 : vector<4x64xf32>
    %194 = vector.extract_strided_slice %181 {offsets = [0, 128], sizes = [4, 64], strides = [1, 1]} : vector<4x256xf32> to vector<4x64xf32>
    %195 = math.tanh %194 : vector<4x64xf32>
    %196 = vector.extract_strided_slice %181 {offsets = [0, 192], sizes = [4, 64], strides = [1, 1]} : vector<4x256xf32> to vector<4x64xf32>
    %197 = arith.negf %196 : vector<4x64xf32>
    %198 = math.exp %197 : vector<4x64xf32>
    %cst_70 = arith.constant 1.000000e+00 : f32
    %199 = vector.broadcast %cst_70 : f32 to vector<4x64xf32>
    %200 = arith.addf %199, %198 : vector<4x64xf32>
    %201 = arith.divf %199, %200 : vector<4x64xf32>
    %202 = arith.mulf %193, %172 : vector<4x64xf32>
    %203 = arith.mulf %187, %195 : vector<4x64xf32>
    %204 = arith.addf %202, %203 : vector<4x64xf32>
    %205 = math.tanh %204 : vector<4x64xf32>
    %206 = arith.mulf %201, %205 : vector<4x64xf32>
    %c0_71 = arith.constant 0 : index
    %c5_72 = arith.constant 5 : index
    %c0_73 = arith.constant 0 : index
    %207 = vector.load %arg16[%c0_71, %c5_72, %c0_73] : memref<4x16x64xf32, #tpu.memory_space<vmem>>, vector<4x1x64xf32>
    %208 = vector.shape_cast %207 : vector<4x1x64xf32> to vector<4x64xf32>
    %209 = vector.shape_cast %206 : vector<4x64xf32> to vector<4x1x64xf32>
    tpu.vector_store %arg16[%c0_71, %c5_72, %c0_73], %209 {strides = array<i32>} : memref<4x16x64xf32, #tpu.memory_space<vmem>>, vector<4x1x64xf32>,
    %c0_74 = arith.constant 0 : index
    %c6 = arith.constant 6 : index
    %c0_75 = arith.constant 0 : index
    %210 = vector.load %arg15[%c0_74, %c6, %c0_75] : memref<4x16x256xf32, #tpu.memory_space<vmem>>, vector<4x1x256xf32>
    %211 = vector.shape_cast %210 : vector<4x1x256xf32> to vector<4x256xf32>
    %cst_76 = arith.constant dense<0.000000e+00> : vector<4x256xf32>
    %212 = tpu.matmul %206, %15, %cst_76 {dimension_numbers = #tpu.dot_dimension_numbers<[1], [0], [0], [1], [0, 0, 1, 1], [], []>} : vector<4x64xf32>, vector<64x256xf32>, vector<4x256xf32> -> vector<4x256xf32>
    %213 = arith.addf %211, %212 : vector<4x256xf32>
    %214 = vector.extract_strided_slice %213 {offsets = [0, 0], sizes = [4, 64], strides = [1, 1]} : vector<4x256xf32> to vector<4x64xf32>
    %215 = arith.negf %214 : vector<4x64xf32>
    %216 = math.exp %215 : vector<4x64xf32>
    %cst_77 = arith.constant 1.000000e+00 : f32
    %217 = vector.broadcast %cst_77 : f32 to vector<4x64xf32>
    %218 = arith.addf %217, %216 : vector<4x64xf32>
    %219 = arith.divf %217, %218 : vector<4x64xf32>
    %220 = vector.extract_strided_slice %213 {offsets = [0, 64], sizes = [4, 64], strides = [1, 1]} : vector<4x256xf32> to vector<4x64xf32>
    %221 = arith.negf %220 : vector<4x64xf32>
    %222 = math.exp %221 : vector<4x64xf32>
    %cst_78 = arith.constant 1.000000e+00 : f32
    %223 = vector.broadcast %cst_78 : f32 to vector<4x64xf32>
    %224 = arith.addf %223, %222 : vector<4x64xf32>
    %225 = arith.divf %223, %224 : vector<4x64xf32>
    %226 = vector.extract_strided_slice %213 {offsets = [0, 128], sizes = [4, 64], strides = [1, 1]} : vector<4x256xf32> to vector<4x64xf32>
    %227 = math.tanh %226 : vector<4x64xf32>
    %228 = vector.extract_strided_slice %213 {offsets = [0, 192], sizes = [4, 64], strides = [1, 1]} : vector<4x256xf32> to vector<4x64xf32>
    %229 = arith.negf %228 : vector<4x64xf32>
    %230 = math.exp %229 : vector<4x64xf32>
    %cst_79 = arith.constant 1.000000e+00 : f32
    %231 = vector.broadcast %cst_79 : f32 to vector<4x64xf32>
    %232 = arith.addf %231, %230 : vector<4x64xf32>
    %233 = arith.divf %231, %232 : vector<4x64xf32>
    %234 = arith.mulf %225, %204 : vector<4x64xf32>
    %235 = arith.mulf %219, %227 : vector<4x64xf32>
    %236 = arith.addf %234, %235 : vector<4x64xf32>
    %237 = math.tanh %236 : vector<4x64xf32>
    %238 = arith.mulf %233, %237 : vector<4x64xf32>
    %c0_80 = arith.constant 0 : index
    %c6_81 = arith.constant 6 : index
    %c0_82 = arith.constant 0 : index
    %239 = vector.load %arg16[%c0_80, %c6_81, %c0_82] : memref<4x16x64xf32, #tpu.memory_space<vmem>>, vector<4x1x64xf32>
    %240 = vector.shape_cast %239 : vector<4x1x64xf32> to vector<4x64xf32>
    %241 = vector.shape_cast %238 : vector<4x64xf32> to vector<4x1x64xf32>
    tpu.vector_store %arg16[%c0_80, %c6_81, %c0_82], %241 {strides = array<i32>} : memref<4x16x64xf32, #tpu.memory_space<vmem>>, vector<4x1x64xf32>,
    %c0_83 = arith.constant 0 : index
    %c7 = arith.constant 7 : index
    %c0_84 = arith.constant 0 : index
    %242 = vector.load %arg15[%c0_83, %c7, %c0_84] : memref<4x16x256xf32, #tpu.memory_space<vmem>>, vector<4x1x256xf32>
    %243 = vector.shape_cast %242 : vector<4x1x256xf32> to vector<4x256xf32>
    %cst_85 = arith.constant dense<0.000000e+00> : vector<4x256xf32>
    %244 = tpu.matmul %238, %15, %cst_85 {dimension_numbers = #tpu.dot_dimension_numbers<[1], [0], [0], [1], [0, 0, 1, 1], [], []>} : vector<4x64xf32>, vector<64x256xf32>, vector<4x256xf32> -> vector<4x256xf32>
    %245 = arith.addf %243, %244 : vector<4x256xf32>
    %246 = vector.extract_strided_slice %245 {offsets = [0, 0], sizes = [4, 64], strides = [1, 1]} : vector<4x256xf32> to vector<4x64xf32>
    %247 = arith.negf %246 : vector<4x64xf32>
    %248 = math.exp %247 : vector<4x64xf32>
    %cst_86 = arith.constant 1.000000e+00 : f32
    %249 = vector.broadcast %cst_86 : f32 to vector<4x64xf32>
    %250 = arith.addf %249, %248 : vector<4x64xf32>
    %251 = arith.divf %249, %250 : vector<4x64xf32>
    %252 = vector.extract_strided_slice %245 {offsets = [0, 64], sizes = [4, 64], strides = [1, 1]} : vector<4x256xf32> to vector<4x64xf32>
    %253 = arith.negf %252 : vector<4x64xf32>
    %254 = math.exp %253 : vector<4x64xf32>
    %cst_87 = arith.constant 1.000000e+00 : f32
    %255 = vector.broadcast %cst_87 : f32 to vector<4x64xf32>
    %256 = arith.addf %255, %254 : vector<4x64xf32>
    %257 = arith.divf %255, %256 : vector<4x64xf32>
    %258 = vector.extract_strided_slice %245 {offsets = [0, 128], sizes = [4, 64], strides = [1, 1]} : vector<4x256xf32> to vector<4x64xf32>
    %259 = math.tanh %258 : vector<4x64xf32>
    %260 = vector.extract_strided_slice %245 {offsets = [0, 192], sizes = [4, 64], strides = [1, 1]} : vector<4x256xf32> to vector<4x64xf32>
    %261 = arith.negf %260 : vector<4x64xf32>
    %262 = math.exp %261 : vector<4x64xf32>
    %cst_88 = arith.constant 1.000000e+00 : f32
    %263 = vector.broadcast %cst_88 : f32 to vector<4x64xf32>
    %264 = arith.addf %263, %262 : vector<4x64xf32>
    %265 = arith.divf %263, %264 : vector<4x64xf32>
    %266 = arith.mulf %257, %236 : vector<4x64xf32>
    %267 = arith.mulf %251, %259 : vector<4x64xf32>
    %268 = arith.addf %266, %267 : vector<4x64xf32>
    %269 = math.tanh %268 : vector<4x64xf32>
    %270 = arith.mulf %265, %269 : vector<4x64xf32>
    %c0_89 = arith.constant 0 : index
    %c7_90 = arith.constant 7 : index
    %c0_91 = arith.constant 0 : index
    %271 = vector.load %arg16[%c0_89, %c7_90, %c0_91] : memref<4x16x64xf32, #tpu.memory_space<vmem>>, vector<4x1x64xf32>
    %272 = vector.shape_cast %271 : vector<4x1x64xf32> to vector<4x64xf32>
    %273 = vector.shape_cast %270 : vector<4x64xf32> to vector<4x1x64xf32>
    tpu.vector_store %arg16[%c0_89, %c7_90, %c0_91], %273 {strides = array<i32>} : memref<4x16x64xf32, #tpu.memory_space<vmem>>, vector<4x1x64xf32>,
    %c0_92 = arith.constant 0 : index
    %c8 = arith.constant 8 : index
    %c0_93 = arith.constant 0 : index
    %274 = vector.load %arg15[%c0_92, %c8, %c0_93] : memref<4x16x256xf32, #tpu.memory_space<vmem>>, vector<4x1x256xf32>
    %275 = vector.shape_cast %274 : vector<4x1x256xf32> to vector<4x256xf32>
    %cst_94 = arith.constant dense<0.000000e+00> : vector<4x256xf32>
    %276 = tpu.matmul %270, %15, %cst_94 {dimension_numbers = #tpu.dot_dimension_numbers<[1], [0], [0], [1], [0, 0, 1, 1], [], []>} : vector<4x64xf32>, vector<64x256xf32>, vector<4x256xf32> -> vector<4x256xf32>
    %277 = arith.addf %275, %276 : vector<4x256xf32>
    %278 = vector.extract_strided_slice %277 {offsets = [0, 0], sizes = [4, 64], strides = [1, 1]} : vector<4x256xf32> to vector<4x64xf32>
    %279 = arith.negf %278 : vector<4x64xf32>
    %280 = math.exp %279 : vector<4x64xf32>
    %cst_95 = arith.constant 1.000000e+00 : f32
    %281 = vector.broadcast %cst_95 : f32 to vector<4x64xf32>
    %282 = arith.addf %281, %280 : vector<4x64xf32>
    %283 = arith.divf %281, %282 : vector<4x64xf32>
    %284 = vector.extract_strided_slice %277 {offsets = [0, 64], sizes = [4, 64], strides = [1, 1]} : vector<4x256xf32> to vector<4x64xf32>
    %285 = arith.negf %284 : vector<4x64xf32>
    %286 = math.exp %285 : vector<4x64xf32>
    %cst_96 = arith.constant 1.000000e+00 : f32
    %287 = vector.broadcast %cst_96 : f32 to vector<4x64xf32>
    %288 = arith.addf %287, %286 : vector<4x64xf32>
    %289 = arith.divf %287, %288 : vector<4x64xf32>
    %290 = vector.extract_strided_slice %277 {offsets = [0, 128], sizes = [4, 64], strides = [1, 1]} : vector<4x256xf32> to vector<4x64xf32>
    %291 = math.tanh %290 : vector<4x64xf32>
    %292 = vector.extract_strided_slice %277 {offsets = [0, 192], sizes = [4, 64], strides = [1, 1]} : vector<4x256xf32> to vector<4x64xf32>
    %293 = arith.negf %292 : vector<4x64xf32>
    %294 = math.exp %293 : vector<4x64xf32>
    %cst_97 = arith.constant 1.000000e+00 : f32
    %295 = vector.broadcast %cst_97 : f32 to vector<4x64xf32>
    %296 = arith.addf %295, %294 : vector<4x64xf32>
    %297 = arith.divf %295, %296 : vector<4x64xf32>
    %298 = arith.mulf %289, %268 : vector<4x64xf32>
    %299 = arith.mulf %283, %291 : vector<4x64xf32>
    %300 = arith.addf %298, %299 : vector<4x64xf32>
    %301 = math.tanh %300 : vector<4x64xf32>
    %302 = arith.mulf %297, %301 : vector<4x64xf32>
    %c0_98 = arith.constant 0 : index
    %c8_99 = arith.constant 8 : index
    %c0_100 = arith.constant 0 : index
    %303 = vector.load %arg16[%c0_98, %c8_99, %c0_100] : memref<4x16x64xf32, #tpu.memory_space<vmem>>, vector<4x1x64xf32>
    %304 = vector.shape_cast %303 : vector<4x1x64xf32> to vector<4x64xf32>
    %305 = vector.shape_cast %302 : vector<4x64xf32> to vector<4x1x64xf32>
    tpu.vector_store %arg16[%c0_98, %c8_99, %c0_100], %305 {strides = array<i32>} : memref<4x16x64xf32, #tpu.memory_space<vmem>>, vector<4x1x64xf32>,
    %c0_101 = arith.constant 0 : index
    %c9 = arith.constant 9 : index
    %c0_102 = arith.constant 0 : index
    %306 = vector.load %arg15[%c0_101, %c9, %c0_102] : memref<4x16x256xf32, #tpu.memory_space<vmem>>, vector<4x1x256xf32>
    %307 = vector.shape_cast %306 : vector<4x1x256xf32> to vector<4x256xf32>
    %cst_103 = arith.constant dense<0.000000e+00> : vector<4x256xf32>
    %308 = tpu.matmul %302, %15, %cst_103 {dimension_numbers = #tpu.dot_dimension_numbers<[1], [0], [0], [1], [0, 0, 1, 1], [], []>} : vector<4x64xf32>, vector<64x256xf32>, vector<4x256xf32> -> vector<4x256xf32>
    %309 = arith.addf %307, %308 : vector<4x256xf32>
    %310 = vector.extract_strided_slice %309 {offsets = [0, 0], sizes = [4, 64], strides = [1, 1]} : vector<4x256xf32> to vector<4x64xf32>
    %311 = arith.negf %310 : vector<4x64xf32>
    %312 = math.exp %311 : vector<4x64xf32>
    %cst_104 = arith.constant 1.000000e+00 : f32
    %313 = vector.broadcast %cst_104 : f32 to vector<4x64xf32>
    %314 = arith.addf %313, %312 : vector<4x64xf32>
    %315 = arith.divf %313, %314 : vector<4x64xf32>
    %316 = vector.extract_strided_slice %309 {offsets = [0, 64], sizes = [4, 64], strides = [1, 1]} : vector<4x256xf32> to vector<4x64xf32>
    %317 = arith.negf %316 : vector<4x64xf32>
    %318 = math.exp %317 : vector<4x64xf32>
    %cst_105 = arith.constant 1.000000e+00 : f32
    %319 = vector.broadcast %cst_105 : f32 to vector<4x64xf32>
    %320 = arith.addf %319, %318 : vector<4x64xf32>
    %321 = arith.divf %319, %320 : vector<4x64xf32>
    %322 = vector.extract_strided_slice %309 {offsets = [0, 128], sizes = [4, 64], strides = [1, 1]} : vector<4x256xf32> to vector<4x64xf32>
    %323 = math.tanh %322 : vector<4x64xf32>
    %324 = vector.extract_strided_slice %309 {offsets = [0, 192], sizes = [4, 64], strides = [1, 1]} : vector<4x256xf32> to vector<4x64xf32>
    %325 = arith.negf %324 : vector<4x64xf32>
    %326 = math.exp %325 : vector<4x64xf32>
    %cst_106 = arith.constant 1.000000e+00 : f32
    %327 = vector.broadcast %cst_106 : f32 to vector<4x64xf32>
    %328 = arith.addf %327, %326 : vector<4x64xf32>
    %329 = arith.divf %327, %328 : vector<4x64xf32>
    %330 = arith.mulf %321, %300 : vector<4x64xf32>
    %331 = arith.mulf %315, %323 : vector<4x64xf32>
    %332 = arith.addf %330, %331 : vector<4x64xf32>
    %333 = math.tanh %332 : vector<4x64xf32>
    %334 = arith.mulf %329, %333 : vector<4x64xf32>
    %c0_107 = arith.constant 0 : index
    %c9_108 = arith.constant 9 : index
    %c0_109 = arith.constant 0 : index
    %335 = vector.load %arg16[%c0_107, %c9_108, %c0_109] : memref<4x16x64xf32, #tpu.memory_space<vmem>>, vector<4x1x64xf32>
    %336 = vector.shape_cast %335 : vector<4x1x64xf32> to vector<4x64xf32>
    %337 = vector.shape_cast %334 : vector<4x64xf32> to vector<4x1x64xf32>
    tpu.vector_store %arg16[%c0_107, %c9_108, %c0_109], %337 {strides = array<i32>} : memref<4x16x64xf32, #tpu.memory_space<vmem>>, vector<4x1x64xf32>,
    %c0_110 = arith.constant 0 : index
    %c10 = arith.constant 10 : index
    %c0_111 = arith.constant 0 : index
    %338 = vector.load %arg15[%c0_110, %c10, %c0_111] : memref<4x16x256xf32, #tpu.memory_space<vmem>>, vector<4x1x256xf32>
    %339 = vector.shape_cast %338 : vector<4x1x256xf32> to vector<4x256xf32>
    %cst_112 = arith.constant dense<0.000000e+00> : vector<4x256xf32>
    %340 = tpu.matmul %334, %15, %cst_112 {dimension_numbers = #tpu.dot_dimension_numbers<[1], [0], [0], [1], [0, 0, 1, 1], [], []>} : vector<4x64xf32>, vector<64x256xf32>, vector<4x256xf32> -> vector<4x256xf32>
    %341 = arith.addf %339, %340 : vector<4x256xf32>
    %342 = vector.extract_strided_slice %341 {offsets = [0, 0], sizes = [4, 64], strides = [1, 1]} : vector<4x256xf32> to vector<4x64xf32>
    %343 = arith.negf %342 : vector<4x64xf32>
    %344 = math.exp %343 : vector<4x64xf32>
    %cst_113 = arith.constant 1.000000e+00 : f32
    %345 = vector.broadcast %cst_113 : f32 to vector<4x64xf32>
    %346 = arith.addf %345, %344 : vector<4x64xf32>
    %347 = arith.divf %345, %346 : vector<4x64xf32>
    %348 = vector.extract_strided_slice %341 {offsets = [0, 64], sizes = [4, 64], strides = [1, 1]} : vector<4x256xf32> to vector<4x64xf32>
    %349 = arith.negf %348 : vector<4x64xf32>
    %350 = math.exp %349 : vector<4x64xf32>
    %cst_114 = arith.constant 1.000000e+00 : f32
    %351 = vector.broadcast %cst_114 : f32 to vector<4x64xf32>
    %352 = arith.addf %351, %350 : vector<4x64xf32>
    %353 = arith.divf %351, %352 : vector<4x64xf32>
    %354 = vector.extract_strided_slice %341 {offsets = [0, 128], sizes = [4, 64], strides = [1, 1]} : vector<4x256xf32> to vector<4x64xf32>
    %355 = math.tanh %354 : vector<4x64xf32>
    %356 = vector.extract_strided_slice %341 {offsets = [0, 192], sizes = [4, 64], strides = [1, 1]} : vector<4x256xf32> to vector<4x64xf32>
    %357 = arith.negf %356 : vector<4x64xf32>
    %358 = math.exp %357 : vector<4x64xf32>
    %cst_115 = arith.constant 1.000000e+00 : f32
    %359 = vector.broadcast %cst_115 : f32 to vector<4x64xf32>
    %360 = arith.addf %359, %358 : vector<4x64xf32>
    %361 = arith.divf %359, %360 : vector<4x64xf32>
    %362 = arith.mulf %353, %332 : vector<4x64xf32>
    %363 = arith.mulf %347, %355 : vector<4x64xf32>
    %364 = arith.addf %362, %363 : vector<4x64xf32>
    %365 = math.tanh %364 : vector<4x64xf32>
    %366 = arith.mulf %361, %365 : vector<4x64xf32>
    %c0_116 = arith.constant 0 : index
    %c10_117 = arith.constant 10 : index
    %c0_118 = arith.constant 0 : index
    %367 = vector.load %arg16[%c0_116, %c10_117, %c0_118] : memref<4x16x64xf32, #tpu.memory_space<vmem>>, vector<4x1x64xf32>
    %368 = vector.shape_cast %367 : vector<4x1x64xf32> to vector<4x64xf32>
    %369 = vector.shape_cast %366 : vector<4x64xf32> to vector<4x1x64xf32>
    tpu.vector_store %arg16[%c0_116, %c10_117, %c0_118], %369 {strides = array<i32>} : memref<4x16x64xf32, #tpu.memory_space<vmem>>, vector<4x1x64xf32>,
    %c0_119 = arith.constant 0 : index
    %c11 = arith.constant 11 : index
    %c0_120 = arith.constant 0 : index
    %370 = vector.load %arg15[%c0_119, %c11, %c0_120] : memref<4x16x256xf32, #tpu.memory_space<vmem>>, vector<4x1x256xf32>
    %371 = vector.shape_cast %370 : vector<4x1x256xf32> to vector<4x256xf32>
    %cst_121 = arith.constant dense<0.000000e+00> : vector<4x256xf32>
    %372 = tpu.matmul %366, %15, %cst_121 {dimension_numbers = #tpu.dot_dimension_numbers<[1], [0], [0], [1], [0, 0, 1, 1], [], []>} : vector<4x64xf32>, vector<64x256xf32>, vector<4x256xf32> -> vector<4x256xf32>
    %373 = arith.addf %371, %372 : vector<4x256xf32>
    %374 = vector.extract_strided_slice %373 {offsets = [0, 0], sizes = [4, 64], strides = [1, 1]} : vector<4x256xf32> to vector<4x64xf32>
    %375 = arith.negf %374 : vector<4x64xf32>
    %376 = math.exp %375 : vector<4x64xf32>
    %cst_122 = arith.constant 1.000000e+00 : f32
    %377 = vector.broadcast %cst_122 : f32 to vector<4x64xf32>
    %378 = arith.addf %377, %376 : vector<4x64xf32>
    %379 = arith.divf %377, %378 : vector<4x64xf32>
    %380 = vector.extract_strided_slice %373 {offsets = [0, 64], sizes = [4, 64], strides = [1, 1]} : vector<4x256xf32> to vector<4x64xf32>
    %381 = arith.negf %380 : vector<4x64xf32>
    %382 = math.exp %381 : vector<4x64xf32>
    %cst_123 = arith.constant 1.000000e+00 : f32
    %383 = vector.broadcast %cst_123 : f32 to vector<4x64xf32>
    %384 = arith.addf %383, %382 : vector<4x64xf32>
    %385 = arith.divf %383, %384 : vector<4x64xf32>
    %386 = vector.extract_strided_slice %373 {offsets = [0, 128], sizes = [4, 64], strides = [1, 1]} : vector<4x256xf32> to vector<4x64xf32>
    %387 = math.tanh %386 : vector<4x64xf32>
    %388 = vector.extract_strided_slice %373 {offsets = [0, 192], sizes = [4, 64], strides = [1, 1]} : vector<4x256xf32> to vector<4x64xf32>
    %389 = arith.negf %388 : vector<4x64xf32>
    %390 = math.exp %389 : vector<4x64xf32>
    %cst_124 = arith.constant 1.000000e+00 : f32
    %391 = vector.broadcast %cst_124 : f32 to vector<4x64xf32>
    %392 = arith.addf %391, %390 : vector<4x64xf32>
    %393 = arith.divf %391, %392 : vector<4x64xf32>
    %394 = arith.mulf %385, %364 : vector<4x64xf32>
    %395 = arith.mulf %379, %387 : vector<4x64xf32>
    %396 = arith.addf %394, %395 : vector<4x64xf32>
    %397 = math.tanh %396 : vector<4x64xf32>
    %398 = arith.mulf %393, %397 : vector<4x64xf32>
    %c0_125 = arith.constant 0 : index
    %c11_126 = arith.constant 11 : index
    %c0_127 = arith.constant 0 : index
    %399 = vector.load %arg16[%c0_125, %c11_126, %c0_127] : memref<4x16x64xf32, #tpu.memory_space<vmem>>, vector<4x1x64xf32>
    %400 = vector.shape_cast %399 : vector<4x1x64xf32> to vector<4x64xf32>
    %401 = vector.shape_cast %398 : vector<4x64xf32> to vector<4x1x64xf32>
    tpu.vector_store %arg16[%c0_125, %c11_126, %c0_127], %401 {strides = array<i32>} : memref<4x16x64xf32, #tpu.memory_space<vmem>>, vector<4x1x64xf32>,
    %c0_128 = arith.constant 0 : index
    %c12 = arith.constant 12 : index
    %c0_129 = arith.constant 0 : index
    %402 = vector.load %arg15[%c0_128, %c12, %c0_129] : memref<4x16x256xf32, #tpu.memory_space<vmem>>, vector<4x1x256xf32>
    %403 = vector.shape_cast %402 : vector<4x1x256xf32> to vector<4x256xf32>
    %cst_130 = arith.constant dense<0.000000e+00> : vector<4x256xf32>
    %404 = tpu.matmul %398, %15, %cst_130 {dimension_numbers = #tpu.dot_dimension_numbers<[1], [0], [0], [1], [0, 0, 1, 1], [], []>} : vector<4x64xf32>, vector<64x256xf32>, vector<4x256xf32> -> vector<4x256xf32>
    %405 = arith.addf %403, %404 : vector<4x256xf32>
    %406 = vector.extract_strided_slice %405 {offsets = [0, 0], sizes = [4, 64], strides = [1, 1]} : vector<4x256xf32> to vector<4x64xf32>
    %407 = arith.negf %406 : vector<4x64xf32>
    %408 = math.exp %407 : vector<4x64xf32>
    %cst_131 = arith.constant 1.000000e+00 : f32
    %409 = vector.broadcast %cst_131 : f32 to vector<4x64xf32>
    %410 = arith.addf %409, %408 : vector<4x64xf32>
    %411 = arith.divf %409, %410 : vector<4x64xf32>
    %412 = vector.extract_strided_slice %405 {offsets = [0, 64], sizes = [4, 64], strides = [1, 1]} : vector<4x256xf32> to vector<4x64xf32>
    %413 = arith.negf %412 : vector<4x64xf32>
    %414 = math.exp %413 : vector<4x64xf32>
    %cst_132 = arith.constant 1.000000e+00 : f32
    %415 = vector.broadcast %cst_132 : f32 to vector<4x64xf32>
    %416 = arith.addf %415, %414 : vector<4x64xf32>
    %417 = arith.divf %415, %416 : vector<4x64xf32>
    %418 = vector.extract_strided_slice %405 {offsets = [0, 128], sizes = [4, 64], strides = [1, 1]} : vector<4x256xf32> to vector<4x64xf32>
    %419 = math.tanh %418 : vector<4x64xf32>
    %420 = vector.extract_strided_slice %405 {offsets = [0, 192], sizes = [4, 64], strides = [1, 1]} : vector<4x256xf32> to vector<4x64xf32>
    %421 = arith.negf %420 : vector<4x64xf32>
    %422 = math.exp %421 : vector<4x64xf32>
    %cst_133 = arith.constant 1.000000e+00 : f32
    %423 = vector.broadcast %cst_133 : f32 to vector<4x64xf32>
    %424 = arith.addf %423, %422 : vector<4x64xf32>
    %425 = arith.divf %423, %424 : vector<4x64xf32>
    %426 = arith.mulf %417, %396 : vector<4x64xf32>
    %427 = arith.mulf %411, %419 : vector<4x64xf32>
    %428 = arith.addf %426, %427 : vector<4x64xf32>
    %429 = math.tanh %428 : vector<4x64xf32>
    %430 = arith.mulf %425, %429 : vector<4x64xf32>
    %c0_134 = arith.constant 0 : index
    %c12_135 = arith.constant 12 : index
    %c0_136 = arith.constant 0 : index
    %431 = vector.load %arg16[%c0_134, %c12_135, %c0_136] : memref<4x16x64xf32, #tpu.memory_space<vmem>>, vector<4x1x64xf32>
    %432 = vector.shape_cast %431 : vector<4x1x64xf32> to vector<4x64xf32>
    %433 = vector.shape_cast %430 : vector<4x64xf32> to vector<4x1x64xf32>
    tpu.vector_store %arg16[%c0_134, %c12_135, %c0_136], %433 {strides = array<i32>} : memref<4x16x64xf32, #tpu.memory_space<vmem>>, vector<4x1x64xf32>,
    %c0_137 = arith.constant 0 : index
    %c13 = arith.constant 13 : index
    %c0_138 = arith.constant 0 : index
    %434 = vector.load %arg15[%c0_137, %c13, %c0_138] : memref<4x16x256xf32, #tpu.memory_space<vmem>>, vector<4x1x256xf32>
    %435 = vector.shape_cast %434 : vector<4x1x256xf32> to vector<4x256xf32>
    %cst_139 = arith.constant dense<0.000000e+00> : vector<4x256xf32>
    %436 = tpu.matmul %430, %15, %cst_139 {dimension_numbers = #tpu.dot_dimension_numbers<[1], [0], [0], [1], [0, 0, 1, 1], [], []>} : vector<4x64xf32>, vector<64x256xf32>, vector<4x256xf32> -> vector<4x256xf32>
    %437 = arith.addf %435, %436 : vector<4x256xf32>
    %438 = vector.extract_strided_slice %437 {offsets = [0, 0], sizes = [4, 64], strides = [1, 1]} : vector<4x256xf32> to vector<4x64xf32>
    %439 = arith.negf %438 : vector<4x64xf32>
    %440 = math.exp %439 : vector<4x64xf32>
    %cst_140 = arith.constant 1.000000e+00 : f32
    %441 = vector.broadcast %cst_140 : f32 to vector<4x64xf32>
    %442 = arith.addf %441, %440 : vector<4x64xf32>
    %443 = arith.divf %441, %442 : vector<4x64xf32>
    %444 = vector.extract_strided_slice %437 {offsets = [0, 64], sizes = [4, 64], strides = [1, 1]} : vector<4x256xf32> to vector<4x64xf32>
    %445 = arith.negf %444 : vector<4x64xf32>
    %446 = math.exp %445 : vector<4x64xf32>
    %cst_141 = arith.constant 1.000000e+00 : f32
    %447 = vector.broadcast %cst_141 : f32 to vector<4x64xf32>
    %448 = arith.addf %447, %446 : vector<4x64xf32>
    %449 = arith.divf %447, %448 : vector<4x64xf32>
    %450 = vector.extract_strided_slice %437 {offsets = [0, 128], sizes = [4, 64], strides = [1, 1]} : vector<4x256xf32> to vector<4x64xf32>
    %451 = math.tanh %450 : vector<4x64xf32>
    %452 = vector.extract_strided_slice %437 {offsets = [0, 192], sizes = [4, 64], strides = [1, 1]} : vector<4x256xf32> to vector<4x64xf32>
    %453 = arith.negf %452 : vector<4x64xf32>
    %454 = math.exp %453 : vector<4x64xf32>
    %cst_142 = arith.constant 1.000000e+00 : f32
    %455 = vector.broadcast %cst_142 : f32 to vector<4x64xf32>
    %456 = arith.addf %455, %454 : vector<4x64xf32>
    %457 = arith.divf %455, %456 : vector<4x64xf32>
    %458 = arith.mulf %449, %428 : vector<4x64xf32>
    %459 = arith.mulf %443, %451 : vector<4x64xf32>
    %460 = arith.addf %458, %459 : vector<4x64xf32>
    %461 = math.tanh %460 : vector<4x64xf32>
    %462 = arith.mulf %457, %461 : vector<4x64xf32>
    %c0_143 = arith.constant 0 : index
    %c13_144 = arith.constant 13 : index
    %c0_145 = arith.constant 0 : index
    %463 = vector.load %arg16[%c0_143, %c13_144, %c0_145] : memref<4x16x64xf32, #tpu.memory_space<vmem>>, vector<4x1x64xf32>
    %464 = vector.shape_cast %463 : vector<4x1x64xf32> to vector<4x64xf32>
    %465 = vector.shape_cast %462 : vector<4x64xf32> to vector<4x1x64xf32>
    tpu.vector_store %arg16[%c0_143, %c13_144, %c0_145], %465 {strides = array<i32>} : memref<4x16x64xf32, #tpu.memory_space<vmem>>, vector<4x1x64xf32>,
    %c0_146 = arith.constant 0 : index
    %c14 = arith.constant 14 : index
    %c0_147 = arith.constant 0 : index
    %466 = vector.load %arg15[%c0_146, %c14, %c0_147] : memref<4x16x256xf32, #tpu.memory_space<vmem>>, vector<4x1x256xf32>
    %467 = vector.shape_cast %466 : vector<4x1x256xf32> to vector<4x256xf32>
    %cst_148 = arith.constant dense<0.000000e+00> : vector<4x256xf32>
    %468 = tpu.matmul %462, %15, %cst_148 {dimension_numbers = #tpu.dot_dimension_numbers<[1], [0], [0], [1], [0, 0, 1, 1], [], []>} : vector<4x64xf32>, vector<64x256xf32>, vector<4x256xf32> -> vector<4x256xf32>
    %469 = arith.addf %467, %468 : vector<4x256xf32>
    %470 = vector.extract_strided_slice %469 {offsets = [0, 0], sizes = [4, 64], strides = [1, 1]} : vector<4x256xf32> to vector<4x64xf32>
    %471 = arith.negf %470 : vector<4x64xf32>
    %472 = math.exp %471 : vector<4x64xf32>
    %cst_149 = arith.constant 1.000000e+00 : f32
    %473 = vector.broadcast %cst_149 : f32 to vector<4x64xf32>
    %474 = arith.addf %473, %472 : vector<4x64xf32>
    %475 = arith.divf %473, %474 : vector<4x64xf32>
    %476 = vector.extract_strided_slice %469 {offsets = [0, 64], sizes = [4, 64], strides = [1, 1]} : vector<4x256xf32> to vector<4x64xf32>
    %477 = arith.negf %476 : vector<4x64xf32>
    %478 = math.exp %477 : vector<4x64xf32>
    %cst_150 = arith.constant 1.000000e+00 : f32
    %479 = vector.broadcast %cst_150 : f32 to vector<4x64xf32>
    %480 = arith.addf %479, %478 : vector<4x64xf32>
    %481 = arith.divf %479, %480 : vector<4x64xf32>
    %482 = vector.extract_strided_slice %469 {offsets = [0, 128], sizes = [4, 64], strides = [1, 1]} : vector<4x256xf32> to vector<4x64xf32>
    %483 = math.tanh %482 : vector<4x64xf32>
    %484 = vector.extract_strided_slice %469 {offsets = [0, 192], sizes = [4, 64], strides = [1, 1]} : vector<4x256xf32> to vector<4x64xf32>
    %485 = arith.negf %484 : vector<4x64xf32>
    %486 = math.exp %485 : vector<4x64xf32>
    %cst_151 = arith.constant 1.000000e+00 : f32
    %487 = vector.broadcast %cst_151 : f32 to vector<4x64xf32>
    %488 = arith.addf %487, %486 : vector<4x64xf32>
    %489 = arith.divf %487, %488 : vector<4x64xf32>
    %490 = arith.mulf %481, %460 : vector<4x64xf32>
    %491 = arith.mulf %475, %483 : vector<4x64xf32>
    %492 = arith.addf %490, %491 : vector<4x64xf32>
    %493 = math.tanh %492 : vector<4x64xf32>
    %494 = arith.mulf %489, %493 : vector<4x64xf32>
    %c0_152 = arith.constant 0 : index
    %c14_153 = arith.constant 14 : index
    %c0_154 = arith.constant 0 : index
    %495 = vector.load %arg16[%c0_152, %c14_153, %c0_154] : memref<4x16x64xf32, #tpu.memory_space<vmem>>, vector<4x1x64xf32>
    %496 = vector.shape_cast %495 : vector<4x1x64xf32> to vector<4x64xf32>
    %497 = vector.shape_cast %494 : vector<4x64xf32> to vector<4x1x64xf32>
    tpu.vector_store %arg16[%c0_152, %c14_153, %c0_154], %497 {strides = array<i32>} : memref<4x16x64xf32, #tpu.memory_space<vmem>>, vector<4x1x64xf32>,
    %c0_155 = arith.constant 0 : index
    %c15 = arith.constant 15 : index
    %c0_156 = arith.constant 0 : index
    %498 = vector.load %arg15[%c0_155, %c15, %c0_156] : memref<4x16x256xf32, #tpu.memory_space<vmem>>, vector<4x1x256xf32>
    %499 = vector.shape_cast %498 : vector<4x1x256xf32> to vector<4x256xf32>
    %cst_157 = arith.constant dense<0.000000e+00> : vector<4x256xf32>
    %500 = tpu.matmul %494, %15, %cst_157 {dimension_numbers = #tpu.dot_dimension_numbers<[1], [0], [0], [1], [0, 0, 1, 1], [], []>} : vector<4x64xf32>, vector<64x256xf32>, vector<4x256xf32> -> vector<4x256xf32>
    %501 = arith.addf %499, %500 : vector<4x256xf32>
    %502 = vector.extract_strided_slice %501 {offsets = [0, 0], sizes = [4, 64], strides = [1, 1]} : vector<4x256xf32> to vector<4x64xf32>
    %503 = arith.negf %502 : vector<4x64xf32>
    %504 = math.exp %503 : vector<4x64xf32>
    %cst_158 = arith.constant 1.000000e+00 : f32
    %505 = vector.broadcast %cst_158 : f32 to vector<4x64xf32>
    %506 = arith.addf %505, %504 : vector<4x64xf32>
    %507 = arith.divf %505, %506 : vector<4x64xf32>
    %508 = vector.extract_strided_slice %501 {offsets = [0, 64], sizes = [4, 64], strides = [1, 1]} : vector<4x256xf32> to vector<4x64xf32>
    %509 = arith.negf %508 : vector<4x64xf32>
    %510 = math.exp %509 : vector<4x64xf32>
    %cst_159 = arith.constant 1.000000e+00 : f32
    %511 = vector.broadcast %cst_159 : f32 to vector<4x64xf32>
    %512 = arith.addf %511, %510 : vector<4x64xf32>
    %513 = arith.divf %511, %512 : vector<4x64xf32>
    %514 = vector.extract_strided_slice %501 {offsets = [0, 128], sizes = [4, 64], strides = [1, 1]} : vector<4x256xf32> to vector<4x64xf32>
    %515 = math.tanh %514 : vector<4x64xf32>
    %516 = vector.extract_strided_slice %501 {offsets = [0, 192], sizes = [4, 64], strides = [1, 1]} : vector<4x256xf32> to vector<4x64xf32>
    %517 = arith.negf %516 : vector<4x64xf32>
    %518 = math.exp %517 : vector<4x64xf32>
    %cst_160 = arith.constant 1.000000e+00 : f32
    %519 = vector.broadcast %cst_160 : f32 to vector<4x64xf32>
    %520 = arith.addf %519, %518 : vector<4x64xf32>
    %521 = arith.divf %519, %520 : vector<4x64xf32>
    %522 = arith.mulf %513, %492 : vector<4x64xf32>
    %523 = arith.mulf %507, %515 : vector<4x64xf32>
    %524 = arith.addf %522, %523 : vector<4x64xf32>
    %525 = math.tanh %524 : vector<4x64xf32>
    %526 = arith.mulf %521, %525 : vector<4x64xf32>
    %c0_161 = arith.constant 0 : index
    %c15_162 = arith.constant 15 : index
    %c0_163 = arith.constant 0 : index
    %527 = vector.load %arg16[%c0_161, %c15_162, %c0_163] : memref<4x16x64xf32, #tpu.memory_space<vmem>>, vector<4x1x64xf32>
    %528 = vector.shape_cast %527 : vector<4x1x64xf32> to vector<4x64xf32>
    %529 = vector.shape_cast %526 : vector<4x64xf32> to vector<4x1x64xf32>
    tpu.vector_store %arg16[%c0_161, %c15_162, %c0_163], %529 {strides = array<i32>} : memref<4x16x64xf32, #tpu.memory_space<vmem>>, vector<4x1x64xf32>,
    %c0_164 = arith.constant 0 : index
    %c0_165 = arith.constant 0 : index
    %530 = vector.load %arg13[%c0_164, %c0_165] : memref<4x64xf32, #tpu.memory_space<vmem>>, vector<4x64xf32>
    tpu.vector_store %arg13[%c0_164, %c0_165], %526 {strides = array<i32>} : memref<4x64xf32, #tpu.memory_space<vmem>>, vector<4x64xf32>,
    %c0_166 = arith.constant 0 : index
    %c0_167 = arith.constant 0 : index
    %531 = vector.load %arg14[%c0_166, %c0_167] : memref<4x64xf32, #tpu.memory_space<vmem>>, vector<4x64xf32>
    tpu.vector_store %arg14[%c0_166, %c0_167], %524 {strides = array<i32>} : memref<4x64xf32, #tpu.memory_space<vmem>>, vector<4x64xf32>,
    %c0_168 = arith.constant 0 : index
    %c0_169 = arith.constant 0 : index
    %c0_170 = arith.constant 0 : index
    %532 = vector.load %arg16[%c0_168, %c0_169, %c0_170] : memref<4x16x64xf32, #tpu.memory_space<vmem>>, vector<4x16x64xf32>
    %533 = vector.extract_strided_slice %532 {offsets = [0, 0, 0], sizes = [2, 16, 32], strides = [1, 1, 1]} : vector<4x16x64xf32> to vector<2x16x32xf32>
    %534 = vector.extract_strided_slice %532 {offsets = [0, 0, 32], sizes = [2, 16, 32], strides = [1, 1, 1]} : vector<4x16x64xf32> to vector<2x16x32xf32>
    %535 = vector.extract_strided_slice %532 {offsets = [2, 0, 0], sizes = [2, 16, 32], strides = [1, 1, 1]} : vector<4x16x64xf32> to vector<2x16x32xf32>
    %536 = vector.extract_strided_slice %532 {offsets = [2, 0, 32], sizes = [2, 16, 32], strides = [1, 1, 1]} : vector<4x16x64xf32> to vector<2x16x32xf32>
    %537 = arith.subf %533, %536 : vector<2x16x32xf32>
    %538 = arith.addf %535, %534 : vector<2x16x32xf32>
    %539 = vector.shape_cast %537 : vector<2x16x32xf32> to vector<32x32xf32>
    %c0_171 = arith.constant 0 : index
    %c0_172 = arith.constant 0 : index
    %540 = vector.load %arg7[%c0_171, %c0_172] : memref<32x16xf32, #tpu.memory_space<vmem>>, vector<32x16xf32>
    %cst_173 = arith.constant dense<0.000000e+00> : vector<32x16xf32>
    %541 = tpu.matmul %539, %540, %cst_173 {dimension_numbers = #tpu.dot_dimension_numbers<[1], [0], [0], [1], [0, 0, 1, 1], [], []>} : vector<32x32xf32>, vector<32x16xf32>, vector<32x16xf32> -> vector<32x16xf32>
    %c0_174 = arith.constant 0 : index
    %c0_175 = arith.constant 0 : index
    %542 = vector.load %arg8[%c0_174, %c0_175] : memref<1x16xf32, #tpu.memory_space<vmem>>, vector<1x16xf32>
    %543 = vector.broadcast %542 : vector<1x16xf32> to vector<32x16xf32>
    %544 = arith.addf %541, %543 : vector<32x16xf32>
    %545 = vector.shape_cast %544 : vector<32x16xf32> to vector<2x16x16xf32>
    %546 = vector.shape_cast %538 : vector<2x16x32xf32> to vector<32x32xf32>
    %c0_176 = arith.constant 0 : index
    %c0_177 = arith.constant 0 : index
    %547 = vector.load %arg9[%c0_176, %c0_177] : memref<32x16xf32, #tpu.memory_space<vmem>>, vector<32x16xf32>
    %cst_178 = arith.constant dense<0.000000e+00> : vector<32x16xf32>
    %548 = tpu.matmul %546, %547, %cst_178 {dimension_numbers = #tpu.dot_dimension_numbers<[1], [0], [0], [1], [0, 0, 1, 1], [], []>} : vector<32x32xf32>, vector<32x16xf32>, vector<32x16xf32> -> vector<32x16xf32>
    %c0_179 = arith.constant 0 : index
    %c0_180 = arith.constant 0 : index
    %549 = vector.load %arg10[%c0_179, %c0_180] : memref<1x16xf32, #tpu.memory_space<vmem>>, vector<1x16xf32>
    %550 = vector.broadcast %549 : vector<1x16xf32> to vector<32x16xf32>
    %551 = arith.addf %548, %550 : vector<32x16xf32>
    %552 = vector.shape_cast %551 : vector<32x16xf32> to vector<2x16x16xf32>
    %c0_181 = arith.constant 0 : index
    %c0_182 = arith.constant 0 : index
    %c0_183 = arith.constant 0 : index
    %553 = vector.load %arg11[%c0_181, %c0_182, %c0_183] : memref<2x16x16xf32, #tpu.memory_space<vmem>>, vector<2x16x16xf32>
    tpu.vector_store %arg11[%c0_181, %c0_182, %c0_183], %545 {strides = array<i32>} : memref<2x16x16xf32, #tpu.memory_space<vmem>>, vector<2x16x16xf32>,
    %c0_184 = arith.constant 0 : index
    %c0_185 = arith.constant 0 : index
    %c0_186 = arith.constant 0 : index
    %554 = vector.load %arg12[%c0_184, %c0_185, %c0_186] : memref<2x16x16xf32, #tpu.memory_space<vmem>>, vector<2x16x16xf32>
    tpu.vector_store %arg12[%c0_184, %c0_185, %c0_186], %552 {strides = array<i32>} : memref<2x16x16xf32, #tpu.memory_space<vmem>>, vector<2x16x16xf32>,
    return
  }
  func.func @transform_0(%arg0: i32, %arg1: i32) -> (i32, i32, i32) {
    %c0_i32 = arith.constant 0 : i32
    %c0_i32_0 = arith.constant 0 : i32
    return %arg0, %arg1, %c0_i32 : i32, i32, i32
  }
  func.func @transform_1(%arg0: i32, %arg1: i32) -> (i32, i32, i32) {
    %c0_i32 = arith.constant 0 : i32
    %c0_i32_0 = arith.constant 0 : i32
    return %arg0, %arg1, %c0_i32 : i32, i32, i32
  }
  func.func @transform_2(%arg0: i32, %arg1: i32) -> (i32, i32) {
    %c0_i32 = arith.constant 0 : i32
    %c0_i32_0 = arith.constant 0 : i32
    %c0_i32_1 = arith.constant 0 : i32
    return %c0_i32, %c0_i32_0 : i32, i32
  }
  func.func @transform_3(%arg0: i32, %arg1: i32) -> (i32, i32) {
    %c0_i32 = arith.constant 0 : i32
    %c0_i32_0 = arith.constant 0 : i32
    %c0_i32_1 = arith.constant 0 : i32
    return %c0_i32, %c0_i32_0 : i32, i32
  }
  func.func @transform_4(%arg0: i32, %arg1: i32) -> (i32, i32) {
    %c0_i32 = arith.constant 0 : i32
    %c0_i32_0 = arith.constant 0 : i32
    %c0_i32_1 = arith.constant 0 : i32
    return %c0_i32, %c0_i32_0 : i32, i32
  }
  func.func @transform_5(%arg0: i32, %arg1: i32) -> (i32, i32) {
    %c0_i32 = arith.constant 0 : i32
    %c0_i32_0 = arith.constant 0 : i32
    %c0_i32_1 = arith.constant 0 : i32
    return %c0_i32, %c0_i32_0 : i32, i32
  }
  func.func @transform_6(%arg0: i32, %arg1: i32) -> (i32, i32) {
    %c0_i32 = arith.constant 0 : i32
    %c0_i32_0 = arith.constant 0 : i32
    %c0_i32_1 = arith.constant 0 : i32
    return %c0_i32, %c0_i32_0 : i32, i32
  }
  func.func @transform_7(%arg0: i32, %arg1: i32) -> (i32, i32) {
    %c0_i32 = arith.constant 0 : i32
    %c0_i32_0 = arith.constant 0 : i32
    %c0_i32_1 = arith.constant 0 : i32
    return %c0_i32, %c0_i32_0 : i32, i32
  }
  func.func @transform_8(%arg0: i32, %arg1: i32) -> (i32, i32) {
    %c0_i32 = arith.constant 0 : i32
    %c0_i32_0 = arith.constant 0 : i32
    %c0_i32_1 = arith.constant 0 : i32
    return %c0_i32, %c0_i32_0 : i32, i32
  }
  func.func @transform_9(%arg0: i32, %arg1: i32) -> (i32, i32, i32) {
    %c0_i32 = arith.constant 0 : i32
    %c0_i32_0 = arith.constant 0 : i32
    return %arg0, %arg1, %c0_i32 : i32, i32, i32
  }
  func.func @transform_10(%arg0: i32, %arg1: i32) -> (i32, i32, i32) {
    %c0_i32 = arith.constant 0 : i32
    %c0_i32_0 = arith.constant 0 : i32
    return %arg0, %arg1, %c0_i32 : i32, i32, i32
  }
}

</mosaic_0001>

<llo_original>
// kernel: custom-call
$region0: #{custom-call}
  %s0 = inlined_call_operand.vmem [shape: c64[2,32,16], index: 0, kind: input, shape index: {}]
  %s1 = inlined_call_operand.vmem [shape: f32[2,32,16], index: 1, kind: output, shape index: {}]
  %v2 = vld [vmem:[%s0] sm:$0xff]
  %3 = vst [vmem:[%s1] sm:$0xff] %v2
  %s4 = scalar_lea.vmem %s1, 8
  %s5 = scalar_lea.vmem %s0, 8
  %v6 = vld [vmem:[%s5] sm:$0xff]
  %7 = vst [vmem:[%s4] sm:$0xff] %v6
  %s8 = scalar_lea.vmem %s1, 16
  %s9 = scalar_lea.vmem %s0, 16
  %v10 = vld [vmem:[%s9] sm:$0xff]
  %11 = vst [vmem:[%s8] sm:$0xff] %v10
  %s12 = scalar_lea.vmem %s1, 24
  %s13 = scalar_lea.vmem %s0, 24
  %v14 = vld [vmem:[%s13] sm:$0xff]
  %15 = vst [vmem:[%s12] sm:$0xff] %v14
  %s16 = scalar_lea.vmem %s1, 32
  %s17 = scalar_lea.vmem %s0, 32
  %v18 = vld [vmem:[%s17] sm:$0xff]
  %19 = vst [vmem:[%s16] sm:$0xff] %v18
  %s20 = scalar_lea.vmem %s1, 40
  %s21 = scalar_lea.vmem %s0, 40
  %v22 = vld [vmem:[%s21] sm:$0xff]
  %23 = vst [vmem:[%s20] sm:$0xff] %v22
  %s24 = scalar_lea.vmem %s1, 48
  %s25 = scalar_lea.vmem %s0, 48
  %v26 = vld [vmem:[%s25] sm:$0xff]
  %27 = vst [vmem:[%s24] sm:$0xff] %v26
  %s28 = scalar_lea.vmem %s1, 56
  %s29 = scalar_lea.vmem %s0, 56
  %v30 = vld [vmem:[%s29] sm:$0xff]
  %31 = vst [vmem:[%s28] sm:$0xff] %v30

// kernel: custom-call.1
$region0: #{custom-call.1}
  %s0 = inlined_call_operand.vmem [shape: c64[2,32,16], index: 0, kind: input, shape index: {}]
  %s1 = inlined_call_operand.vmem [shape: f32[2,32,16], index: 1, kind: output, shape index: {}]
  %s2 = scalar_lea.vmem %s0, 64
  %v3 = vld [vmem:[%s2] sm:$0xff]
  %4 = vst [vmem:[%s1] sm:$0xff] %v3
  %s5 = scalar_lea.vmem %s1, 8
  %s6 = scalar_lea.vmem %s2, 8
  %v7 = vld [vmem:[%s6] sm:$0xff]
  %8 = vst [vmem:[%s5] sm:$0xff] %v7
  %s9 = scalar_lea.vmem %s1, 16
  %s10 = scalar_lea.vmem %s2, 16
  %v11 = vld [vmem:[%s10] sm:$0xff]
  %12 = vst [vmem:[%s9] sm:$0xff] %v11
  %s13 = scalar_lea.vmem %s1, 24
  %s14 = scalar_lea.vmem %s2, 24
  %v15 = vld [vmem:[%s14] sm:$0xff]
  %16 = vst [vmem:[%s13] sm:$0xff] %v15
  %s17 = scalar_lea.vmem %s1, 32
  %s18 = scalar_lea.vmem %s2, 32
  %v19 = vld [vmem:[%s18] sm:$0xff]
  %20 = vst [vmem:[%s17] sm:$0xff] %v19
  %s21 = scalar_lea.vmem %s1, 40
  %s22 = scalar_lea.vmem %s2, 40
  %v23 = vld [vmem:[%s22] sm:$0xff]
  %24 = vst [vmem:[%s21] sm:$0xff] %v23
  %s25 = scalar_lea.vmem %s1, 48
  %s26 = scalar_lea.vmem %s2, 48
  %v27 = vld [vmem:[%s26] sm:$0xff]
  %28 = vst [vmem:[%s25] sm:$0xff] %v27
  %s29 = scalar_lea.vmem %s1, 56
  %s30 = scalar_lea.vmem %s2, 56
  %v31 = vld [vmem:[%s30] sm:$0xff]
  %32 = vst [vmem:[%s29] sm:$0xff] %v31

// kernel: custom-call.2
$region0: #{custom-call.2}
  %s0 = inlined_call_operand.vmem [shape: f32[2,32,16], index: 0, kind: input, shape index: {}]
  %s1 = inlined_call_operand.vmem [shape: f32[2,32,16], index: 1, kind: input, shape index: {}]
  %s2 = inlined_call_operand.vmem [shape: c64[2,32,16], index: 2, kind: output, shape index: {}]
  %s4 = scalar_lea.vmem %s2, 64
  %v5 = vld [vmem:[%s0] sm:$0xff]
  %6 = vst [vmem:[%s2] sm:$0xff] %v5
  %s7 = scalar_lea.vmem %s2, 8
  %s8 = scalar_lea.vmem %s0, 8
  %v9 = vld [vmem:[%s8] sm:$0xff]
  %10 = vst [vmem:[%s7] sm:$0xff] %v9
  %s11 = scalar_lea.vmem %s2, 16
  %s12 = scalar_lea.vmem %s0, 16
  %v13 = vld [vmem:[%s12] sm:$0xff]
  %14 = vst [vmem:[%s11] sm:$0xff] %v13
  %s15 = scalar_lea.vmem %s2, 24
  %s16 = scalar_lea.vmem %s0, 24
  %v17 = vld [vmem:[%s16] sm:$0xff]
  %18 = vst [vmem:[%s15] sm:$0xff] %v17
  %s19 = scalar_lea.vmem %s2, 32
  %s20 = scalar_lea.vmem %s0, 32
  %v21 = vld [vmem:[%s20] sm:$0xff]
  %22 = vst [vmem:[%s19] sm:$0xff] %v21
  %s23 = scalar_lea.vmem %s2, 40
  %s24 = scalar_lea.vmem %s0, 40
  %v25 = vld [vmem:[%s24] sm:$0xff]
  %26 = vst [vmem:[%s23] sm:$0xff] %v25
  %s27 = scalar_lea.vmem %s2, 48
  %s28 = scalar_lea.vmem %s0, 48
  %v29 = vld [vmem:[%s28] sm:$0xff]
  %30 = vst [vmem:[%s27] sm:$0xff] %v29
  %s31 = scalar_lea.vmem %s2, 56
  %s32 = scalar_lea.vmem %s0, 56
  %v33 = vld [vmem:[%s32] sm:$0xff]
  %34 = vst [vmem:[%s31] sm:$0xff] %v33
  %v35 = vld [vmem:[%s1] sm:$0xff]
  %36 = vst [vmem:[%s4] sm:$0xff] %v35
  %s37 = scalar_lea.vmem %s4, 8
  %s38 = scalar_lea.vmem %s1, 8
  %v39 = vld [vmem:[%s38] sm:$0xff]
  %40 = vst [vmem:[%s37] sm:$0xff] %v39
  %s41 = scalar_lea.vmem %s4, 16
  %s42 = scalar_lea.vmem %s1, 16
  %v43 = vld [vmem:[%s42] sm:$0xff]
  %44 = vst [vmem:[%s41] sm:$0xff] %v43
  %s45 = scalar_lea.vmem %s4, 24
  %s46 = scalar_lea.vmem %s1, 24
  %v47 = vld [vmem:[%s46] sm:$0xff]
  %48 = vst [vmem:[%s45] sm:$0xff] %v47
  %s49 = scalar_lea.vmem %s4, 32
  %s50 = scalar_lea.vmem %s1, 32
  %v51 = vld [vmem:[%s50] sm:$0xff]
  %52 = vst [vmem:[%s49] sm:$0xff] %v51
  %s53 = scalar_lea.vmem %s4, 40
  %s54 = scalar_lea.vmem %s1, 40
  %v55 = vld [vmem:[%s54] sm:$0xff]
  %56 = vst [vmem:[%s53] sm:$0xff] %v55
  %s57 = scalar_lea.vmem %s4, 48
  %s58 = scalar_lea.vmem %s1, 48
  %v59 = vld [vmem:[%s58] sm:$0xff]
  %60 = vst [vmem:[%s57] sm:$0xff] %v59
  %s61 = scalar_lea.vmem %s4, 56
  %s62 = scalar_lea.vmem %s1, 56
  %v63 = vld [vmem:[%s62] sm:$0xff]
  %64 = vst [vmem:[%s61] sm:$0xff] %v63

// kernel: complex_lstm_forward.1
$region0: #{complex_lstm_forward.1}
  #allocation0 [shape = 'u32[]', space=smem, size = 0x4, offset = 0x4, fixed_abs, tag = 'smem constant byte address 0x4 - core index']
  #allocation1 [shape = 'u32[144,128]{1,0:T(1,128)}', space=vmem, size = 0x12000, scoped, tag = 'internal scratch']
  #allocation2 [shape = 'f32[4,64]{1,0:T(4,128)}', space=vmem, size = 0x800, scoped, tag = 'scratch operand']
  #allocation3 [shape = 'f32[4,64]{1,0:T(4,128)}', space=vmem, size = 0x800, scoped, tag = 'scratch operand']
  #allocation4 [shape = 'f32[4,16,256]{2,1,0:T(8,128)}', space=vmem, size = 0x10000, scoped, tag = 'scratch operand']
  #allocation5 [shape = 'f32[4,16,64]{2,1,0:T(8,128)}', space=vmem, size = 0x8000, scoped, tag = 'scratch operand']
  %s0 = inlined_call_operand.vmem [shape: f32[2,32,16], index: 0, kind: input, shape index: {}]
  %s1 = inlined_call_operand.vmem [shape: f32[2,32,16], index: 1, kind: input, shape index: {}]
  %s2 = inlined_call_operand.vmem [shape: f32[16,256], index: 2, kind: input, shape index: {}]
  %s3 = inlined_call_operand.vmem [shape: f32[64,256], index: 3, kind: input, shape index: {}]
  %s4 = inlined_call_operand.vmem [shape: f32[1,256], index: 4, kind: input, shape index: {}]
  %s5 = inlined_call_operand.vmem [shape: f32[32,16], index: 5, kind: input, shape index: {}]
  %s6 = inlined_call_operand.vmem [shape: f32[1,16], index: 6, kind: input, shape index: {}]
  %s7 = inlined_call_operand.vmem [shape: f32[32,16], index: 7, kind: input, shape index: {}]
  %s8 = inlined_call_operand.vmem [shape: f32[1,16], index: 8, kind: input, shape index: {}]
  %s9 = inlined_call_operand.vmem [shape: f32[2,32,16], index: 9, kind: output, shape index: {0}]
  %s10 = inlined_call_operand.vmem [shape: f32[2,32,16], index: 10, kind: output, shape index: {1}]
  %11 = xla_tuple %s9, %s10
  %s12 = sld [smem:[#allocation0]]
  $region225: #{complex_lstm_forward.1} parent=0
    _
  %s14 = ssub.s32 1, %s12
  %s15 = scalar_select 0, %s14, %s12
  $region1: #{complex_lstm_forward.1} parent=0
    #allocation6 [shape = 'u8[32768]{0}', space=vmem, size = 0x8000, scoped, tag = 'input window, operand 0']
    #allocation7 [shape = 'u8[32768]{0}', space=vmem, size = 0x8000, scoped, tag = 'input window, operand 1']
    #allocation8 [shape = 'u8[32768]{0}', space=vmem, size = 0x8000, scoped, tag = 'output window, operand 0']
    #allocation9 [shape = 'u8[32768]{0}', space=vmem, size = 0x8000, scoped, tag = 'output window, operand 1']
    loop: start=0, step=1, limit=4
    $region2: #{complex_lstm_forward.1} parent=1 // loop_pre_header
      _
    $region3: #{complex_lstm_forward.1} parent=1 // loop_header
      %s17 = sphi 0, %s21
      %p18 = scmp.ge.s32.totalorder %s17, 4
      %s24 = sphi 0, %s36
      %s25 = sphi 0, %s32
      %s26 = sphi 0, %s24
      %s27 = sphi 0, %s25
      %s28 = sphi 0, %s26
      %s29 = sphi 0, %s27
      %s41 = sphi 0, %s43
      %s44 = sphi 0, %s41
      %s45 = sphi 0, %s44
      %s61 = sphi 0, %s45
      %s69 = sphi 0, %s71
      %s72 = sphi 0, %s69
      %s73 = sphi 0, %s72
      %s89 = sphi 0, %s73
      %s93 = sphi 0, %s93
      %s95 = sphi 0, %s93
      %s96 = sphi 0, %s95
      %s110 = sphi 0, %s96
      %s114 = sphi 0, %s114
      %s116 = sphi 0, %s114
      %s117 = sphi 0, %s116
      %s131 = sphi 0, %s117
      %s135 = sphi 0, %s135
      %s137 = sphi 0, %s135
      %s138 = sphi 0, %s137
      %s152 = sphi 0, %s138
      %s156 = sphi 0, %s156
      %s158 = sphi 0, %s156
      %s159 = sphi 0, %s158
      %s173 = sphi 0, %s159
      %s177 = sphi 0, %s177
      %s179 = sphi 0, %s177
      %s180 = sphi 0, %s179
      %s194 = sphi 0, %s180
      %s198 = sphi 0, %s198
      %s200 = sphi 0, %s198
      %s201 = sphi 0, %s200
      %s215 = sphi 0, %s201
      %s219 = sphi 0, %s219
      %s221 = sphi 0, %s219
      %s222 = sphi 0, %s221
      %s236 = sphi 0, %s222
      %s244 = sphi 0, %s246
      %s247 = sphi 0, %s244
      %s248 = sphi 0, %s247
      %s264 = sphi 0, %s248
      %s272 = sphi 0, %s274
      %s275 = sphi 0, %s272
      %s276 = sphi 0, %s275
      %s292 = sphi 0, %s276
    $region4: #{complex_lstm_forward.1} parent=1 // loop_header_branch
      %20 = sbr.rel (%p18) target = $region8
    $region5: #{complex_lstm_forward.1} parent=1 // loop_body
      %s22 = ssub.s32 %s17, 1
      %s23 = ssub.s32 %s17, 2
      %s30 = sadd.s32 1, %s25
      %p31 = scmp.ge.s32.totalorder %s30, 2
      %s32 = scalar_select %p31, 0, %s30
      %s33 = sadd.s32 1, %s24
      %s34 = scalar_select %p31, %s33, %s24
      %p35 = scmp.ge.s32.totalorder %s34, 1
      %s36 = scalar_select %p35, 0, %s34
      %s37 = ssub.s32 %s24, %s36
      %s38 = ssub.s32 %s25, %s32
      %s39 = sor.u32 %s37, %s38
      %p40 = scmp.eq.s32.totalorder %s39, 0
      %s42 = sadd.s32 %s41, 1
      %s43 = scalar_select %p40, %s41, %s42
      %p46 = pneg %p40
      %p47 = scmp.eq.s32.totalorder %s17, 1
      %p48 = por %p46, %p47
      %p49 = scmp.ne.s32.totalorder %s41, %s44
      %p50 = scmp.eq.s32.totalorder %s17, 0
      %p51 = por %p49, %p50
      %p52 = scmp.ne.s32.totalorder %s41, %s44
      %p53 = scmp.eq.s32.totalorder %s22, 1
      %p54 = por %p52, %p53
      %p55 = scmp.ne.s32.totalorder %s44, %s45
      %p56 = scmp.eq.s32.totalorder %s22, 0
      %p57 = por %p55, %p56
      %p58 = scmp.ne.s32.totalorder %s44, %s45
      %p59 = scmp.eq.s32.totalorder %s23, 1
      %p60 = por %p58, %p59
      %p62 = scmp.ne.s32.totalorder %s45, %s61
      %p63 = scmp.eq.s32.totalorder %s23, 0
      %p64 = por %p62, %p63
      %s65 = ssub.s32 %s24, %s36
      %s66 = ssub.s32 %s25, %s32
      %s67 = sor.u32 %s65, %s66
      %p68 = scmp.eq.s32.totalorder %s67, 0
      %s70 = sadd.s32 %s69, 1
      %s71 = scalar_select %p68, %s69, %s70
      %p74 = pneg %p68
      %p75 = scmp.eq.s32.totalorder %s17, 1
      %p76 = por %p74, %p75
      %p77 = scmp.ne.s32.totalorder %s69, %s72
      %p78 = scmp.eq.s32.totalorder %s17, 0
      %p79 = por %p77, %p78
      %p80 = scmp.ne.s32.totalorder %s69, %s72
      %p81 = scmp.eq.s32.totalorder %s22, 1
      %p82 = por %p80, %p81
      %p83 = scmp.ne.s32.totalorder %s72, %s73
      %p84 = scmp.eq.s32.totalorder %s22, 0
      %p85 = por %p83, %p84
      %p86 = scmp.ne.s32.totalorder %s72, %s73
      %p87 = scmp.eq.s32.totalorder %s23, 1
      %p88 = por %p86, %p87
      %p90 = scmp.ne.s32.totalorder %s73, %s89
      %p91 = scmp.eq.s32.totalorder %s23, 0
      %p92 = por %p90, %p91
      %s94 = sadd.s32 %s93, 1
      %p97 = scmp.eq.s32.totalorder %s17, 1
      %p98 = scmp.ne.s32.totalorder %s93, %s95
      %p99 = scmp.eq.s32.totalorder %s17, 0
      %p100 = por %p98, %p99
      %p101 = scmp.ne.s32.totalorder %s93, %s95
      %p102 = scmp.eq.s32.totalorder %s22, 1
      %p103 = por %p101, %p102
      %p104 = scmp.ne.s32.totalorder %s95, %s96
      %p105 = scmp.eq.s32.totalorder %s22, 0
      %p106 = por %p104, %p105
      %p107 = scmp.ne.s32.totalorder %s95, %s96
      %p108 = scmp.eq.s32.totalorder %s23, 1
      %p109 = por %p107, %p108
      %p111 = scmp.ne.s32.totalorder %s96, %s110
      %p112 = scmp.eq.s32.totalorder %s23, 0
      %p113 = por %p111, %p112
      %s115 = sadd.s32 %s114, 1
      %p118 = scmp.eq.s32.totalorder %s17, 1
      %p119 = scmp.ne.s32.totalorder %s114, %s116
      %p120 = scmp.eq.s32.totalorder %s17, 0
      %p121 = por %p119, %p120
      %p122 = scmp.ne.s32.totalorder %s114, %s116
      %p123 = scmp.eq.s32.totalorder %s22, 1
      %p124 = por %p122, %p123
      %p125 = scmp.ne.s32.totalorder %s116, %s117
      %p126 = scmp.eq.s32.totalorder %s22, 0
      %p127 = por %p125, %p126
      %p128 = scmp.ne.s32.totalorder %s116, %s117
      %p129 = scmp.eq.s32.totalorder %s23, 1
      %p130 = por %p128, %p129
      %p132 = scmp.ne.s32.totalorder %s117, %s131
      %p133 = scmp.eq.s32.totalorder %s23, 0
      %p134 = por %p132, %p133
      %s136 = sadd.s32 %s135, 1
      %p139 = scmp.eq.s32.totalorder %s17, 1
      %p140 = scmp.ne.s32.totalorder %s135, %s137
      %p141 = scmp.eq.s32.totalorder %s17, 0
      %p142 = por %p140, %p141
      %p143 = scmp.ne.s32.totalorder %s135, %s137
      %p144 = scmp.eq.s32.totalorder %s22, 1
      %p145 = por %p143, %p144
      %p146 = scmp.ne.s32.totalorder %s137, %s138
      %p147 = scmp.eq.s32.totalorder %s22, 0
      %p148 = por %p146, %p147
      %p149 = scmp.ne.s32.totalorder %s137, %s138
      %p150 = scmp.eq.s32.totalorder %s23, 1
      %p151 = por %p149, %p150
      %p153 = scmp.ne.s32.totalorder %s138, %s152
      %p154 = scmp.eq.s32.totalorder %s23, 0
      %p155 = por %p153, %p154
      %s157 = sadd.s32 %s156, 1
      %p160 = scmp.eq.s32.totalorder %s17, 1
      %p161 = scmp.ne.s32.totalorder %s156, %s158
      %p162 = scmp.eq.s32.totalorder %s17, 0
      %p163 = por %p161, %p162
      %p164 = scmp.ne.s32.totalorder %s156, %s158
      %p165 = scmp.eq.s32.totalorder %s22, 1
      %p166 = por %p164, %p165
      %p167 = scmp.ne.s32.totalorder %s158, %s159
      %p168 = scmp.eq.s32.totalorder %s22, 0
      %p169 = por %p167, %p168
      %p170 = scmp.ne.s32.totalorder %s158, %s159
      %p171 = scmp.eq.s32.totalorder %s23, 1
      %p172 = por %p170, %p171
      %p174 = scmp.ne.s32.totalorder %s159, %s173
      %p175 = scmp.eq.s32.totalorder %s23, 0
      %p176 = por %p174, %p175
      %s178 = sadd.s32 %s177, 1
      %p181 = scmp.eq.s32.totalorder %s17, 1
      %p182 = scmp.ne.s32.totalorder %s177, %s179
      %p183 = scmp.eq.s32.totalorder %s17, 0
      %p184 = por %p182, %p183
      %p185 = scmp.ne.s32.totalorder %s177, %s179
      %p186 = scmp.eq.s32.totalorder %s22, 1
      %p187 = por %p185, %p186
      %p188 = scmp.ne.s32.totalorder %s179, %s180
      %p189 = scmp.eq.s32.totalorder %s22, 0
      %p190 = por %p188, %p189
      %p191 = scmp.ne.s32.totalorder %s179, %s180
      %p192 = scmp.eq.s32.totalorder %s23, 1
      %p193 = por %p191, %p192
      %p195 = scmp.ne.s32.totalorder %s180, %s194
      %p196 = scmp.eq.s32.totalorder %s23, 0
      %p197 = por %p195, %p196
      %s199 = sadd.s32 %s198, 1
      %p202 = scmp.eq.s32.totalorder %s17, 1
      %p203 = scmp.ne.s32.totalorder %s198, %s200
      %p204 = scmp.eq.s32.totalorder %s17, 0
      %p205 = por %p203, %p204
      %p206 = scmp.ne.s32.totalorder %s198, %s200
      %p207 = scmp.eq.s32.totalorder %s22, 1
      %p208 = por %p206, %p207
      %p209 = scmp.ne.s32.totalorder %s200, %s201
      %p210 = scmp.eq.s32.totalorder %s22, 0
      %p211 = por %p209, %p210
      %p212 = scmp.ne.s32.totalorder %s200, %s201
      %p213 = scmp.eq.s32.totalorder %s23, 1
      %p214 = por %p212, %p213
      %p216 = scmp.ne.s32.totalorder %s201, %s215
      %p217 = scmp.eq.s32.totalorder %s23, 0
      %p218 = por %p216, %p217
      %s220 = sadd.s32 %s219, 1
      %p223 = scmp.eq.s32.totalorder %s17, 1
      %p224 = scmp.ne.s32.totalorder %s219, %s221
      %p225 = scmp.eq.s32.totalorder %s17, 0
      %p226 = por %p224, %p225
      %p227 = scmp.ne.s32.totalorder %s219, %s221
      %p228 = scmp.eq.s32.totalorder %s22, 1
      %p229 = por %p227, %p228
      %p230 = scmp.ne.s32.totalorder %s221, %s222
      %p231 = scmp.eq.s32.totalorder %s22, 0
      %p232 = por %p230, %p231
      %p233 = scmp.ne.s32.totalorder %s221, %s222
      %p234 = scmp.eq.s32.totalorder %s23, 1
      %p235 = por %p233, %p234
      %p237 = scmp.ne.s32.totalorder %s222, %s236
      %p238 = scmp.eq.s32.totalorder %s23, 0
      %p239 = por %p237, %p238
      %s240 = ssub.s32 %s24, %s36
      %s241 = ssub.s32 %s25, %s32
      %s242 = sor.u32 %s240, %s241
      %p243 = scmp.eq.s32.totalorder %s242, 0
      %s245 = sadd.s32 %s244, 1
      %s246 = scalar_select %p243, %s244, %s245
      %p249 = pneg %p243
      %p250 = scmp.eq.s32.totalorder %s17, 1
      %p251 = por %p249, %p250
      %p252 = scmp.ne.s32.totalorder %s244, %s247
      %p253 = scmp.eq.s32.totalorder %s17, 0
      %p254 = por %p252, %p253
      %p255 = scmp.ne.s32.totalorder %s244, %s247
      %p256 = scmp.eq.s32.totalorder %s22, 1
      %p257 = por %p255, %p256
      %p258 = scmp.ne.s32.totalorder %s247, %s248
      %p259 = scmp.eq.s32.totalorder %s22, 0
      %p260 = por %p258, %p259
      %p261 = scmp.ne.s32.totalorder %s247, %s248
      %p262 = scmp.eq.s32.totalorder %s23, 1
      %p263 = por %p261, %p262
      %p265 = scmp.ne.s32.totalorder %s248, %s264
      %p266 = scmp.eq.s32.totalorder %s23, 0
      %p267 = por %p265, %p266
      %s268 = ssub.s32 %s24, %s36
      %s269 = ssub.s32 %s25, %s32
      %s270 = sor.u32 %s268, %s269
      %p271 = scmp.eq.s32.totalorder %s270, 0
      %s273 = sadd.s32 %s272, 1
      %s274 = scalar_select %p271, %s272, %s273
      %p277 = pneg %p271
      %p278 = scmp.eq.s32.totalorder %s17, 1
      %p279 = por %p277, %p278
      %p280 = scmp.ne.s32.totalorder %s272, %s275
      %p281 = scmp.eq.s32.totalorder %s17, 0
      %p282 = por %p280, %p281
      %p283 = scmp.ne.s32.totalorder %s272, %s275
      %p284 = scmp.eq.s32.totalorder %s22, 1
      %p285 = por %p283, %p284
      %p286 = scmp.ne.s32.totalorder %s275, %s276
      %p287 = scmp.eq.s32.totalorder %s22, 0
      %p288 = por %p286, %p287
      %p289 = scmp.ne.s32.totalorder %s275, %s276
      %p290 = scmp.eq.s32.totalorder %s23, 1
      %p291 = por %p289, %p290
      %p293 = scmp.ne.s32.totalorder %s276, %s292
      %p294 = scmp.eq.s32.totalorder %s23, 0
      %p295 = por %p293, %p294
      %p296 = scmp.le.s32.totalorder 1, %s17
      %p297 = scmp.lt.s32.totalorder %s17, 3
      %p298 = pnand %p296, %p297
      %p299 = pneg %p298
      // Predicated region
      $region9: #{complex_lstm_forward.1} parent=5 // pred_check
        _
      $region10: #{complex_lstm_forward.1} parent=5 // pred_check_branch
        %301 = sbr.rel (%p298) target = $region12
      $region11: #{complex_lstm_forward.1} parent=5 // pred_region
        %s302 = ssub.s32 %s17, 1
        // Predicated region
        $region13: #{complex_lstm_forward.1} parent=11 // pred_check
          %p303 = pneg %p106
        $region14: #{complex_lstm_forward.1} parent=11 // pred_check_branch
          %305 = sbr.rel (%p303) target = $region16
        $region15: #{complex_lstm_forward.1} parent=11 // pred_region
          _
        $region16: #{complex_lstm_forward.1} parent=11 // pred_fallthru
          _
        // Predicated region
        $region17: #{complex_lstm_forward.1} parent=11 // pred_check
          %p306 = pneg %p127
        $region18: #{complex_lstm_forward.1} parent=11 // pred_check_branch
          %308 = sbr.rel (%p306) target = $region20
        $region19: #{complex_lstm_forward.1} parent=11 // pred_region
          _
        $region20: #{complex_lstm_forward.1} parent=11 // pred_fallthru
          _
        // Predicated region
        $region21: #{complex_lstm_forward.1} parent=11 // pred_check
          %p309 = pneg %p148
        $region22: #{complex_lstm_forward.1} parent=11 // pred_check_branch
          %311 = sbr.rel (%p309) target = $region24
        $region23: #{complex_lstm_forward.1} parent=11 // pred_region
          _
        $region24: #{complex_lstm_forward.1} parent=11 // pred_fallthru
          _
        // Predicated region
        $region25: #{complex_lstm_forward.1} parent=11 // pred_check
          %p312 = pneg %p169
        $region26: #{complex_lstm_forward.1} parent=11 // pred_check_branch
          %314 = sbr.rel (%p312) target = $region28
        $region27: #{complex_lstm_forward.1} parent=11 // pred_region
          _
        $region28: #{complex_lstm_forward.1} parent=11 // pred_fallthru
          _
        // Predicated region
        $region29: #{complex_lstm_forward.1} parent=11 // pred_check
          %p315 = pneg %p190
        $region30: #{complex_lstm_forward.1} parent=11 // pred_check_branch
          %317 = sbr.rel (%p315) target = $region32
        $region31: #{complex_lstm_forward.1} parent=11 // pred_region
          _
        $region32: #{complex_lstm_forward.1} parent=11 // pred_fallthru
          _
        // Predicated region
        $region33: #{complex_lstm_forward.1} parent=11 // pred_check
          %p318 = pneg %p211
        $region34: #{complex_lstm_forward.1} parent=11 // pred_check_branch
          %320 = sbr.rel (%p318) target = $region36
        $region35: #{complex_lstm_forward.1} parent=11 // pred_region
          _
        $region36: #{complex_lstm_forward.1} parent=11 // pred_fallthru
          _
        // Predicated region
        $region37: #{complex_lstm_forward.1} parent=11 // pred_check
          %p321 = pneg %p232
        $region38: #{complex_lstm_forward.1} parent=11 // pred_check_branch
          %323 = sbr.rel (%p321) target = $region40
        $region39: #{complex_lstm_forward.1} parent=11 // pred_region
          _
        $region40: #{complex_lstm_forward.1} parent=11 // pred_fallthru
          _
      $region12: #{complex_lstm_forward.1} parent=5 // pred_fallthru
        _
      %p324 = scmp.lt.s32.totalorder %s17, 2
      // Predicated region
      $region41: #{complex_lstm_forward.1} parent=5 // pred_check
        %p325 = pneg %p324
      $region42: #{complex_lstm_forward.1} parent=5 // pred_check_branch
        %327 = sbr.rel (%p325) target = $region44
      $region43: #{complex_lstm_forward.1} parent=5 // pred_region
        // Predicated region
        $region45: #{complex_lstm_forward.1} parent=43 // pred_check
          %p328 = pneg %p51
        $region46: #{complex_lstm_forward.1} parent=43 // pred_check_branch
          %330 = sbr.rel (%p328) target = $region48
        $region47: #{complex_lstm_forward.1} parent=43 // pred_region
          %s331 = sand.u32 %s41, 1
          %s332 = sand.u32 %s41, 1
          %s333 = smul.addr %s332, 32
          %s334 = scalar_lea.vmem [#allocation6], %s333
          %s335 = smul.u32 2, %s24
          %s336 = smul.u32 2, %s25
          %s337 = smul.addr %s335, 4
          %s338 = sadd.s32 %s336, %s337
          %s339 = smul.addr %s338, 8
          %s340 = scalar_lea.vmem %s0, %s339
          // Predicated region
          $region49: #{complex_lstm_forward.1} parent=47 // pred_check
            _
          $region50: #{complex_lstm_forward.1} parent=47 // pred_check_branch
            %342 = sbr.rel (0) target = $region52
          $region51: #{complex_lstm_forward.1} parent=47 // pred_region
            // Predicated region
            $region53: #{complex_lstm_forward.1} parent=51 // pred_check
              _
            $region54: #{complex_lstm_forward.1} parent=51 // pred_check_branch
              %344 = sbr.rel (0) target = $region56
            $region55: #{complex_lstm_forward.1} parent=51 // pred_region
              // Predicated region
              $region68: #{complex_lstm_forward.1} parent=55 // pred_check
                _
              $region69: #{complex_lstm_forward.1} parent=55 // pred_check_branch
                %365 = sbr.rel (0) target = $region71
              $region70: #{complex_lstm_forward.1} parent=55 // pred_region
                loop: start=0, step=1, limit=1
                $region72: #{complex_lstm_forward.1} parent=70 // loop_pre_header
                  _
                $region73: #{complex_lstm_forward.1} parent=70 // loop_header
                  %s367 = sphi 0, %s371
                  %p368 = scmp.ge.s32.totalorder %s367, 1
                  %s372 = sphi %s340, %s340
                  %s373 = sphi %s334, %s334
                $region74: #{complex_lstm_forward.1} parent=70 // loop_header_branch
                  %370 = sbr.rel (%p368) target = $region78
                $region75: #{complex_lstm_forward.1} parent=70 // loop_body
                  %v374 = vld [vmem:[%s372] sm:$0xff]
                  %375 = vst [vmem:[%s373] sm:$0xff] %v374
                  %v376 = vld [vmem:[%s372 + $0x8] sm:$0xff]
                  %377 = vst [vmem:[%s373 + $0x8] sm:$0xff] %v376
                  %v378 = vld [vmem:[%s372 + $0x20] sm:$0xff]
                  %379 = vst [vmem:[%s373 + $0x10] sm:$0xff] %v378
                  %v380 = vld [vmem:[%s372 + $0x28] sm:$0xff]
                  %381 = vst [vmem:[%s373 + $0x18] sm:$0xff] %v380
                $region76: #{complex_lstm_forward.1} parent=70 // loop_footer
                  %s371 = sadd.s32 1, %s367
                $region77: #{complex_lstm_forward.1} parent=70 // loop_footer_branch
                  %366 = sbr.rel target = $region73
                $region78: #{complex_lstm_forward.1} parent=70 // loop_exit
                  _
              $region71: #{complex_lstm_forward.1} parent=55 // pred_fallthru
                _
              // Predicated region
              $region79: #{complex_lstm_forward.1} parent=55 // pred_check
                _
              $region80: #{complex_lstm_forward.1} parent=55 // pred_check_branch
                %383 = sbr.rel target = $region82
              $region81: #{complex_lstm_forward.1} parent=55 // pred_region
                _
              $region82: #{complex_lstm_forward.1} parent=55 // pred_fallthru
                _
            $region56: #{complex_lstm_forward.1} parent=51 // pred_fallthru
              _
            // Predicated region
            $region57: #{complex_lstm_forward.1} parent=51 // pred_check
              _
            $region58: #{complex_lstm_forward.1} parent=51 // pred_check_branch
              %346 = sbr.rel target = $region60
            $region59: #{complex_lstm_forward.1} parent=51 // pred_region
              loop: start=0, step=1, limit=1
              $region61: #{complex_lstm_forward.1} parent=59 // loop_pre_header
                _
              $region62: #{complex_lstm_forward.1} parent=59 // loop_header
                %s349 = sphi 0, %s353
                %p350 = scmp.ge.s32.totalorder %s349, 1
                %s354 = sphi %s340, %s340
                %s355 = sphi %s334, %s334
              $region63: #{complex_lstm_forward.1} parent=59 // loop_header_branch
                %352 = sbr.rel (%p350) target = $region67
              $region64: #{complex_lstm_forward.1} parent=59 // loop_body
                %v356 = vld [vmem:[%s354] sm:$0xff]
                %357 = vst [vmem:[%s355] sm:$0xff] %v356
                %v358 = vld [vmem:[%s354 + $0x8] sm:$0xff]
                %359 = vst [vmem:[%s355 + $0x8] sm:$0xff] %v358
                %v360 = vld [vmem:[%s354 + $0x20] sm:$0xff]
                %361 = vst [vmem:[%s355 + $0x10] sm:$0xff] %v360
                %v362 = vld [vmem:[%s354 + $0x28] sm:$0xff]
                %363 = vst [vmem:[%s355 + $0x18] sm:$0xff] %v362
              $region65: #{complex_lstm_forward.1} parent=59 // loop_footer
                %s353 = sadd.s32 1, %s349
              $region66: #{complex_lstm_forward.1} parent=59 // loop_footer_branch
                %348 = sbr.rel target = $region62
              $region67: #{complex_lstm_forward.1} parent=59 // loop_exit
                _
            $region60: #{complex_lstm_forward.1} parent=51 // pred_fallthru
              _
          $region52: #{complex_lstm_forward.1} parent=47 // pred_fallthru
            _
          %384 = vnop
        $region48: #{complex_lstm_forward.1} parent=43 // pred_fallthru
          _
        // Predicated region
        $region83: #{complex_lstm_forward.1} parent=43 // pred_check
          %p385 = pneg %p79
        $region84: #{complex_lstm_forward.1} parent=43 // pred_check_branch
          %387 = sbr.rel (%p385) target = $region86
        $region85: #{complex_lstm_forward.1} parent=43 // pred_region
          %s388 = sand.u32 %s69, 1
          %s389 = sand.u32 %s69, 1
          %s390 = smul.addr %s389, 32
          %s391 = scalar_lea.vmem [#allocation7], %s390
          %s392 = smul.u32 2, %s24
          %s393 = smul.u32 2, %s25
          %s394 = smul.addr %s392, 4
          %s395 = sadd.s32 %s393, %s394
          %s396 = smul.addr %s395, 8
          %s397 = scalar_lea.vmem %s1, %s396
          // Predicated region
          $region87: #{complex_lstm_forward.1} parent=85 // pred_check
            _
          $region88: #{complex_lstm_forward.1} parent=85 // pred_check_branch
            %399 = sbr.rel (0) target = $region90
          $region89: #{complex_lstm_forward.1} parent=85 // pred_region
            // Predicated region
            $region91: #{complex_lstm_forward.1} parent=89 // pred_check
              _
            $region92: #{complex_lstm_forward.1} parent=89 // pred_check_branch
              %401 = sbr.rel (0) target = $region94
            $region93: #{complex_lstm_forward.1} parent=89 // pred_region
              // Predicated region
              $region106: #{complex_lstm_forward.1} parent=93 // pred_check
                _
              $region107: #{complex_lstm_forward.1} parent=93 // pred_check_branch
                %422 = sbr.rel (0) target = $region109
              $region108: #{complex_lstm_forward.1} parent=93 // pred_region
                loop: start=0, step=1, limit=1
                $region110: #{complex_lstm_forward.1} parent=108 // loop_pre_header
                  _
                $region111: #{complex_lstm_forward.1} parent=108 // loop_header
                  %s424 = sphi 0, %s428
                  %p425 = scmp.ge.s32.totalorder %s424, 1
                  %s429 = sphi %s397, %s397
                  %s430 = sphi %s391, %s391
                $region112: #{complex_lstm_forward.1} parent=108 // loop_header_branch
                  %427 = sbr.rel (%p425) target = $region116
                $region113: #{complex_lstm_forward.1} parent=108 // loop_body
                  %v431 = vld [vmem:[%s429] sm:$0xff]
                  %432 = vst [vmem:[%s430] sm:$0xff] %v431
                  %v433 = vld [vmem:[%s429 + $0x8] sm:$0xff]
                  %434 = vst [vmem:[%s430 + $0x8] sm:$0xff] %v433
                  %v435 = vld [vmem:[%s429 + $0x20] sm:$0xff]
                  %436 = vst [vmem:[%s430 + $0x10] sm:$0xff] %v435
                  %v437 = vld [vmem:[%s429 + $0x28] sm:$0xff]
                  %438 = vst [vmem:[%s430 + $0x18] sm:$0xff] %v437
                $region114: #{complex_lstm_forward.1} parent=108 // loop_footer
                  %s428 = sadd.s32 1, %s424
                $region115: #{complex_lstm_forward.1} parent=108 // loop_footer_branch
                  %423 = sbr.rel target = $region111
                $region116: #{complex_lstm_forward.1} parent=108 // loop_exit
                  _
              $region109: #{complex_lstm_forward.1} parent=93 // pred_fallthru
                _
              // Predicated region
              $region117: #{complex_lstm_forward.1} parent=93 // pred_check
                _
              $region118: #{complex_lstm_forward.1} parent=93 // pred_check_branch
                %440 = sbr.rel target = $region120
              $region119: #{complex_lstm_forward.1} parent=93 // pred_region
                _
              $region120: #{complex_lstm_forward.1} parent=93 // pred_fallthru
                _
            $region94: #{complex_lstm_forward.1} parent=89 // pred_fallthru
              _
            // Predicated region
            $region95: #{complex_lstm_forward.1} parent=89 // pred_check
              _
            $region96: #{complex_lstm_forward.1} parent=89 // pred_check_branch
              %403 = sbr.rel target = $region98
            $region97: #{complex_lstm_forward.1} parent=89 // pred_region
              loop: start=0, step=1, limit=1
              $region99: #{complex_lstm_forward.1} parent=97 // loop_pre_header
                _
              $region100: #{complex_lstm_forward.1} parent=97 // loop_header
                %s406 = sphi 0, %s410
                %p407 = scmp.ge.s32.totalorder %s406, 1
                %s411 = sphi %s397, %s397
                %s412 = sphi %s391, %s391
              $region101: #{complex_lstm_forward.1} parent=97 // loop_header_branch
                %409 = sbr.rel (%p407) target = $region105
              $region102: #{complex_lstm_forward.1} parent=97 // loop_body
                %v413 = vld [vmem:[%s411] sm:$0xff]
                %414 = vst [vmem:[%s412] sm:$0xff] %v413
                %v415 = vld [vmem:[%s411 + $0x8] sm:$0xff]
                %416 = vst [vmem:[%s412 + $0x8] sm:$0xff] %v415
                %v417 = vld [vmem:[%s411 + $0x20] sm:$0xff]
                %418 = vst [vmem:[%s412 + $0x10] sm:$0xff] %v417
                %v419 = vld [vmem:[%s411 + $0x28] sm:$0xff]
                %420 = vst [vmem:[%s412 + $0x18] sm:$0xff] %v419
              $region103: #{complex_lstm_forward.1} parent=97 // loop_footer
                %s410 = sadd.s32 1, %s406
              $region104: #{complex_lstm_forward.1} parent=97 // loop_footer_branch
                %405 = sbr.rel target = $region100
              $region105: #{complex_lstm_forward.1} parent=97 // loop_exit
                _
            $region98: #{complex_lstm_forward.1} parent=89 // pred_fallthru
              _
          $region90: #{complex_lstm_forward.1} parent=85 // pred_fallthru
            _
          %441 = vnop
        $region86: #{complex_lstm_forward.1} parent=43 // pred_fallthru
          _
      $region44: #{complex_lstm_forward.1} parent=5 // pred_fallthru
        _
      %p442 = scmp.le.s32.totalorder 1, %s17
      %p443 = scmp.lt.s32.totalorder %s17, 3
      %p444 = pnand %p442, %p443
      %p445 = pneg %p444
      // Predicated region
      $region121: #{complex_lstm_forward.1} parent=5 // pred_check
        _
      $region122: #{complex_lstm_forward.1} parent=5 // pred_check_branch
        %447 = sbr.rel (%p444) target = $region124
      $region123: #{complex_lstm_forward.1} parent=5 // pred_region
        %s448 = ssub.s32 %s17, 1
        %s449 = sand.u32 %s44, 1
        %s450 = sand.u32 %s44, 1
        %s451 = smul.addr %s450, 32
        %s452 = scalar_lea.vmem [#allocation6], %s451
        // Predicated region
        $region125: #{complex_lstm_forward.1} parent=123 // pred_check
          %p453 = pneg %p57
        $region126: #{complex_lstm_forward.1} parent=123 // pred_check_branch
          %455 = sbr.rel (%p453) target = $region128
        $region127: #{complex_lstm_forward.1} parent=123 // pred_region
          _
        $region128: #{complex_lstm_forward.1} parent=123 // pred_fallthru
          _
        %s456 = sand.u32 %s72, 1
        %s457 = sand.u32 %s72, 1
        %s458 = smul.addr %s457, 32
        %s459 = scalar_lea.vmem [#allocation7], %s458
        // Predicated region
        $region129: #{complex_lstm_forward.1} parent=123 // pred_check
          %p460 = pneg %p85
        $region130: #{complex_lstm_forward.1} parent=123 // pred_check_branch
          %462 = sbr.rel (%p460) target = $region132
        $region131: #{complex_lstm_forward.1} parent=123 // pred_region
          _
        $region132: #{complex_lstm_forward.1} parent=123 // pred_fallthru
          _
        %s463 = sand.u32 %s44, 1
        %s464 = sand.u32 %s44, 1
        %s465 = smul.addr %s464, 32
        %s466 = scalar_lea.vmem [#allocation6], %s465
        %p467 = pneg %p57
        %p468 = pneg %p54
        %s469 = sand.u32 %s72, 1
        %s470 = sand.u32 %s72, 1
        %s471 = smul.addr %s470, 32
        %s472 = scalar_lea.vmem [#allocation7], %s471
        %p473 = pneg %p85
        %p474 = pneg %p82
        %p475 = pneg %p106
        %p476 = pneg %p103
        %p477 = pneg %p127
        %p478 = pneg %p124
        %p479 = pneg %p148
        %p480 = pneg %p145
        %p481 = pneg %p169
        %p482 = pneg %p166
        %p483 = pneg %p190
        %p484 = pneg %p187
        %p485 = pneg %p211
        %p486 = pneg %p208
        %p487 = pneg %p232
        %p488 = pneg %p229
        %p489 = pneg %p260
        %p490 = pneg %p257
        %s491 = sand.u32 %s247, 1
        %s492 = sand.u32 %s247, 1
        %s493 = smul.addr %s492, 32
        %s494 = scalar_lea.vmem [#allocation8], %s493
        %p495 = pneg %p288
        %p496 = pneg %p285
        %s497 = sand.u32 %s275, 1
        %s498 = sand.u32 %s275, 1
        %s499 = smul.addr %s498, 32
        %s500 = scalar_lea.vmem [#allocation9], %s499
        %s501 = smul.u32 2, %s26
        %s502 = smul.u32 2, %s27
        %s503 = smul.u32 2, %s26
        %s504 = smul.u32 2, %s27
        %s505 = smul.u32 2, %s26
        %s506 = smul.u32 2, %s27
        %s507 = smul.u32 2, %s26
        %s508 = smul.u32 2, %s27
        %p509 = scmp.eq.s32.totalorder %s27, 0
        // Predicated region
        $region133: #{complex_lstm_forward.1} parent=123 // pred_check
          %p510 = pneg %p509
        $region134: #{complex_lstm_forward.1} parent=123 // pred_check_branch
          %512 = sbr.rel (%p510) target = $region136
        $region135: #{complex_lstm_forward.1} parent=123 // pred_region
          %vm513 = vcmask 519168
          %514 = vst.msk [vmem:[#allocation2] sm:$0xf] %vm513, 0.0
          %515 = vst.msk [vmem:[#allocation3] sm:$0xf] %vm513, 0.0
        $region136: #{complex_lstm_forward.1} parent=123 // pred_fallthru
          _
        %v516 = vld [vmem:[%s452] sm:$0xff]
        %v517 = vld [vmem:[%s452 + $0x8] sm:$0xff]
        %v518 = vld [vmem:[%s452 + $0x10] sm:$0xff]
        %v519 = vld [vmem:[%s452 + $0x18] sm:$0xff]
        %v520 = vld [vmem:[%s459] sm:$0xff]
        %v521 = vld [vmem:[%s459 + $0x8] sm:$0xff]
        %v522 = vld [vmem:[%s459 + $0x10] sm:$0xff]
        %v523 = vld [vmem:[%s459 + $0x18] sm:$0xff]
        %v524 = vld [vmem:[%s2] sm:$0xff]
        %v525 = vld [vmem:[%s2 + $0x8] sm:$0xff]
        %v526 = vld [vmem:[%s2 + $0x10] sm:$0xff]
        %v527 = vld [vmem:[%s2 + $0x18] sm:$0xff]
        %vm528 = vcmask 130048
        %v530 = vsel %vm528, %v516, 0
        %v533 = vsel %vm528, %v517, 0
        %v536 = vsel %vm528, %v518, 0
        %v539 = vsel %vm528, %v519, 0
        %v542 = vsel %vm528, %v520, 0
        %v545 = vsel %vm528, %v521, 0
        %v548 = vsel %vm528, %v522, 0
        %v551 = vsel %vm528, %v523, 0
        %553 = vmatprep.subr.mxu0 %v525
        %554 = vmatpush1.msra.mxu0 %v524
        %555 = vmatprep.subr.mxu0 %v527
        %556 = vmatpush1.msra.mxu0 %v526
        %557 = vmatprep.subr.mxu0 0.0
        %558 = vmatpush1.msra.mxu0 0.0
        %559 = vmatprep.subr.mxu0 0.0
        %560 = vmatpush1.msra.mxu0 0.0
        %561 = vmatprep.subr.mxu0 0.0
        %562 = vmatpush1.msra.mxu0 0.0
        %563 = vmatprep.subr.mxu0 0.0
        %564 = vmatpush1.msra.mxu0 0.0
        %565 = vmatprep.subr.mxu0 0.0
        %566 = vmatpush1.msra.mxu0 0.0
        %567 = vmatprep.subr.mxu0 0.0
        %568 = vmatpush1.msra.mxu0 0.0
        %569 = vmatprep.subr.mxu0 0.0
        %570 = vmatpush1.msra.mxu0 0.0
        %571 = vmatprep.subr.mxu0 0.0
        %572 = vmatpush1.msra.mxu0 0.0
        %573 = vmatprep.subr.mxu0 0.0
        %574 = vmatpush1.msra.mxu0 0.0
        %575 = vmatprep.subr.mxu0 0.0
        %576 = vmatpush1.msra.mxu0 0.0
        %577 = vmatprep.subr.mxu0 0.0
        %578 = vmatpush1.msra.mxu0 0.0
        %579 = vmatprep.subr.mxu0 0.0
        %580 = vmatpush1.msra.mxu0 0.0
        %581 = vmatprep.subr.mxu0 0.0
        %582 = vmatpush1.msra.mxu0 0.0
        %583 = vmatprep.subr.mxu0 0.0
        %584 = vmatpush1.msra.mxu0 0.0
        %585 = vmatprep.subr.mxu0 0.0
        %586 = vmatpush1.msra.mxu0 0.0
        %587 = vmatprep.subr.mxu0 0.0
        %588 = vmatpush1.msra.mxu0 0.0
        %589 = vmatprep.subr.mxu0 0.0
        %590 = vmatpush1.msra.mxu0 0.0
        %591 = vmatprep.subr.mxu0 0.0
        %592 = vmatpush1.msra.mxu0 0.0
        %593 = vmatprep.subr.mxu0 0.0
        %594 = vmatpush1.msra.mxu0 0.0
        %595 = vmatprep.subr.mxu0 0.0
        %596 = vmatpush1.msra.mxu0 0.0
        %597 = vmatprep.subr.mxu0 0.0
        %598 = vmatpush1.msra.mxu0 0.0
        %599 = vmatprep.subr.mxu0 0.0
        %600 = vmatpush1.msra.mxu0 0.0
        %601 = vmatprep.subr.mxu0 0.0
        %602 = vmatpush1.msra.mxu0 0.0
        %603 = vmatprep.subr.mxu0 0.0
        %604 = vmatpush1.msra.mxu0 0.0
        %605 = vmatprep.subr.mxu0 0.0
        %606 = vmatpush1.msra.mxu0 0.0
        %607 = vmatprep.subr.mxu0 0.0
        %608 = vmatpush1.msra.mxu0 0.0
        %609 = vmatprep.subr.mxu0 0.0
        %610 = vmatpush1.msra.mxu0 0.0
        %611 = vmatprep.subr.mxu0 0.0
        %612 = vmatpush1.msra.mxu0 0.0
        %613 = vmatprep.subr.mxu0 0.0
        %614 = vmatpush1.msra.mxu0 0.0
        %615 = vmatprep.subr.mxu0 0.0
        %616 = vmatpush1.msra.mxu0 0.0
        %617 = vmatprep.mubr.f32.mxu0 0.0
        %618 = vmatmul.mubr.f32.gmra.mrb[0].mxu0 %v530
        %v619 = vpop.f32.mrb[0].mxu0
        %v620 = vadd.f32 0.0, %v619
        %v621 = vpop.f32.mrb[0].mxu0
        %v622 = vadd.f32 0.0, %v621
        %623 = vmatprep.mubr.f32.mxu0 0.0
        %624 = vmatmul.mubr.f32.gmra.mrb[0].mxu0 %v533
        %v625 = vpop.f32.mrb[0].mxu0
        %v626 = vadd.f32 0.0, %v625
        %v627 = vpop.f32.mrb[0].mxu0
        %v628 = vadd.f32 0.0, %v627
        %629 = vmatprep.mubr.f32.mxu0 0.0
        %630 = vmatmul.mubr.f32.gmra.mrb[0].mxu0 %v536
        %v631 = vpop.f32.mrb[0].mxu0
        %v632 = vadd.f32 0.0, %v631
        %v633 = vpop.f32.mrb[0].mxu0
        %v634 = vadd.f32 0.0, %v633
        %635 = vmatprep.mubr.f32.mxu0 0.0
        %636 = vmatmul.mubr.f32.gmra.mrb[0].mxu0 %v539
        %v637 = vpop.f32.mrb[0].mxu0
        %v638 = vadd.f32 0.0, %v637
        %v639 = vpop.f32.mrb[0].mxu0
        %v640 = vadd.f32 0.0, %v639
        %641 = vmatprep.mubr.f32.mxu0 0.0
        %642 = vmatmul.mubr.f32.gmra.mrb[0].mxu0 %v542
        %v643 = vpop.f32.mrb[0].mxu0
        %v644 = vadd.f32 0.0, %v643
        %v645 = vpop.f32.mrb[0].mxu0
        %v646 = vadd.f32 0.0, %v645
        %647 = vmatprep.mubr.f32.mxu0 0.0
        %648 = vmatmul.mubr.f32.gmra.mrb[0].mxu0 %v545
        %v649 = vpop.f32.mrb[0].mxu0
        %v650 = vadd.f32 0.0, %v649
        %v651 = vpop.f32.mrb[0].mxu0
        %v652 = vadd.f32 0.0, %v651
        %653 = vmatprep.mubr.f32.mxu0 0.0
        %654 = vmatmul.mubr.f32.gmra.mrb[0].mxu0 %v548
        %v655 = vpop.f32.mrb[0].mxu0
        %v656 = vadd.f32 0.0, %v655
        %v657 = vpop.f32.mrb[0].mxu0
        %v658 = vadd.f32 0.0, %v657
        %659 = vmatprep.mubr.f32.mxu0 0.0
        %660 = vmatmul.mubr.f32.gmra.mrb[0].mxu0 %v551
        %v661 = vpop.f32.mrb[0].mxu0
        %v662 = vadd.f32 0.0, %v661
        %v663 = vpop.f32.mrb[0].mxu0
        %v664 = vadd.f32 0.0, %v663
        %665 = vdwg.mxu0
        %v666 = vld [vmem:[%s4] sm:$0x3]
        %v668 = vlaneseq
        %v669 = vshrl.u32 %v668, 7
        %v670 = vsub.s32 0, %v669
        %v671 = vrot.slane %v666, %v670
        %v672 = vlaneseq
        %v673 = vshrl.u32 %v672, 7
        %v674 = vsub.s32 1, %v673
        %v675 = vrot.slane %v666, %v674
        %v678 = vadd.f32 %v620, %v671
        %v679 = vadd.f32 %v622, %v675
        %v680 = vadd.f32 %v626, %v671
        %v681 = vadd.f32 %v628, %v675
        %v682 = vadd.f32 %v632, %v671
        %v683 = vadd.f32 %v634, %v675
        %v684 = vadd.f32 %v638, %v671
        %v685 = vadd.f32 %v640, %v675
        %v686 = vadd.f32 %v644, %v671
        %v687 = vadd.f32 %v646, %v675
        %v688 = vadd.f32 %v650, %v671
        %v689 = vadd.f32 %v652, %v675
        %v690 = vadd.f32 %v656, %v671
        %v691 = vadd.f32 %v658, %v675
        %v692 = vadd.f32 %v662, %v671
        %v693 = vadd.f32 %v664, %v675
        %694 = vst [vmem:[#allocation4] sm:$0xff] %v678
        %695 = vst [vmem:[#allocation4 + $0x8] sm:$0xff] %v679
        %696 = vst [vmem:[#allocation4 + $0x10] sm:$0xff] %v680
        %697 = vst [vmem:[#allocation4 + $0x18] sm:$0xff] %v681
        %698 = vst [vmem:[#allocation4 + $0x20] sm:$0xff] %v682
        %699 = vst [vmem:[#allocation4 + $0x28] sm:$0xff] %v683
        %700 = vst [vmem:[#allocation4 + $0x30] sm:$0xff] %v684
        %701 = vst [vmem:[#allocation4 + $0x38] sm:$0xff] %v685
        %702 = vst [vmem:[#allocation4 + $0x40] sm:$0xff] %v686
        %703 = vst [vmem:[#allocation4 + $0x48] sm:$0xff] %v687
        %704 = vst [vmem:[#allocation4 + $0x50] sm:$0xff] %v688
        %705 = vst [vmem:[#allocation4 + $0x58] sm:$0xff] %v689
        %706 = vst [vmem:[#allocation4 + $0x60] sm:$0xff] %v690
        %707 = vst [vmem:[#allocation4 + $0x68] sm:$0xff] %v691
        %708 = vst [vmem:[#allocation4 + $0x70] sm:$0xff] %v692
        %709 = vst [vmem:[#allocation4 + $0x78] sm:$0xff] %v693
        %v710 = vld [vmem:[%s3] sm:$0xff]
        %v711 = vld [vmem:[%s3 + $0x8] sm:$0xff]
        %v712 = vld [vmem:[%s3 + $0x10] sm:$0xff]
        %v713 = vld [vmem:[%s3 + $0x18] sm:$0xff]
        %v714 = vld [vmem:[%s3 + $0x20] sm:$0xff]
        %v715 = vld [vmem:[%s3 + $0x28] sm:$0xff]
        %v716 = vld [vmem:[%s3 + $0x30] sm:$0xff]
        %v717 = vld [vmem:[%s3 + $0x38] sm:$0xff]
        %v718 = vld [vmem:[%s3 + $0x40] sm:$0xff]
        %v719 = vld [vmem:[%s3 + $0x48] sm:$0xff]
        %v720 = vld [vmem:[%s3 + $0x50] sm:$0xff]
        %v721 = vld [vmem:[%s3 + $0x58] sm:$0xff]
        %v722 = vld [vmem:[%s3 + $0x60] sm:$0xff]
        %v723 = vld [vmem:[%s3 + $0x68] sm:$0xff]
        %v724 = vld [vmem:[%s3 + $0x70] sm:$0xff]
        %v725 = vld [vmem:[%s3 + $0x78] sm:$0xff]
        %v726 = vld [vmem:[#allocation2] sm:$0xf]
        %v727 = vld [vmem:[#allocation3] sm:$0xf]
        %v728 = vld [vmem:[#allocation4] ss:$8 sm:$0x3]
        %s729 = scalar_lea.vmem [#allocation4], 32
        %v730 = vld [vmem:[%s729] ss:$8 sm:$0x3]
        %s731 = scalar_lea.vmem [#allocation4], 64
        %v732 = vld [vmem:[%s731] ss:$8 sm:$0x3]
        %s733 = scalar_lea.vmem [#allocation4], 96
        %v734 = vld [vmem:[%s733] ss:$8 sm:$0x3]
        %vm735 = vcmask 523264
        %v737 = vsel %vm735, %v726, 0
        %739 = vmatprep.subr.mxu0 %v711
        %740 = vmatpush1.msra.mxu0 %v710
        %741 = vmatprep.subr.mxu0 %v713
        %742 = vmatpush1.msra.mxu0 %v712
        %743 = vmatprep.subr.mxu0 %v715
        %744 = vmatpush1.msra.mxu0 %v714
        %745 = vmatprep.subr.mxu0 %v717
        %746 = vmatpush1.msra.mxu0 %v716
        %747 = vmatprep.subr.mxu0 %v719
        %748 = vmatpush1.msra.mxu0 %v718
        %749 = vmatprep.subr.mxu0 %v721
        %750 = vmatpush1.msra.mxu0 %v720
        %751 = vmatprep.subr.mxu0 %v723
        %752 = vmatpush1.msra.mxu0 %v722
        %753 = vmatprep.subr.mxu0 %v725
        %754 = vmatpush1.msra.mxu0 %v724
        %755 = vmatprep.subr.mxu0 0.0
        %756 = vmatpush1.msra.mxu0 0.0
        %757 = vmatprep.subr.mxu0 0.0
        %758 = vmatpush1.msra.mxu0 0.0
        %759 = vmatprep.subr.mxu0 0.0
        %760 = vmatpush1.msra.mxu0 0.0
        %761 = vmatprep.subr.mxu0 0.0
        %762 = vmatpush1.msra.mxu0 0.0
        %763 = vmatprep.subr.mxu0 0.0
        %764 = vmatpush1.msra.mxu0 0.0
        %765 = vmatprep.subr.mxu0 0.0
        %766 = vmatpush1.msra.mxu0 0.0
        %767 = vmatprep.subr.mxu0 0.0
        %768 = vmatpush1.msra.mxu0 0.0
        %769 = vmatprep.subr.mxu0 0.0
        %770 = vmatpush1.msra.mxu0 0.0
        %771 = vmatprep.subr.mxu0 0.0
        %772 = vmatpush1.msra.mxu0 0.0
        %773 = vmatprep.subr.mxu0 0.0
        %774 = vmatpush1.msra.mxu0 0.0
        %775 = vmatprep.subr.mxu0 0.0
        %776 = vmatpush1.msra.mxu0 0.0
        %777 = vmatprep.subr.mxu0 0.0
        %778 = vmatpush1.msra.mxu0 0.0
        %779 = vmatprep.subr.mxu0 0.0
        %780 = vmatpush1.msra.mxu0 0.0
        %781 = vmatprep.subr.mxu0 0.0
        %782 = vmatpush1.msra.mxu0 0.0
        %783 = vmatprep.subr.mxu0 0.0
        %784 = vmatpush1.msra.mxu0 0.0
        %785 = vmatprep.subr.mxu0 0.0
        %786 = vmatpush1.msra.mxu0 0.0
        %787 = vmatprep.subr.mxu0 0.0
        %788 = vmatpush1.msra.mxu0 0.0
        %789 = vmatprep.subr.mxu0 0.0
        %790 = vmatpush1.msra.mxu0 0.0
        %791 = vmatprep.subr.mxu0 0.0
        %792 = vmatpush1.msra.mxu0 0.0
        %793 = vmatprep.subr.mxu0 0.0
        %794 = vmatpush1.msra.mxu0 0.0
        %795 = vmatprep.subr.mxu0 0.0
        %796 = vmatpush1.msra.mxu0 0.0
        %797 = vmatprep.subr.mxu0 0.0
        %798 = vmatpush1.msra.mxu0 0.0
        %799 = vmatprep.subr.mxu0 0.0
        %800 = vmatpush1.msra.mxu0 0.0
        %801 = vmatprep.subr.mxu0 0.0
        %802 = vmatpush1.msra.mxu0 0.0
        %803 = vmatprep.mubr.f32.mxu0 0.0
        %804 = vmatmul.mubr.f32.gmra.mrb[0].mxu0 %v737
        %v805 = vpop.f32.mrb[0].mxu0
        %v806 = vadd.f32 0.0, %v805
        %v807 = vpop.f32.mrb[0].mxu0
        %v808 = vadd.f32 0.0, %v807
        %809 = vdwg.mxu0
        %v812 = vcombine.low %v806, %v808
        %v814 = vunpack.c.l.s4 1966171168
        %v815 = vunpack.c.0.s8 %v814
        %v816 = vlaneseq
        %v817 = vshrl.u32 %v816, 7
        %v818 = vsub.s32 %v815, %v817
        %v819 = vrot.slane %v812, %v818
        %v820 = vcombine.high %v819, %v819
        %v822 = vunpack.c.l.s4 1966171168
        %v823 = vunpack.c.0.s8 %v822
        %v824 = vlaneseq
        %v825 = vshrl.u32 %v824, 7
        %v826 = vsub.s32 %v823, %v825
        %v827 = vrot.slane %v819, %v826
        %v829 = vunpack.c.l.s4 1966171168
        %v830 = vunpack.c.0.s8 %v829
        %v831 = vlaneseq
        %v832 = vshrl.u32 %v831, 7
        %v833 = vsub.s32 %v830, %v832
        %v834 = vrot.slane %v820, %v833
        %v835 = vcombine.high %v827, %v827
        %v836 = vcombine.high %v834, %v834
        %v841 = vadd.f32 %v728, %v827
        %v842 = vadd.f32 %v730, %v834
        %v843 = vadd.f32 %v732, %v835
        %v844 = vadd.f32 %v734, %v836
        %v845 = vxor.u32 %v841, 2147483648
        %v846 = vxor.u32 %v842, 2147483648
        %v847 = vxor.u32 %v843, 2147483648
        %v848 = vxor.u32 %v844, 2147483648
        %v849 = vmul.f32 %v845, 1.442695
        %v850 = vpow.pop %v849
        %v851 = vmul.f32 %v846, 1.442695
        %v852 = vpow.pop %v851
        %v853 = vmul.f32 %v847, 1.442695
        %v854 = vpow.pop %v853
        %v855 = vmul.f32 %v848, 1.442695
        %v856 = vpow.pop %v855
        %v857 = vadd.f32 %v850, 1.0
        %v858 = vadd.f32 %v852, 1.0
        %v859 = vadd.f32 %v854, 1.0
        %v860 = vadd.f32 %v856, 1.0
        %v861 = vrcp.pop %v857
        %v862 = vmul.f32 1.0, %v861
        %v863 = vrcp.pop %v858
        %v864 = vmul.f32 1.0, %v863
        %v865 = vrcp.pop %v859
        %v866 = vmul.f32 1.0, %v865
        %v867 = vrcp.pop %v860
        %v868 = vmul.f32 1.0, %v867
        %v873 = vrot.slane %v841, 1
        %v874 = vrot.slane %v842, 1
        %v875 = vrot.slane %v843, 1
        %v876 = vrot.slane %v844, 1
        %v881 = vtanh.pop %v873
        %v882 = vtanh.pop %v874
        %v883 = vtanh.pop %v875
        %v884 = vtanh.pop %v876
        %885 = vrot.lane.b32.xlu0 %v841, 64
        %v886 = vpop.permute.xlu0 %885
        %887 = vrot.lane.b32.xlu0 %v842, 64
        %v888 = vpop.permute.xlu0 %887
        %889 = vrot.lane.b32.xlu0 %v843, 64
        %v890 = vpop.permute.xlu0 %889
        %891 = vrot.lane.b32.xlu0 %v844, 64
        %v892 = vpop.permute.xlu0 %891
        %v893 = vrot.slane %v886, 1
        %v894 = vrot.slane %v888, 1
        %v895 = vrot.slane %v890, 1
        %v896 = vrot.slane %v892, 1
        %v901 = vxor.u32 %v893, 2147483648
        %v902 = vxor.u32 %v894, 2147483648
        %v903 = vxor.u32 %v895, 2147483648
        %v904 = vxor.u32 %v896, 2147483648
        %v905 = vmul.f32 %v901, 1.442695
        %v906 = vpow.pop %v905
        %v907 = vmul.f32 %v902, 1.442695
        %v908 = vpow.pop %v907
        %v909 = vmul.f32 %v903, 1.442695
        %v910 = vpow.pop %v909
        %v911 = vmul.f32 %v904, 1.442695
        %v912 = vpow.pop %v911
        %v913 = vadd.f32 %v906, 1.0
        %v914 = vadd.f32 %v908, 1.0
        %v915 = vadd.f32 %v910, 1.0
        %v916 = vadd.f32 %v912, 1.0
        %v917 = vrcp.pop %v913
        %v918 = vmul.f32 1.0, %v917
        %v919 = vrcp.pop %v914
        %v920 = vmul.f32 1.0, %v919
        %v921 = vrcp.pop %v915
        %v922 = vmul.f32 1.0, %v921
        %v923 = vrcp.pop %v916
        %v924 = vmul.f32 1.0, %v923
        %v927 = vunpack.c.l.s4 1966171168
        %v928 = vunpack.c.0.s8 %v927
        %v929 = vlaneseq
        %v930 = vshrl.u32 %v929, 7
        %v931 = vsub.s32 %v928, %v930
        %v932 = vrot.slane %v727, %v931
        %v933 = vcombine.high %v932, %v932
        %v935 = vunpack.c.l.s4 1966171168
        %v936 = vunpack.c.0.s8 %v935
        %v937 = vlaneseq
        %v938 = vshrl.u32 %v937, 7
        %v939 = vsub.s32 %v936, %v938
        %v940 = vrot.slane %v932, %v939
        %v942 = vunpack.c.l.s4 1966171168
        %v943 = vunpack.c.0.s8 %v942
        %v944 = vlaneseq
        %v945 = vshrl.u32 %v944, 7
        %v946 = vsub.s32 %v943, %v945
        %v947 = vrot.slane %v933, %v946
        %v948 = vcombine.high %v940, %v940
        %v949 = vcombine.high %v947, %v947
        %950 = vrot.lane.b32.xlu0 %v940, 64
        %v951 = vpop.permute.xlu0 %950
        %952 = vrot.lane.b32.xlu0 %v947, 64
        %v953 = vpop.permute.xlu0 %952
        %954 = vrot.lane.b32.xlu0 %v948, 64
        %v955 = vpop.permute.xlu0 %954
        %956 = vrot.lane.b32.xlu0 %v949, 64
        %v957 = vpop.permute.xlu0 %956
        %v962 = vmul.f32 %v862, %v951
        %v963 = vmul.f32 %v864, %v953
        %v964 = vmul.f32 %v866, %v955
        %v965 = vmul.f32 %v868, %v957
        %v966 = vmul.f32 %v862, %v881
        %v967 = vmul.f32 %v864, %v882
        %v968 = vmul.f32 %v866, %v883
        %v969 = vmul.f32 %v868, %v884
        %974 = vrot.lane.b32.xlu0 %v966, 64
        %v975 = vpop.permute.xlu0 %974
        %976 = vrot.lane.b32.xlu0 %v967, 64
        %v977 = vpop.permute.xlu0 %976
        %978 = vrot.lane.b32.xlu0 %v968, 64
        %v979 = vpop.permute.xlu0 %978
        %980 = vrot.lane.b32.xlu0 %v969, 64
        %v981 = vpop.permute.xlu0 %980
        %v986 = vadd.f32 %v962, %v975
        %v987 = vadd.f32 %v963, %v977
        %v988 = vadd.f32 %v964, %v979
        %v989 = vadd.f32 %v965, %v981
        %v990 = vtanh.pop %v986
        %v991 = vtanh.pop %v987
        %v992 = vtanh.pop %v988
        %v993 = vtanh.pop %v989
        %998 = vrot.lane.b32.xlu0 %v990, 64
        %v999 = vpop.permute.xlu0 %998
        %1000 = vrot.lane.b32.xlu0 %v991, 64
        %v1001 = vpop.permute.xlu0 %1000
        %1002 = vrot.lane.b32.xlu0 %v992, 64
        %v1003 = vpop.permute.xlu0 %1002
        %1004 = vrot.lane.b32.xlu0 %v993, 64
        %v1005 = vpop.permute.xlu0 %1004
        %v1010 = vmul.f32 %v918, %v999
        %v1011 = vmul.f32 %v920, %v1001
        %v1012 = vmul.f32 %v922, %v1003
        %v1013 = vmul.f32 %v924, %v1005
        %vm1014 = vcmask 516096
        %1015 = vst.msk [vmem:[#allocation5] sm:$0x1] %vm1014, %v1010
        %1016 = vst.msk [vmem:[#allocation5 + $0x10] sm:$0x1] %vm1014, %v1011
        %1017 = vst.msk [vmem:[#allocation5 + $0x20] sm:$0x1] %vm1014, %v1012
        %1018 = vst.msk [vmem:[#allocation5 + $0x30] sm:$0x1] %vm1014, %v1013
        %s1019 = scalar_lea.vmem [#allocation4], 1
        %v1020 = vld [vmem:[%s1019] ss:$8 sm:$0x3]
        %s1021 = scalar_lea.vmem [#allocation4], 33
        %v1022 = vld [vmem:[%s1021] ss:$8 sm:$0x3]
        %s1023 = scalar_lea.vmem [#allocation4], 65
        %v1024 = vld [vmem:[%s1023] ss:$8 sm:$0x3]
        %s1025 = scalar_lea.vmem [#allocation4], 97
        %v1026 = vld [vmem:[%s1025] ss:$8 sm:$0x3]
        %v1031 = vcombine.low %v1010, %v1011
        %v1032 = vcombine.low %v1012, %v1013
        %v1034 = vunpack.c.l.s4 1966171168
        %v1035 = vunpack.c.0.s8 %v1034
        %v1036 = vlaneseq
        %v1037 = vshrl.u32 %v1036, 7
        %v1038 = vsub.s32 %v1035, %v1037
        %v1039 = vrot.slane %v1031, %v1038
        %v1041 = vunpack.c.l.s4 1966171168
        %v1042 = vunpack.c.0.s8 %v1041
        %v1043 = vlaneseq
        %v1044 = vshrl.u32 %v1043, 7
        %v1045 = vsub.s32 %v1042, %v1044
        %v1046 = vrot.slane %v1032, %v1045
        %v1047 = vcombine.low %v1039, %v1046
        %v1049 = vunpack.c.l.s4 1966171168
        %v1050 = vunpack.c.0.s8 %v1049
        %v1051 = vlaneseq
        %v1052 = vshrl.u32 %v1051, 7
        %v1053 = vsub.s32 %v1050, %v1052
        %v1054 = vrot.slane %v1047, %v1053
        %v1055 = vsel %vm735, %v1054, 0
        %1057 = vmatprep.subr.mxu0 %v711
        %1058 = vmatpush1.msra.mxu0 %v710
        %1059 = vmatprep.subr.mxu0 %v713
        %1060 = vmatpush1.msra.mxu0 %v712
        %1061 = vmatprep.subr.mxu0 %v715
        %1062 = vmatpush1.msra.mxu0 %v714
        %1063 = vmatprep.subr.mxu0 %v717
        %1064 = vmatpush1.msra.mxu0 %v716
        %1065 = vmatprep.subr.mxu0 %v719
        %1066 = vmatpush1.msra.mxu0 %v718
        %1067 = vmatprep.subr.mxu0 %v721
        %1068 = vmatpush1.msra.mxu0 %v720
        %1069 = vmatprep.subr.mxu0 %v723
        %1070 = vmatpush1.msra.mxu0 %v722
        %1071 = vmatprep.subr.mxu0 %v725
        %1072 = vmatpush1.msra.mxu0 %v724
        %1073 = vmatprep.subr.mxu0 0.0
        %1074 = vmatpush1.msra.mxu0 0.0
        %1075 = vmatprep.subr.mxu0 0.0
        %1076 = vmatpush1.msra.mxu0 0.0
        %1077 = vmatprep.subr.mxu0 0.0
        %1078 = vmatpush1.msra.mxu0 0.0
        %1079 = vmatprep.subr.mxu0 0.0
        %1080 = vmatpush1.msra.mxu0 0.0
        %1081 = vmatprep.subr.mxu0 0.0
        %1082 = vmatpush1.msra.mxu0 0.0
        %1083 = vmatprep.subr.mxu0 0.0
        %1084 = vmatpush1.msra.mxu0 0.0
        %1085 = vmatprep.subr.mxu0 0.0
        %1086 = vmatpush1.msra.mxu0 0.0
        %1087 = vmatprep.subr.mxu0 0.0
        %1088 = vmatpush1.msra.mxu0 0.0
        %1089 = vmatprep.subr.mxu0 0.0
        %1090 = vmatpush1.msra.mxu0 0.0
        %1091 = vmatprep.subr.mxu0 0.0
        %1092 = vmatpush1.msra.mxu0 0.0
        %1093 = vmatprep.subr.mxu0 0.0
        %1094 = vmatpush1.msra.mxu0 0.0
        %1095 = vmatprep.subr.mxu0 0.0
        %1096 = vmatpush1.msra.mxu0 0.0
        %1097 = vmatprep.subr.mxu0 0.0
        %1098 = vmatpush1.msra.mxu0 0.0
        %1099 = vmatprep.subr.mxu0 0.0
        %1100 = vmatpush1.msra.mxu0 0.0
        %1101 = vmatprep.subr.mxu0 0.0
        %1102 = vmatpush1.msra.mxu0 0.0
        %1103 = vmatprep.subr.mxu0 0.0
        %1104 = vmatpush1.msra.mxu0 0.0
        %1105 = vmatprep.subr.mxu0 0.0
        %1106 = vmatpush1.msra.mxu0 0.0
        %1107 = vmatprep.subr.mxu0 0.0
        %1108 = vmatpush1.msra.mxu0 0.0
        %1109 = vmatprep.subr.mxu0 0.0
        %1110 = vmatpush1.msra.mxu0 0.0
        %1111 = vmatprep.subr.mxu0 0.0
        %1112 = vmatpush1.msra.mxu0 0.0
        %1113 = vmatprep.subr.mxu0 0.0
        %1114 = vmatpush1.msra.mxu0 0.0
        %1115 = vmatprep.subr.mxu0 0.0
        %1116 = vmatpush1.msra.mxu0 0.0
        %1117 = vmatprep.subr.mxu0 0.0
        %1118 = vmatpush1.msra.mxu0 0.0
        %1119 = vmatprep.subr.mxu0 0.0
        %1120 = vmatpush1.msra.mxu0 0.0
        %1121 = vmatprep.mubr.f32.mxu0 0.0
        %1122 = vmatmul.mubr.f32.gmra.mrb[0].mxu0 %v1055
        %v1123 = vpop.f32.mrb[0].mxu0
        %v1124 = vadd.f32 0.0, %v1123
        %v1125 = vpop.f32.mrb[0].mxu0
        %v1126 = vadd.f32 0.0, %v1125
        %1127 = vdwg.mxu0
        %v1130 = vcombine.low %v1124, %v1126
        %v1132 = vunpack.c.l.s4 1966171168
        %v1133 = vunpack.c.0.s8 %v1132
        %v1134 = vlaneseq
        %v1135 = vshrl.u32 %v1134, 7
        %v1136 = vsub.s32 %v1133, %v1135
        %v1137 = vrot.slane %v1130, %v1136
        %v1138 = vcombine.high %v1137, %v1137
        %v1140 = vunpack.c.l.s4 1966171168
        %v1141 = vunpack.c.0.s8 %v1140
        %v1142 = vlaneseq
        %v1143 = vshrl.u32 %v1142, 7
        %v1144 = vsub.s32 %v1141, %v1143
        %v1145 = vrot.slane %v1137, %v1144
        %v1147 = vunpack.c.l.s4 1966171168
        %v1148 = vunpack.c.0.s8 %v1147
        %v1149 = vlaneseq
        %v1150 = vshrl.u32 %v1149, 7
        %v1151 = vsub.s32 %v1148, %v1150
        %v1152 = vrot.slane %v1138, %v1151
        %v1153 = vcombine.high %v1145, %v1145
        %v1154 = vcombine.high %v1152, %v1152
        %v1159 = vadd.f32 %v1020, %v1145
        %v1160 = vadd.f32 %v1022, %v1152
        %v1161 = vadd.f32 %v1024, %v1153
        %v1162 = vadd.f32 %v1026, %v1154
        %v1163 = vxor.u32 %v1159, 2147483648
        %v1164 = vxor.u32 %v1160, 2147483648
        %v1165 = vxor.u32 %v1161, 2147483648
        %v1166 = vxor.u32 %v1162, 2147483648
        %v1167 = vmul.f32 %v1163, 1.442695
        %v1168 = vpow.pop %v1167
        %v1169 = vmul.f32 %v1164, 1.442695
        %v1170 = vpow.pop %v1169
        %v1171 = vmul.f32 %v1165, 1.442695
        %v1172 = vpow.pop %v1171
        %v1173 = vmul.f32 %v1166, 1.442695
        %v1174 = vpow.pop %v1173
        %v1175 = vadd.f32 %v1168, 1.0
        %v1176 = vadd.f32 %v1170, 1.0
        %v1177 = vadd.f32 %v1172, 1.0
        %v1178 = vadd.f32 %v1174, 1.0
        %v1179 = vrcp.pop %v1175
        %v1180 = vmul.f32 1.0, %v1179
        %v1181 = vrcp.pop %v1176
        %v1182 = vmul.f32 1.0, %v1181
        %v1183 = vrcp.pop %v1177
        %v1184 = vmul.f32 1.0, %v1183
        %v1185 = vrcp.pop %v1178
        %v1186 = vmul.f32 1.0, %v1185
        %v1191 = vrot.slane %v1159, 1
        %v1192 = vrot.slane %v1160, 1
        %v1193 = vrot.slane %v1161, 1
        %v1194 = vrot.slane %v1162, 1
        %v1199 = vtanh.pop %v1191
        %v1200 = vtanh.pop %v1192
        %v1201 = vtanh.pop %v1193
        %v1202 = vtanh.pop %v1194
        %1203 = vrot.lane.b32.xlu0 %v1159, 64
        %v1204 = vpop.permute.xlu0 %1203
        %1205 = vrot.lane.b32.xlu0 %v1160, 64
        %v1206 = vpop.permute.xlu0 %1205
        %1207 = vrot.lane.b32.xlu0 %v1161, 64
        %v1208 = vpop.permute.xlu0 %1207
        %1209 = vrot.lane.b32.xlu0 %v1162, 64
        %v1210 = vpop.permute.xlu0 %1209
        %v1211 = vrot.slane %v1204, 1
        %v1212 = vrot.slane %v1206, 1
        %v1213 = vrot.slane %v1208, 1
        %v1214 = vrot.slane %v1210, 1
        %v1219 = vxor.u32 %v1211, 2147483648
        %v1220 = vxor.u32 %v1212, 2147483648
        %v1221 = vxor.u32 %v1213, 2147483648
        %v1222 = vxor.u32 %v1214, 2147483648
        %v1223 = vmul.f32 %v1219, 1.442695
        %v1224 = vpow.pop %v1223
        %v1225 = vmul.f32 %v1220, 1.442695
        %v1226 = vpow.pop %v1225
        %v1227 = vmul.f32 %v1221, 1.442695
        %v1228 = vpow.pop %v1227
        %v1229 = vmul.f32 %v1222, 1.442695
        %v1230 = vpow.pop %v1229
        %v1231 = vadd.f32 %v1224, 1.0
        %v1232 = vadd.f32 %v1226, 1.0
        %v1233 = vadd.f32 %v1228, 1.0
        %v1234 = vadd.f32 %v1230, 1.0
        %v1235 = vrcp.pop %v1231
        %v1236 = vmul.f32 1.0, %v1235
        %v1237 = vrcp.pop %v1232
        %v1238 = vmul.f32 1.0, %v1237
        %v1239 = vrcp.pop %v1233
        %v1240 = vmul.f32 1.0, %v1239
        %v1241 = vrcp.pop %v1234
        %v1242 = vmul.f32 1.0, %v1241
        %v1243 = vmul.f32 %v1180, %v986
        %v1244 = vmul.f32 %v1182, %v987
        %v1245 = vmul.f32 %v1184, %v988
        %v1246 = vmul.f32 %v1186, %v989
        %v1247 = vmul.f32 %v1180, %v1199
        %v1248 = vmul.f32 %v1182, %v1200
        %v1249 = vmul.f32 %v1184, %v1201
        %v1250 = vmul.f32 %v1186, %v1202
        %1255 = vrot.lane.b32.xlu0 %v1247, 64
        %v1256 = vpop.permute.xlu0 %1255
        %1257 = vrot.lane.b32.xlu0 %v1248, 64
        %v1258 = vpop.permute.xlu0 %1257
        %1259 = vrot.lane.b32.xlu0 %v1249, 64
        %v1260 = vpop.permute.xlu0 %1259
        %1261 = vrot.lane.b32.xlu0 %v1250, 64
        %v1262 = vpop.permute.xlu0 %1261
        %v1267 = vadd.f32 %v1243, %v1256
        %v1268 = vadd.f32 %v1244, %v1258
        %v1269 = vadd.f32 %v1245, %v1260
        %v1270 = vadd.f32 %v1246, %v1262
        %v1271 = vtanh.pop %v1267
        %v1272 = vtanh.pop %v1268
        %v1273 = vtanh.pop %v1269
        %v1274 = vtanh.pop %v1270
        %1279 = vrot.lane.b32.xlu0 %v1271, 64
        %v1280 = vpop.permute.xlu0 %1279
        %1281 = vrot.lane.b32.xlu0 %v1272, 64
        %v1282 = vpop.permute.xlu0 %1281
        %1283 = vrot.lane.b32.xlu0 %v1273, 64
        %v1284 = vpop.permute.xlu0 %1283
        %1285 = vrot.lane.b32.xlu0 %v1274, 64
        %v1286 = vpop.permute.xlu0 %1285
        %v1291 = vmul.f32 %v1236, %v1280
        %v1292 = vmul.f32 %v1238, %v1282
        %v1293 = vmul.f32 %v1240, %v1284
        %v1294 = vmul.f32 %v1242, %v1286
        %1295 = vst.msk [vmem:[#allocation5 + $0x1] sm:$0x1] %vm1014, %v1291
        %1296 = vst.msk [vmem:[#allocation5 + $0x11] sm:$0x1] %vm1014, %v1292
        %1297 = vst.msk [vmem:[#allocation5 + $0x21] sm:$0x1] %vm1014, %v1293
        %1298 = vst.msk [vmem:[#allocation5 + $0x31] sm:$0x1] %vm1014, %v1294
        %s1299 = scalar_lea.vmem [#allocation4], 2
        %v1300 = vld [vmem:[%s1299] ss:$8 sm:$0x3]
        %s1301 = scalar_lea.vmem [#allocation4], 34
        %v1302 = vld [vmem:[%s1301] ss:$8 sm:$0x3]
        %s1303 = scalar_lea.vmem [#allocation4], 66
        %v1304 = vld [vmem:[%s1303] ss:$8 sm:$0x3]
        %s1305 = scalar_lea.vmem [#allocation4], 98
        %v1306 = vld [vmem:[%s1305] ss:$8 sm:$0x3]
        %v1311 = vcombine.low %v1291, %v1292
        %v1312 = vcombine.low %v1293, %v1294
        %v1314 = vunpack.c.l.s4 1966171168
        %v1315 = vunpack.c.0.s8 %v1314
        %v1316 = vlaneseq
        %v1317 = vshrl.u32 %v1316, 7
        %v1318 = vsub.s32 %v1315, %v1317
        %v1319 = vrot.slane %v1311, %v1318
        %v1321 = vunpack.c.l.s4 1966171168
        %v1322 = vunpack.c.0.s8 %v1321
        %v1323 = vlaneseq
        %v1324 = vshrl.u32 %v1323, 7
        %v1325 = vsub.s32 %v1322, %v1324
        %v1326 = vrot.slane %v1312, %v1325
        %v1327 = vcombine.low %v1319, %v1326
        %v1329 = vunpack.c.l.s4 1966171168
        %v1330 = vunpack.c.0.s8 %v1329
        %v1331 = vlaneseq
        %v1332 = vshrl.u32 %v1331, 7
        %v1333 = vsub.s32 %v1330, %v1332
        %v1334 = vrot.slane %v1327, %v1333
        %v1335 = vsel %vm735, %v1334, 0
        %1337 = vmatprep.subr.mxu0 %v711
        %1338 = vmatpush1.msra.mxu0 %v710
        %1339 = vmatprep.subr.mxu0 %v713
        %1340 = vmatpush1.msra.mxu0 %v712
        %1341 = vmatprep.subr.mxu0 %v715
        %1342 = vmatpush1.msra.mxu0 %v714
        %1343 = vmatprep.subr.mxu0 %v717
        %1344 = vmatpush1.msra.mxu0 %v716
        %1345 = vmatprep.subr.mxu0 %v719
        %1346 = vmatpush1.msra.mxu0 %v718
        %1347 = vmatprep.subr.mxu0 %v721
        %1348 = vmatpush1.msra.mxu0 %v720
        %1349 = vmatprep.subr.mxu0 %v723
        %1350 = vmatpush1.msra.mxu0 %v722
        %1351 = vmatprep.subr.mxu0 %v725
        %1352 = vmatpush1.msra.mxu0 %v724
        %1353 = vmatprep.subr.mxu0 0.0
        %1354 = vmatpush1.msra.mxu0 0.0
        %1355 = vmatprep.subr.mxu0 0.0
        %1356 = vmatpush1.msra.mxu0 0.0
        %1357 = vmatprep.subr.mxu0 0.0
        %1358 = vmatpush1.msra.mxu0 0.0
        %1359 = vmatprep.subr.mxu0 0.0
        %1360 = vmatpush1.msra.mxu0 0.0
        %1361 = vmatprep.subr.mxu0 0.0
        %1362 = vmatpush1.msra.mxu0 0.0
        %1363 = vmatprep.subr.mxu0 0.0
        %1364 = vmatpush1.msra.mxu0 0.0
        %1365 = vmatprep.subr.mxu0 0.0
        %1366 = vmatpush1.msra.mxu0 0.0
        %1367 = vmatprep.subr.mxu0 0.0
        %1368 = vmatpush1.msra.mxu0 0.0
        %1369 = vmatprep.subr.mxu0 0.0
        %1370 = vmatpush1.msra.mxu0 0.0
        %1371 = vmatprep.subr.mxu0 0.0
        %1372 = vmatpush1.msra.mxu0 0.0
        %1373 = vmatprep.subr.mxu0 0.0
        %1374 = vmatpush1.msra.mxu0 0.0
        %1375 = vmatprep.subr.mxu0 0.0
        %1376 = vmatpush1.msra.mxu0 0.0
        %1377 = vmatprep.subr.mxu0 0.0
        %1378 = vmatpush1.msra.mxu0 0.0
        %1379 = vmatprep.subr.mxu0 0.0
        %1380 = vmatpush1.msra.mxu0 0.0
        %1381 = vmatprep.subr.mxu0 0.0
        %1382 = vmatpush1.msra.mxu0 0.0
        %1383 = vmatprep.subr.mxu0 0.0
        %1384 = vmatpush1.msra.mxu0 0.0
        %1385 = vmatprep.subr.mxu0 0.0
        %1386 = vmatpush1.msra.mxu0 0.0
        %1387 = vmatprep.subr.mxu0 0.0
        %1388 = vmatpush1.msra.mxu0 0.0
        %1389 = vmatprep.subr.mxu0 0.0
        %1390 = vmatpush1.msra.mxu0 0.0
        %1391 = vmatprep.subr.mxu0 0.0
        %1392 = vmatpush1.msra.mxu0 0.0
        %1393 = vmatprep.subr.mxu0 0.0
        %1394 = vmatpush1.msra.mxu0 0.0
        %1395 = vmatprep.subr.mxu0 0.0
        %1396 = vmatpush1.msra.mxu0 0.0
        %1397 = vmatprep.subr.mxu0 0.0
        %1398 = vmatpush1.msra.mxu0 0.0
        %1399 = vmatprep.subr.mxu0 0.0
        %1400 = vmatpush1.msra.mxu0 0.0
        %1401 = vmatprep.mubr.f32.mxu0 0.0
        %1402 = vmatmul.mubr.f32.gmra.mrb[0].mxu0 %v1335
        %v1403 = vpop.f32.mrb[0].mxu0
        %v1404 = vadd.f32 0.0, %v1403
        %v1405 = vpop.f32.mrb[0].mxu0
        %v1406 = vadd.f32 0.0, %v1405
        %1407 = vdwg.mxu0
        %v1410 = vcombine.low %v1404, %v1406
        %v1412 = vunpack.c.l.s4 1966171168
        %v1413 = vunpack.c.0.s8 %v1412
        %v1414 = vlaneseq
        %v1415 = vshrl.u32 %v1414, 7
        %v1416 = vsub.s32 %v1413, %v1415
        %v1417 = vrot.slane %v1410, %v1416
        %v1418 = vcombine.high %v1417, %v1417
        %v1420 = vunpack.c.l.s4 1966171168
        %v1421 = vunpack.c.0.s8 %v1420
        %v1422 = vlaneseq
        %v1423 = vshrl.u32 %v1422, 7
        %v1424 = vsub.s32 %v1421, %v1423
        %v1425 = vrot.slane %v1417, %v1424
        %v1427 = vunpack.c.l.s4 1966171168
        %v1428 = vunpack.c.0.s8 %v1427
        %v1429 = vlaneseq
        %v1430 = vshrl.u32 %v1429, 7
        %v1431 = vsub.s32 %v1428, %v1430
        %v1432 = vrot.slane %v1418, %v1431
        %v1433 = vcombine.high %v1425, %v1425
        %v1434 = vcombine.high %v1432, %v1432
        %v1439 = vadd.f32 %v1300, %v1425
        %v1440 = vadd.f32 %v1302, %v1432
        %v1441 = vadd.f32 %v1304, %v1433
        %v1442 = vadd.f32 %v1306, %v1434
        %v1443 = vxor.u32 %v1439, 2147483648
        %v1444 = vxor.u32 %v1440, 2147483648
        %v1445 = vxor.u32 %v1441, 2147483648
        %v1446 = vxor.u32 %v1442, 2147483648
        %v1447 = vmul.f32 %v1443, 1.442695
        %v1448 = vpow.pop %v1447
        %v1449 = vmul.f32 %v1444, 1.442695
        %v1450 = vpow.pop %v1449
        %v1451 = vmul.f32 %v1445, 1.442695
        %v1452 = vpow.pop %v1451
        %v1453 = vmul.f32 %v1446, 1.442695
        %v1454 = vpow.pop %v1453
        %v1455 = vadd.f32 %v1448, 1.0
        %v1456 = vadd.f32 %v1450, 1.0
        %v1457 = vadd.f32 %v1452, 1.0
        %v1458 = vadd.f32 %v1454, 1.0
        %v1459 = vrcp.pop %v1455
        %v1460 = vmul.f32 1.0, %v1459
        %v1461 = vrcp.pop %v1456
        %v1462 = vmul.f32 1.0, %v1461
        %v1463 = vrcp.pop %v1457
        %v1464 = vmul.f32 1.0, %v1463
        %v1465 = vrcp.pop %v1458
        %v1466 = vmul.f32 1.0, %v1465
        %v1471 = vrot.slane %v1439, 1
        %v1472 = vrot.slane %v1440, 1
        %v1473 = vrot.slane %v1441, 1
        %v1474 = vrot.slane %v1442, 1
        %v1479 = vtanh.pop %v1471
        %v1480 = vtanh.pop %v1472
        %v1481 = vtanh.pop %v1473
        %v1482 = vtanh.pop %v1474
        %1483 = vrot.lane.b32.xlu0 %v1439, 64
        %v1484 = vpop.permute.xlu0 %1483
        %1485 = vrot.lane.b32.xlu0 %v1440, 64
        %v1486 = vpop.permute.xlu0 %1485
        %1487 = vrot.lane.b32.xlu0 %v1441, 64
        %v1488 = vpop.permute.xlu0 %1487
        %1489 = vrot.lane.b32.xlu0 %v1442, 64
        %v1490 = vpop.permute.xlu0 %1489
        %v1491 = vrot.slane %v1484, 1
        %v1492 = vrot.slane %v1486, 1
        %v1493 = vrot.slane %v1488, 1
        %v1494 = vrot.slane %v1490, 1
        %v1499 = vxor.u32 %v1491, 2147483648
        %v1500 = vxor.u32 %v1492, 2147483648
        %v1501 = vxor.u32 %v1493, 2147483648
        %v1502 = vxor.u32 %v1494, 2147483648
        %v1503 = vmul.f32 %v1499, 1.442695
        %v1504 = vpow.pop %v1503
        %v1505 = vmul.f32 %v1500, 1.442695
        %v1506 = vpow.pop %v1505
        %v1507 = vmul.f32 %v1501, 1.442695
        %v1508 = vpow.pop %v1507
        %v1509 = vmul.f32 %v1502, 1.442695
        %v1510 = vpow.pop %v1509
        %v1511 = vadd.f32 %v1504, 1.0
        %v1512 = vadd.f32 %v1506, 1.0
        %v1513 = vadd.f32 %v1508, 1.0
        %v1514 = vadd.f32 %v1510, 1.0
        %v1515 = vrcp.pop %v1511
        %v1516 = vmul.f32 1.0, %v1515
        %v1517 = vrcp.pop %v1512
        %v1518 = vmul.f32 1.0, %v1517
        %v1519 = vrcp.pop %v1513
        %v1520 = vmul.f32 1.0, %v1519
        %v1521 = vrcp.pop %v1514
        %v1522 = vmul.f32 1.0, %v1521
        %v1523 = vmul.f32 %v1460, %v1267
        %v1524 = vmul.f32 %v1462, %v1268
        %v1525 = vmul.f32 %v1464, %v1269
        %v1526 = vmul.f32 %v1466, %v1270
        %v1527 = vmul.f32 %v1460, %v1479
        %v1528 = vmul.f32 %v1462, %v1480
        %v1529 = vmul.f32 %v1464, %v1481
        %v1530 = vmul.f32 %v1466, %v1482
        %1535 = vrot.lane.b32.xlu0 %v1527, 64
        %v1536 = vpop.permute.xlu0 %1535
        %1537 = vrot.lane.b32.xlu0 %v1528, 64
        %v1538 = vpop.permute.xlu0 %1537
        %1539 = vrot.lane.b32.xlu0 %v1529, 64
        %v1540 = vpop.permute.xlu0 %1539
        %1541 = vrot.lane.b32.xlu0 %v1530, 64
        %v1542 = vpop.permute.xlu0 %1541
        %v1547 = vadd.f32 %v1523, %v1536
        %v1548 = vadd.f32 %v1524, %v1538
        %v1549 = vadd.f32 %v1525, %v1540
        %v1550 = vadd.f32 %v1526, %v1542
        %v1551 = vtanh.pop %v1547
        %v1552 = vtanh.pop %v1548
        %v1553 = vtanh.pop %v1549
        %v1554 = vtanh.pop %v1550
        %1559 = vrot.lane.b32.xlu0 %v1551, 64
        %v1560 = vpop.permute.xlu0 %1559
        %1561 = vrot.lane.b32.xlu0 %v1552, 64
        %v1562 = vpop.permute.xlu0 %1561
        %1563 = vrot.lane.b32.xlu0 %v1553, 64
        %v1564 = vpop.permute.xlu0 %1563
        %1565 = vrot.lane.b32.xlu0 %v1554, 64
        %v1566 = vpop.permute.xlu0 %1565
        %v1571 = vmul.f32 %v1516, %v1560
        %v1572 = vmul.f32 %v1518, %v1562
        %v1573 = vmul.f32 %v1520, %v1564
        %v1574 = vmul.f32 %v1522, %v1566
        %1575 = vst.msk [vmem:[#allocation5 + $0x2] sm:$0x1] %vm1014, %v1571
        %1576 = vst.msk [vmem:[#allocation5 + $0x12] sm:$0x1] %vm1014, %v1572
        %1577 = vst.msk [vmem:[#allocation5 + $0x22] sm:$0x1] %vm1014, %v1573
        %1578 = vst.msk [vmem:[#allocation5 + $0x32] sm:$0x1] %vm1014, %v1574
        %s1579 = scalar_lea.vmem [#allocation4], 3
        %v1580 = vld [vmem:[%s1579] ss:$8 sm:$0x3]
        %s1581 = scalar_lea.vmem [#allocation4], 35
        %v1582 = vld [vmem:[%s1581] ss:$8 sm:$0x3]
        %s1583 = scalar_lea.vmem [#allocation4], 67
        %v1584 = vld [vmem:[%s1583] ss:$8 sm:$0x3]
        %s1585 = scalar_lea.vmem [#allocation4], 99
        %v1586 = vld [vmem:[%s1585] ss:$8 sm:$0x3]
        %v1591 = vcombine.low %v1571, %v1572
        %v1592 = vcombine.low %v1573, %v1574
        %v1594 = vunpack.c.l.s4 1966171168
        %v1595 = vunpack.c.0.s8 %v1594
        %v1596 = vlaneseq
        %v1597 = vshrl.u32 %v1596, 7
        %v1598 = vsub.s32 %v1595, %v1597
        %v1599 = vrot.slane %v1591, %v1598
        %v1601 = vunpack.c.l.s4 1966171168
        %v1602 = vunpack.c.0.s8 %v1601
        %v1603 = vlaneseq
        %v1604 = vshrl.u32 %v1603, 7
        %v1605 = vsub.s32 %v1602, %v1604
        %v1606 = vrot.slane %v1592, %v1605
        %v1607 = vcombine.low %v1599, %v1606
        %v1609 = vunpack.c.l.s4 1966171168
        %v1610 = vunpack.c.0.s8 %v1609
        %v1611 = vlaneseq
        %v1612 = vshrl.u32 %v1611, 7
        %v1613 = vsub.s32 %v1610, %v1612
        %v1614 = vrot.slane %v1607, %v1613
        %v1615 = vsel %vm735, %v1614, 0
        %1617 = vmatprep.subr.mxu0 %v711
        %1618 = vmatpush1.msra.mxu0 %v710
        %1619 = vmatprep.subr.mxu0 %v713
        %1620 = vmatpush1.msra.mxu0 %v712
        %1621 = vmatprep.subr.mxu0 %v715
        %1622 = vmatpush1.msra.mxu0 %v714
        %1623 = vmatprep.subr.mxu0 %v717
        %1624 = vmatpush1.msra.mxu0 %v716
        %1625 = vmatprep.subr.mxu0 %v719
        %1626 = vmatpush1.msra.mxu0 %v718
        %1627 = vmatprep.subr.mxu0 %v721
        %1628 = vmatpush1.msra.mxu0 %v720
        %1629 = vmatprep.subr.mxu0 %v723
        %1630 = vmatpush1.msra.mxu0 %v722
        %1631 = vmatprep.subr.mxu0 %v725
        %1632 = vmatpush1.msra.mxu0 %v724
        %1633 = vmatprep.subr.mxu0 0.0
        %1634 = vmatpush1.msra.mxu0 0.0
        %1635 = vmatprep.subr.mxu0 0.0
        %1636 = vmatpush1.msra.mxu0 0.0
        %1637 = vmatprep.subr.mxu0 0.0
        %1638 = vmatpush1.msra.mxu0 0.0
        %1639 = vmatprep.subr.mxu0 0.0
        %1640 = vmatpush1.msra.mxu0 0.0
        %1641 = vmatprep.subr.mxu0 0.0
        %1642 = vmatpush1.msra.mxu0 0.0
        %1643 = vmatprep.subr.mxu0 0.0
        %1644 = vmatpush1.msra.mxu0 0.0
        %1645 = vmatprep.subr.mxu0 0.0
        %1646 = vmatpush1.msra.mxu0 0.0
        %1647 = vmatprep.subr.mxu0 0.0
        %1648 = vmatpush1.msra.mxu0 0.0
        %1649 = vmatprep.subr.mxu0 0.0
        %1650 = vmatpush1.msra.mxu0 0.0
        %1651 = vmatprep.subr.mxu0 0.0
        %1652 = vmatpush1.msra.mxu0 0.0
        %1653 = vmatprep.subr.mxu0 0.0
        %1654 = vmatpush1.msra.mxu0 0.0
        %1655 = vmatprep.subr.mxu0 0.0
        %1656 = vmatpush1.msra.mxu0 0.0
        %1657 = vmatprep.subr.mxu0 0.0
        %1658 = vmatpush1.msra.mxu0 0.0
        %1659 = vmatprep.subr.mxu0 0.0
        %1660 = vmatpush1.msra.mxu0 0.0
        %1661 = vmatprep.subr.mxu0 0.0
        %1662 = vmatpush1.msra.mxu0 0.0
        %1663 = vmatprep.subr.mxu0 0.0
        %1664 = vmatpush1.msra.mxu0 0.0
        %1665 = vmatprep.subr.mxu0 0.0
        %1666 = vmatpush1.msra.mxu0 0.0
        %1667 = vmatprep.subr.mxu0 0.0
        %1668 = vmatpush1.msra.mxu0 0.0
        %1669 = vmatprep.subr.mxu0 0.0
        %1670 = vmatpush1.msra.mxu0 0.0
        %1671 = vmatprep.subr.mxu0 0.0
        %1672 = vmatpush1.msra.mxu0 0.0
        %1673 = vmatprep.subr.mxu0 0.0
        %1674 = vmatpush1.msra.mxu0 0.0
        %1675 = vmatprep.subr.mxu0 0.0
        %1676 = vmatpush1.msra.mxu0 0.0
        %1677 = vmatprep.subr.mxu0 0.0
        %1678 = vmatpush1.msra.mxu0 0.0
        %1679 = vmatprep.subr.mxu0 0.0
        %1680 = vmatpush1.msra.mxu0 0.0
        %1681 = vmatprep.mubr.f32.mxu0 0.0
        %1682 = vmatmul.mubr.f32.gmra.mrb[0].mxu0 %v1615
        %v1683 = vpop.f32.mrb[0].mxu0
        %v1684 = vadd.f32 0.0, %v1683
        %v1685 = vpop.f32.mrb[0].mxu0
        %v1686 = vadd.f32 0.0, %v1685
        %1687 = vdwg.mxu0
        %v1690 = vcombine.low %v1684, %v1686
        %v1692 = vunpack.c.l.s4 1966171168
        %v1693 = vunpack.c.0.s8 %v1692
        %v1694 = vlaneseq
        %v1695 = vshrl.u32 %v1694, 7
        %v1696 = vsub.s32 %v1693, %v1695
        %v1697 = vrot.slane %v1690, %v1696
        %v1698 = vcombine.high %v1697, %v1697
        %v1700 = vunpack.c.l.s4 1966171168
        %v1701 = vunpack.c.0.s8 %v1700
        %v1702 = vlaneseq
        %v1703 = vshrl.u32 %v1702, 7
        %v1704 = vsub.s32 %v1701, %v1703
        %v1705 = vrot.slane %v1697, %v1704
        %v1707 = vunpack.c.l.s4 1966171168
        %v1708 = vunpack.c.0.s8 %v1707
        %v1709 = vlaneseq
        %v1710 = vshrl.u32 %v1709, 7
        %v1711 = vsub.s32 %v1708, %v1710
        %v1712 = vrot.slane %v1698, %v1711
        %v1713 = vcombine.high %v1705, %v1705
        %v1714 = vcombine.high %v1712, %v1712
        %v1719 = vadd.f32 %v1580, %v1705
        %v1720 = vadd.f32 %v1582, %v1712
        %v1721 = vadd.f32 %v1584, %v1713
        %v1722 = vadd.f32 %v1586, %v1714
        %v1723 = vxor.u32 %v1719, 2147483648
        %v1724 = vxor.u32 %v1720, 2147483648
        %v1725 = vxor.u32 %v1721, 2147483648
        %v1726 = vxor.u32 %v1722, 2147483648
        %v1727 = vmul.f32 %v1723, 1.442695
        %v1728 = vpow.pop %v1727
        %v1729 = vmul.f32 %v1724, 1.442695
        %v1730 = vpow.pop %v1729
        %v1731 = vmul.f32 %v1725, 1.442695
        %v1732 = vpow.pop %v1731
        %v1733 = vmul.f32 %v1726, 1.442695
        %v1734 = vpow.pop %v1733
        %v1735 = vadd.f32 %v1728, 1.0
        %v1736 = vadd.f32 %v1730, 1.0
        %v1737 = vadd.f32 %v1732, 1.0
        %v1738 = vadd.f32 %v1734, 1.0
        %v1739 = vrcp.pop %v1735
        %v1740 = vmul.f32 1.0, %v1739
        %v1741 = vrcp.pop %v1736
        %v1742 = vmul.f32 1.0, %v1741
        %v1743 = vrcp.pop %v1737
        %v1744 = vmul.f32 1.0, %v1743
        %v1745 = vrcp.pop %v1738
        %v1746 = vmul.f32 1.0, %v1745
        %v1751 = vrot.slane %v1719, 1
        %v1752 = vrot.slane %v1720, 1
        %v1753 = vrot.slane %v1721, 1
        %v1754 = vrot.slane %v1722, 1
        %v1759 = vtanh.pop %v1751
        %v1760 = vtanh.pop %v1752
        %v1761 = vtanh.pop %v1753
        %v1762 = vtanh.pop %v1754
        %1763 = vrot.lane.b32.xlu0 %v1719, 64
        %v1764 = vpop.permute.xlu0 %1763
        %1765 = vrot.lane.b32.xlu0 %v1720, 64
        %v1766 = vpop.permute.xlu0 %1765
        %1767 = vrot.lane.b32.xlu0 %v1721, 64
        %v1768 = vpop.permute.xlu0 %1767
        %1769 = vrot.lane.b32.xlu0 %v1722, 64
        %v1770 = vpop.permute.xlu0 %1769
        %v1771 = vrot.slane %v1764, 1
        %v1772 = vrot.slane %v1766, 1
        %v1773 = vrot.slane %v1768, 1
        %v1774 = vrot.slane %v1770, 1
        %v1779 = vxor.u32 %v1771, 2147483648
        %v1780 = vxor.u32 %v1772, 2147483648
        %v1781 = vxor.u32 %v1773, 2147483648
        %v1782 = vxor.u32 %v1774, 2147483648
        %v1783 = vmul.f32 %v1779, 1.442695
        %v1784 = vpow.pop %v1783
        %v1785 = vmul.f32 %v1780, 1.442695
        %v1786 = vpow.pop %v1785
        %v1787 = vmul.f32 %v1781, 1.442695
        %v1788 = vpow.pop %v1787
        %v1789 = vmul.f32 %v1782, 1.442695
        %v1790 = vpow.pop %v1789
        %v1791 = vadd.f32 %v1784, 1.0
        %v1792 = vadd.f32 %v1786, 1.0
        %v1793 = vadd.f32 %v1788, 1.0
        %v1794 = vadd.f32 %v1790, 1.0
        %v1795 = vrcp.pop %v1791
        %v1796 = vmul.f32 1.0, %v1795
        %v1797 = vrcp.pop %v1792
        %v1798 = vmul.f32 1.0, %v1797
        %v1799 = vrcp.pop %v1793
        %v1800 = vmul.f32 1.0, %v1799
        %v1801 = vrcp.pop %v1794
        %v1802 = vmul.f32 1.0, %v1801
        %v1803 = vmul.f32 %v1740, %v1547
        %v1804 = vmul.f32 %v1742, %v1548
        %v1805 = vmul.f32 %v1744, %v1549
        %v1806 = vmul.f32 %v1746, %v1550
        %v1807 = vmul.f32 %v1740, %v1759
        %v1808 = vmul.f32 %v1742, %v1760
        %v1809 = vmul.f32 %v1744, %v1761
        %v1810 = vmul.f32 %v1746, %v1762
        %1815 = vrot.lane.b32.xlu0 %v1807, 64
        %v1816 = vpop.permute.xlu0 %1815
        %1817 = vrot.lane.b32.xlu0 %v1808, 64
        %v1818 = vpop.permute.xlu0 %1817
        %1819 = vrot.lane.b32.xlu0 %v1809, 64
        %v1820 = vpop.permute.xlu0 %1819
        %1821 = vrot.lane.b32.xlu0 %v1810, 64
        %v1822 = vpop.permute.xlu0 %1821
        %v1827 = vadd.f32 %v1803, %v1816
        %v1828 = vadd.f32 %v1804, %v1818
        %v1829 = vadd.f32 %v1805, %v1820
        %v1830 = vadd.f32 %v1806, %v1822
        %v1831 = vtanh.pop %v1827
        %v1832 = vtanh.pop %v1828
        %v1833 = vtanh.pop %v1829
        %v1834 = vtanh.pop %v1830
        %1839 = vrot.lane.b32.xlu0 %v1831, 64
        %v1840 = vpop.permute.xlu0 %1839
        %1841 = vrot.lane.b32.xlu0 %v1832, 64
        %v1842 = vpop.permute.xlu0 %1841
        %1843 = vrot.lane.b32.xlu0 %v1833, 64
        %v1844 = vpop.permute.xlu0 %1843
        %1845 = vrot.lane.b32.xlu0 %v1834, 64
        %v1846 = vpop.permute.xlu0 %1845
        %v1851 = vmul.f32 %v1796, %v1840
        %v1852 = vmul.f32 %v1798, %v1842
        %v1853 = vmul.f32 %v1800, %v1844
        %v1854 = vmul.f32 %v1802, %v1846
        %1855 = vst.msk [vmem:[#allocation5 + $0x3] sm:$0x1] %vm1014, %v1851
        %1856 = vst.msk [vmem:[#allocation5 + $0x13] sm:$0x1] %vm1014, %v1852
        %1857 = vst.msk [vmem:[#allocation5 + $0x23] sm:$0x1] %vm1014, %v1853
        %1858 = vst.msk [vmem:[#allocation5 + $0x33] sm:$0x1] %vm1014, %v1854
        %s1859 = scalar_lea.vmem [#allocation4], 4
        %v1860 = vld [vmem:[%s1859] ss:$8 sm:$0x3]
        %s1861 = scalar_lea.vmem [#allocation4], 36
        %v1862 = vld [vmem:[%s1861] ss:$8 sm:$0x3]
        %s1863 = scalar_lea.vmem [#allocation4], 68
        %v1864 = vld [vmem:[%s1863] ss:$8 sm:$0x3]
        %s1865 = scalar_lea.vmem [#allocation4], 100
        %v1866 = vld [vmem:[%s1865] ss:$8 sm:$0x3]
        %v1871 = vcombine.low %v1851, %v1852
        %v1872 = vcombine.low %v1853, %v1854
        %v1874 = vunpack.c.l.s4 1966171168
        %v1875 = vunpack.c.0.s8 %v1874
        %v1876 = vlaneseq
        %v1877 = vshrl.u32 %v1876, 7
        %v1878 = vsub.s32 %v1875, %v1877
        %v1879 = vrot.slane %v1871, %v1878
        %v1881 = vunpack.c.l.s4 1966171168
        %v1882 = vunpack.c.0.s8 %v1881
        %v1883 = vlaneseq
        %v1884 = vshrl.u32 %v1883, 7
        %v1885 = vsub.s32 %v1882, %v1884
        %v1886 = vrot.slane %v1872, %v1885
        %v1887 = vcombine.low %v1879, %v1886
        %v1889 = vunpack.c.l.s4 1966171168
        %v1890 = vunpack.c.0.s8 %v1889
        %v1891 = vlaneseq
        %v1892 = vshrl.u32 %v1891, 7
        %v1893 = vsub.s32 %v1890, %v1892
        %v1894 = vrot.slane %v1887, %v1893
        %v1895 = vsel %vm735, %v1894, 0
        %1897 = vmatprep.subr.mxu0 %v711
        %1898 = vmatpush1.msra.mxu0 %v710
        %1899 = vmatprep.subr.mxu0 %v713
        %1900 = vmatpush1.msra.mxu0 %v712
        %1901 = vmatprep.subr.mxu0 %v715
        %1902 = vmatpush1.msra.mxu0 %v714
        %1903 = vmatprep.subr.mxu0 %v717
        %1904 = vmatpush1.msra.mxu0 %v716
        %1905 = vmatprep.subr.mxu0 %v719
        %1906 = vmatpush1.msra.mxu0 %v718
        %1907 = vmatprep.subr.mxu0 %v721
        %1908 = vmatpush1.msra.mxu0 %v720
        %1909 = vmatprep.subr.mxu0 %v723
        %1910 = vmatpush1.msra.mxu0 %v722
        %1911 = vmatprep.subr.mxu0 %v725
        %1912 = vmatpush1.msra.mxu0 %v724
        %1913 = vmatprep.subr.mxu0 0.0
        %1914 = vmatpush1.msra.mxu0 0.0
        %1915 = vmatprep.subr.mxu0 0.0
        %1916 = vmatpush1.msra.mxu0 0.0
        %1917 = vmatprep.subr.mxu0 0.0
        %1918 = vmatpush1.msra.mxu0 0.0
        %1919 = vmatprep.subr.mxu0 0.0
        %1920 = vmatpush1.msra.mxu0 0.0
        %1921 = vmatprep.subr.mxu0 0.0
        %1922 = vmatpush1.msra.mxu0 0.0
        %1923 = vmatprep.subr.mxu0 0.0
        %1924 = vmatpush1.msra.mxu0 0.0
        %1925 = vmatprep.subr.mxu0 0.0
        %1926 = vmatpush1.msra.mxu0 0.0
        %1927 = vmatprep.subr.mxu0 0.0
        %1928 = vmatpush1.msra.mxu0 0.0
        %1929 = vmatprep.subr.mxu0 0.0
        %1930 = vmatpush1.msra.mxu0 0.0
        %1931 = vmatprep.subr.mxu0 0.0
        %1932 = vmatpush1.msra.mxu0 0.0
        %1933 = vmatprep.subr.mxu0 0.0
        %1934 = vmatpush1.msra.mxu0 0.0
        %1935 = vmatprep.subr.mxu0 0.0
        %1936 = vmatpush1.msra.mxu0 0.0
        %1937 = vmatprep.subr.mxu0 0.0
        %1938 = vmatpush1.msra.mxu0 0.0
        %1939 = vmatprep.subr.mxu0 0.0
        %1940 = vmatpush1.msra.mxu0 0.0
        %1941 = vmatprep.subr.mxu0 0.0
        %1942 = vmatpush1.msra.mxu0 0.0
        %1943 = vmatprep.subr.mxu0 0.0
        %1944 = vmatpush1.msra.mxu0 0.0
        %1945 = vmatprep.subr.mxu0 0.0
        %1946 = vmatpush1.msra.mxu0 0.0
        %1947 = vmatprep.subr.mxu0 0.0
        %1948 = vmatpush1.msra.mxu0 0.0
        %1949 = vmatprep.subr.mxu0 0.0
        %1950 = vmatpush1.msra.mxu0 0.0
        %1951 = vmatprep.subr.mxu0 0.0
        %1952 = vmatpush1.msra.mxu0 0.0
        %1953 = vmatprep.subr.mxu0 0.0
        %1954 = vmatpush1.msra.mxu0 0.0
        %1955 = vmatprep.subr.mxu0 0.0
        %1956 = vmatpush1.msra.mxu0 0.0
        %1957 = vmatprep.subr.mxu0 0.0
        %1958 = vmatpush1.msra.mxu0 0.0
        %1959 = vmatprep.subr.mxu0 0.0
        %1960 = vmatpush1.msra.mxu0 0.0
        %1961 = vmatprep.mubr.f32.mxu0 0.0
        %1962 = vmatmul.mubr.f32.gmra.mrb[0].mxu0 %v1895
        %v1963 = vpop.f32.mrb[0].mxu0
        %v1964 = vadd.f32 0.0, %v1963
        %v1965 = vpop.f32.mrb[0].mxu0
        %v1966 = vadd.f32 0.0, %v1965
        %1967 = vdwg.mxu0
        %v1970 = vcombine.low %v1964, %v1966
        %v1972 = vunpack.c.l.s4 1966171168
        %v1973 = vunpack.c.0.s8 %v1972
        %v1974 = vlaneseq
        %v1975 = vshrl.u32 %v1974, 7
        %v1976 = vsub.s32 %v1973, %v1975
        %v1977 = vrot.slane %v1970, %v1976
        %v1978 = vcombine.high %v1977, %v1977
        %v1980 = vunpack.c.l.s4 1966171168
        %v1981 = vunpack.c.0.s8 %v1980
        %v1982 = vlaneseq
        %v1983 = vshrl.u32 %v1982, 7
        %v1984 = vsub.s32 %v1981, %v1983
        %v1985 = vrot.slane %v1977, %v1984
        %v1987 = vunpack.c.l.s4 1966171168
        %v1988 = vunpack.c.0.s8 %v1987
        %v1989 = vlaneseq
        %v1990 = vshrl.u32 %v1989, 7
        %v1991 = vsub.s32 %v1988, %v1990
        %v1992 = vrot.slane %v1978, %v1991
        %v1993 = vcombine.high %v1985, %v1985
        %v1994 = vcombine.high %v1992, %v1992
        %v1999 = vadd.f32 %v1860, %v1985
        %v2000 = vadd.f32 %v1862, %v1992
        %v2001 = vadd.f32 %v1864, %v1993
        %v2002 = vadd.f32 %v1866, %v1994
        %v2003 = vxor.u32 %v1999, 2147483648
        %v2004 = vxor.u32 %v2000, 2147483648
        %v2005 = vxor.u32 %v2001, 2147483648
        %v2006 = vxor.u32 %v2002, 2147483648
        %v2007 = vmul.f32 %v2003, 1.442695
        %v2008 = vpow.pop %v2007
        %v2009 = vmul.f32 %v2004, 1.442695
        %v2010 = vpow.pop %v2009
        %v2011 = vmul.f32 %v2005, 1.442695
        %v2012 = vpow.pop %v2011
        %v2013 = vmul.f32 %v2006, 1.442695
        %v2014 = vpow.pop %v2013
        %v2015 = vadd.f32 %v2008, 1.0
        %v2016 = vadd.f32 %v2010, 1.0
        %v2017 = vadd.f32 %v2012, 1.0
        %v2018 = vadd.f32 %v2014, 1.0
        %v2019 = vrcp.pop %v2015
        %v2020 = vmul.f32 1.0, %v2019
        %v2021 = vrcp.pop %v2016
        %v2022 = vmul.f32 1.0, %v2021
        %v2023 = vrcp.pop %v2017
        %v2024 = vmul.f32 1.0, %v2023
        %v2025 = vrcp.pop %v2018
        %v2026 = vmul.f32 1.0, %v2025
        %v2031 = vrot.slane %v1999, 1
        %v2032 = vrot.slane %v2000, 1
        %v2033 = vrot.slane %v2001, 1
        %v2034 = vrot.slane %v2002, 1
        %v2039 = vtanh.pop %v2031
        %v2040 = vtanh.pop %v2032
        %v2041 = vtanh.pop %v2033
        %v2042 = vtanh.pop %v2034
        %2043 = vrot.lane.b32.xlu0 %v1999, 64
        %v2044 = vpop.permute.xlu0 %2043
        %2045 = vrot.lane.b32.xlu0 %v2000, 64
        %v2046 = vpop.permute.xlu0 %2045
        %2047 = vrot.lane.b32.xlu0 %v2001, 64
        %v2048 = vpop.permute.xlu0 %2047
        %2049 = vrot.lane.b32.xlu0 %v2002, 64
        %v2050 = vpop.permute.xlu0 %2049
        %v2051 = vrot.slane %v2044, 1
        %v2052 = vrot.slane %v2046, 1
        %v2053 = vrot.slane %v2048, 1
        %v2054 = vrot.slane %v2050, 1
        %v2059 = vxor.u32 %v2051, 2147483648
        %v2060 = vxor.u32 %v2052, 2147483648
        %v2061 = vxor.u32 %v2053, 2147483648
        %v2062 = vxor.u32 %v2054, 2147483648
        %v2063 = vmul.f32 %v2059, 1.442695
        %v2064 = vpow.pop %v2063
        %v2065 = vmul.f32 %v2060, 1.442695
        %v2066 = vpow.pop %v2065
        %v2067 = vmul.f32 %v2061, 1.442695
        %v2068 = vpow.pop %v2067
        %v2069 = vmul.f32 %v2062, 1.442695
        %v2070 = vpow.pop %v2069
        %v2071 = vadd.f32 %v2064, 1.0
        %v2072 = vadd.f32 %v2066, 1.0
        %v2073 = vadd.f32 %v2068, 1.0
        %v2074 = vadd.f32 %v2070, 1.0
        %v2075 = vrcp.pop %v2071
        %v2076 = vmul.f32 1.0, %v2075
        %v2077 = vrcp.pop %v2072
        %v2078 = vmul.f32 1.0, %v2077
        %v2079 = vrcp.pop %v2073
        %v2080 = vmul.f32 1.0, %v2079
        %v2081 = vrcp.pop %v2074
        %v2082 = vmul.f32 1.0, %v2081
        %v2083 = vmul.f32 %v2020, %v1827
        %v2084 = vmul.f32 %v2022, %v1828
        %v2085 = vmul.f32 %v2024, %v1829
        %v2086 = vmul.f32 %v2026, %v1830
        %v2087 = vmul.f32 %v2020, %v2039
        %v2088 = vmul.f32 %v2022, %v2040
        %v2089 = vmul.f32 %v2024, %v2041
        %v2090 = vmul.f32 %v2026, %v2042
        %2095 = vrot.lane.b32.xlu0 %v2087, 64
        %v2096 = vpop.permute.xlu0 %2095
        %2097 = vrot.lane.b32.xlu0 %v2088, 64
        %v2098 = vpop.permute.xlu0 %2097
        %2099 = vrot.lane.b32.xlu0 %v2089, 64
        %v2100 = vpop.permute.xlu0 %2099
        %2101 = vrot.lane.b32.xlu0 %v2090, 64
        %v2102 = vpop.permute.xlu0 %2101
        %v2107 = vadd.f32 %v2083, %v2096
        %v2108 = vadd.f32 %v2084, %v2098
        %v2109 = vadd.f32 %v2085, %v2100
        %v2110 = vadd.f32 %v2086, %v2102
        %v2111 = vtanh.pop %v2107
        %v2112 = vtanh.pop %v2108
        %v2113 = vtanh.pop %v2109
        %v2114 = vtanh.pop %v2110
        %2119 = vrot.lane.b32.xlu0 %v2111, 64
        %v2120 = vpop.permute.xlu0 %2119
        %2121 = vrot.lane.b32.xlu0 %v2112, 64
        %v2122 = vpop.permute.xlu0 %2121
        %2123 = vrot.lane.b32.xlu0 %v2113, 64
        %v2124 = vpop.permute.xlu0 %2123
        %2125 = vrot.lane.b32.xlu0 %v2114, 64
        %v2126 = vpop.permute.xlu0 %2125
        %v2131 = vmul.f32 %v2076, %v2120
        %v2132 = vmul.f32 %v2078, %v2122
        %v2133 = vmul.f32 %v2080, %v2124
        %v2134 = vmul.f32 %v2082, %v2126
        %2135 = vst.msk [vmem:[#allocation5 + $0x4] sm:$0x1] %vm1014, %v2131
        %2136 = vst.msk [vmem:[#allocation5 + $0x14] sm:$0x1] %vm1014, %v2132
        %2137 = vst.msk [vmem:[#allocation5 + $0x24] sm:$0x1] %vm1014, %v2133
        %2138 = vst.msk [vmem:[#allocation5 + $0x34] sm:$0x1] %vm1014, %v2134
        %s2139 = scalar_lea.vmem [#allocation4], 5
        %v2140 = vld [vmem:[%s2139] ss:$8 sm:$0x3]
        %s2141 = scalar_lea.vmem [#allocation4], 37
        %v2142 = vld [vmem:[%s2141] ss:$8 sm:$0x3]
        %s2143 = scalar_lea.vmem [#allocation4], 69
        %v2144 = vld [vmem:[%s2143] ss:$8 sm:$0x3]
        %s2145 = scalar_lea.vmem [#allocation4], 101
        %v2146 = vld [vmem:[%s2145] ss:$8 sm:$0x3]
        %v2151 = vcombine.low %v2131, %v2132
        %v2152 = vcombine.low %v2133, %v2134
        %v2154 = vunpack.c.l.s4 1966171168
        %v2155 = vunpack.c.0.s8 %v2154
        %v2156 = vlaneseq
        %v2157 = vshrl.u32 %v2156, 7
        %v2158 = vsub.s32 %v2155, %v2157
        %v2159 = vrot.slane %v2151, %v2158
        %v2161 = vunpack.c.l.s4 1966171168
        %v2162 = vunpack.c.0.s8 %v2161
        %v2163 = vlaneseq
        %v2164 = vshrl.u32 %v2163, 7
        %v2165 = vsub.s32 %v2162, %v2164
        %v2166 = vrot.slane %v2152, %v2165
        %v2167 = vcombine.low %v2159, %v2166
        %v2169 = vunpack.c.l.s4 1966171168
        %v2170 = vunpack.c.0.s8 %v2169
        %v2171 = vlaneseq
        %v2172 = vshrl.u32 %v2171, 7
        %v2173 = vsub.s32 %v2170, %v2172
        %v2174 = vrot.slane %v2167, %v2173
        %v2175 = vsel %vm735, %v2174, 0
        %2177 = vmatprep.subr.mxu0 %v711
        %2178 = vmatpush1.msra.mxu0 %v710
        %2179 = vmatprep.subr.mxu0 %v713
        %2180 = vmatpush1.msra.mxu0 %v712
        %2181 = vmatprep.subr.mxu0 %v715
        %2182 = vmatpush1.msra.mxu0 %v714
        %2183 = vmatprep.subr.mxu0 %v717
        %2184 = vmatpush1.msra.mxu0 %v716
        %2185 = vmatprep.subr.mxu0 %v719
        %2186 = vmatpush1.msra.mxu0 %v718
        %2187 = vmatprep.subr.mxu0 %v721
        %2188 = vmatpush1.msra.mxu0 %v720
        %2189 = vmatprep.subr.mxu0 %v723
        %2190 = vmatpush1.msra.mxu0 %v722
        %2191 = vmatprep.subr.mxu0 %v725
        %2192 = vmatpush1.msra.mxu0 %v724
        %2193 = vmatprep.subr.mxu0 0.0
        %2194 = vmatpush1.msra.mxu0 0.0
        %2195 = vmatprep.subr.mxu0 0.0
        %2196 = vmatpush1.msra.mxu0 0.0
        %2197 = vmatprep.subr.mxu0 0.0
        %2198 = vmatpush1.msra.mxu0 0.0
        %2199 = vmatprep.subr.mxu0 0.0
        %2200 = vmatpush1.msra.mxu0 0.0
        %2201 = vmatprep.subr.mxu0 0.0
        %2202 = vmatpush1.msra.mxu0 0.0
        %2203 = vmatprep.subr.mxu0 0.0
        %2204 = vmatpush1.msra.mxu0 0.0
        %2205 = vmatprep.subr.mxu0 0.0
        %2206 = vmatpush1.msra.mxu0 0.0
        %2207 = vmatprep.subr.mxu0 0.0
        %2208 = vmatpush1.msra.mxu0 0.0
        %2209 = vmatprep.subr.mxu0 0.0
        %2210 = vmatpush1.msra.mxu0 0.0
        %2211 = vmatprep.subr.mxu0 0.0
        %2212 = vmatpush1.msra.mxu0 0.0
        %2213 = vmatprep.subr.mxu0 0.0
        %2214 = vmatpush1.msra.mxu0 0.0
        %2215 = vmatprep.subr.mxu0 0.0
        %2216 = vmatpush1.msra.mxu0 0.0
        %2217 = vmatprep.subr.mxu0 0.0
        %2218 = vmatpush1.msra.mxu0 0.0
        %2219 = vmatprep.subr.mxu0 0.0
        %2220 = vmatpush1.msra.mxu0 0.0
        %2221 = vmatprep.subr.mxu0 0.0
        %2222 = vmatpush1.msra.mxu0 0.0
        %2223 = vmatprep.subr.mxu0 0.0
        %2224 = vmatpush1.msra.mxu0 0.0
        %2225 = vmatprep.subr.mxu0 0.0
        %2226 = vmatpush1.msra.mxu0 0.0
        %2227 = vmatprep.subr.mxu0 0.0
        %2228 = vmatpush1.msra.mxu0 0.0
        %2229 = vmatprep.subr.mxu0 0.0
        %2230 = vmatpush1.msra.mxu0 0.0
        %2231 = vmatprep.subr.mxu0 0.0
        %2232 = vmatpush1.msra.mxu0 0.0
        %2233 = vmatprep.subr.mxu0 0.0
        %2234 = vmatpush1.msra.mxu0 0.0
        %2235 = vmatprep.subr.mxu0 0.0
        %2236 = vmatpush1.msra.mxu0 0.0
        %2237 = vmatprep.subr.mxu0 0.0
        %2238 = vmatpush1.msra.mxu0 0.0
        %2239 = vmatprep.subr.mxu0 0.0
        %2240 = vmatpush1.msra.mxu0 0.0
        %2241 = vmatprep.mubr.f32.mxu0 0.0
        %2242 = vmatmul.mubr.f32.gmra.mrb[0].mxu0 %v2175
        %v2243 = vpop.f32.mrb[0].mxu0
        %v2244 = vadd.f32 0.0, %v2243
        %v2245 = vpop.f32.mrb[0].mxu0
        %v2246 = vadd.f32 0.0, %v2245
        %2247 = vdwg.mxu0
        %v2250 = vcombine.low %v2244, %v2246
        %v2252 = vunpack.c.l.s4 1966171168
        %v2253 = vunpack.c.0.s8 %v2252
        %v2254 = vlaneseq
        %v2255 = vshrl.u32 %v2254, 7
        %v2256 = vsub.s32 %v2253, %v2255
        %v2257 = vrot.slane %v2250, %v2256
        %v2258 = vcombine.high %v2257, %v2257
        %v2260 = vunpack.c.l.s4 1966171168
        %v2261 = vunpack.c.0.s8 %v2260
        %v2262 = vlaneseq
        %v2263 = vshrl.u32 %v2262, 7
        %v2264 = vsub.s32 %v2261, %v2263
        %v2265 = vrot.slane %v2257, %v2264
        %v2267 = vunpack.c.l.s4 1966171168
        %v2268 = vunpack.c.0.s8 %v2267
        %v2269 = vlaneseq
        %v2270 = vshrl.u32 %v2269, 7
        %v2271 = vsub.s32 %v2268, %v2270
        %v2272 = vrot.slane %v2258, %v2271
        %v2273 = vcombine.high %v2265, %v2265
        %v2274 = vcombine.high %v2272, %v2272
        %v2279 = vadd.f32 %v2140, %v2265
        %v2280 = vadd.f32 %v2142, %v2272
        %v2281 = vadd.f32 %v2144, %v2273
        %v2282 = vadd.f32 %v2146, %v2274
        %v2283 = vxor.u32 %v2279, 2147483648
        %v2284 = vxor.u32 %v2280, 2147483648
        %v2285 = vxor.u32 %v2281, 2147483648
        %v2286 = vxor.u32 %v2282, 2147483648
        %v2287 = vmul.f32 %v2283, 1.442695
        %v2288 = vpow.pop %v2287
        %v2289 = vmul.f32 %v2284, 1.442695
        %v2290 = vpow.pop %v2289
        %v2291 = vmul.f32 %v2285, 1.442695
        %v2292 = vpow.pop %v2291
        %v2293 = vmul.f32 %v2286, 1.442695
        %v2294 = vpow.pop %v2293
        %v2295 = vadd.f32 %v2288, 1.0
        %v2296 = vadd.f32 %v2290, 1.0
        %v2297 = vadd.f32 %v2292, 1.0
        %v2298 = vadd.f32 %v2294, 1.0
        %v2299 = vrcp.pop %v2295
        %v2300 = vmul.f32 1.0, %v2299
        %v2301 = vrcp.pop %v2296
        %v2302 = vmul.f32 1.0, %v2301
        %v2303 = vrcp.pop %v2297
        %v2304 = vmul.f32 1.0, %v2303
        %v2305 = vrcp.pop %v2298
        %v2306 = vmul.f32 1.0, %v2305
        %v2311 = vrot.slane %v2279, 1
        %v2312 = vrot.slane %v2280, 1
        %v2313 = vrot.slane %v2281, 1
        %v2314 = vrot.slane %v2282, 1
        %v2319 = vtanh.pop %v2311
        %v2320 = vtanh.pop %v2312
        %v2321 = vtanh.pop %v2313
        %v2322 = vtanh.pop %v2314
        %2323 = vrot.lane.b32.xlu0 %v2279, 64
        %v2324 = vpop.permute.xlu0 %2323
        %2325 = vrot.lane.b32.xlu0 %v2280, 64
        %v2326 = vpop.permute.xlu0 %2325
        %2327 = vrot.lane.b32.xlu0 %v2281, 64
        %v2328 = vpop.permute.xlu0 %2327
        %2329 = vrot.lane.b32.xlu0 %v2282, 64
        %v2330 = vpop.permute.xlu0 %2329
        %v2331 = vrot.slane %v2324, 1
        %v2332 = vrot.slane %v2326, 1
        %v2333 = vrot.slane %v2328, 1
        %v2334 = vrot.slane %v2330, 1
        %v2339 = vxor.u32 %v2331, 2147483648
        %v2340 = vxor.u32 %v2332, 2147483648
        %v2341 = vxor.u32 %v2333, 2147483648
        %v2342 = vxor.u32 %v2334, 2147483648
        %v2343 = vmul.f32 %v2339, 1.442695
        %v2344 = vpow.pop %v2343
        %v2345 = vmul.f32 %v2340, 1.442695
        %v2346 = vpow.pop %v2345
        %v2347 = vmul.f32 %v2341, 1.442695
        %v2348 = vpow.pop %v2347
        %v2349 = vmul.f32 %v2342, 1.442695
        %v2350 = vpow.pop %v2349
        %v2351 = vadd.f32 %v2344, 1.0
        %v2352 = vadd.f32 %v2346, 1.0
        %v2353 = vadd.f32 %v2348, 1.0
        %v2354 = vadd.f32 %v2350, 1.0
        %v2355 = vrcp.pop %v2351
        %v2356 = vmul.f32 1.0, %v2355
        %v2357 = vrcp.pop %v2352
        %v2358 = vmul.f32 1.0, %v2357
        %v2359 = vrcp.pop %v2353
        %v2360 = vmul.f32 1.0, %v2359
        %v2361 = vrcp.pop %v2354
        %v2362 = vmul.f32 1.0, %v2361
        %v2363 = vmul.f32 %v2300, %v2107
        %v2364 = vmul.f32 %v2302, %v2108
        %v2365 = vmul.f32 %v2304, %v2109
        %v2366 = vmul.f32 %v2306, %v2110
        %v2367 = vmul.f32 %v2300, %v2319
        %v2368 = vmul.f32 %v2302, %v2320
        %v2369 = vmul.f32 %v2304, %v2321
        %v2370 = vmul.f32 %v2306, %v2322
        %2375 = vrot.lane.b32.xlu0 %v2367, 64
        %v2376 = vpop.permute.xlu0 %2375
        %2377 = vrot.lane.b32.xlu0 %v2368, 64
        %v2378 = vpop.permute.xlu0 %2377
        %2379 = vrot.lane.b32.xlu0 %v2369, 64
        %v2380 = vpop.permute.xlu0 %2379
        %2381 = vrot.lane.b32.xlu0 %v2370, 64
        %v2382 = vpop.permute.xlu0 %2381
        %v2387 = vadd.f32 %v2363, %v2376
        %v2388 = vadd.f32 %v2364, %v2378
        %v2389 = vadd.f32 %v2365, %v2380
        %v2390 = vadd.f32 %v2366, %v2382
        %v2391 = vtanh.pop %v2387
        %v2392 = vtanh.pop %v2388
        %v2393 = vtanh.pop %v2389
        %v2394 = vtanh.pop %v2390
        %2399 = vrot.lane.b32.xlu0 %v2391, 64
        %v2400 = vpop.permute.xlu0 %2399
        %2401 = vrot.lane.b32.xlu0 %v2392, 64
        %v2402 = vpop.permute.xlu0 %2401
        %2403 = vrot.lane.b32.xlu0 %v2393, 64
        %v2404 = vpop.permute.xlu0 %2403
        %2405 = vrot.lane.b32.xlu0 %v2394, 64
        %v2406 = vpop.permute.xlu0 %2405
        %v2411 = vmul.f32 %v2356, %v2400
        %v2412 = vmul.f32 %v2358, %v2402
        %v2413 = vmul.f32 %v2360, %v2404
        %v2414 = vmul.f32 %v2362, %v2406
        %2415 = vst.msk [vmem:[#allocation5 + $0x5] sm:$0x1] %vm1014, %v2411
        %2416 = vst.msk [vmem:[#allocation5 + $0x15] sm:$0x1] %vm1014, %v2412
        %2417 = vst.msk [vmem:[#allocation5 + $0x25] sm:$0x1] %vm1014, %v2413
        %2418 = vst.msk [vmem:[#allocation5 + $0x35] sm:$0x1] %vm1014, %v2414
        %s2419 = scalar_lea.vmem [#allocation4], 6
        %v2420 = vld [vmem:[%s2419] ss:$8 sm:$0x3]
        %s2421 = scalar_lea.vmem [#allocation4], 38
        %v2422 = vld [vmem:[%s2421] ss:$8 sm:$0x3]
        %s2423 = scalar_lea.vmem [#allocation4], 70
        %v2424 = vld [vmem:[%s2423] ss:$8 sm:$0x3]
        %s2425 = scalar_lea.vmem [#allocation4], 102
        %v2426 = vld [vmem:[%s2425] ss:$8 sm:$0x3]
        %v2431 = vcombine.low %v2411, %v2412
        %v2432 = vcombine.low %v2413, %v2414
        %v2434 = vunpack.c.l.s4 1966171168
        %v2435 = vunpack.c.0.s8 %v2434
        %v2436 = vlaneseq
        %v2437 = vshrl.u32 %v2436, 7
        %v2438 = vsub.s32 %v2435, %v2437
        %v2439 = vrot.slane %v2431, %v2438
        %v2441 = vunpack.c.l.s4 1966171168
        %v2442 = vunpack.c.0.s8 %v2441
        %v2443 = vlaneseq
        %v2444 = vshrl.u32 %v2443, 7
        %v2445 = vsub.s32 %v2442, %v2444
        %v2446 = vrot.slane %v2432, %v2445
        %v2447 = vcombine.low %v2439, %v2446
        %v2449 = vunpack.c.l.s4 1966171168
        %v2450 = vunpack.c.0.s8 %v2449
        %v2451 = vlaneseq
        %v2452 = vshrl.u32 %v2451, 7
        %v2453 = vsub.s32 %v2450, %v2452
        %v2454 = vrot.slane %v2447, %v2453
        %v2455 = vsel %vm735, %v2454, 0
        %2457 = vmatprep.subr.mxu0 %v711
        %2458 = vmatpush1.msra.mxu0 %v710
        %2459 = vmatprep.subr.mxu0 %v713
        %2460 = vmatpush1.msra.mxu0 %v712
        %2461 = vmatprep.subr.mxu0 %v715
        %2462 = vmatpush1.msra.mxu0 %v714
        %2463 = vmatprep.subr.mxu0 %v717
        %2464 = vmatpush1.msra.mxu0 %v716
        %2465 = vmatprep.subr.mxu0 %v719
        %2466 = vmatpush1.msra.mxu0 %v718
        %2467 = vmatprep.subr.mxu0 %v721
        %2468 = vmatpush1.msra.mxu0 %v720
        %2469 = vmatprep.subr.mxu0 %v723
        %2470 = vmatpush1.msra.mxu0 %v722
        %2471 = vmatprep.subr.mxu0 %v725
        %2472 = vmatpush1.msra.mxu0 %v724
        %2473 = vmatprep.subr.mxu0 0.0
        %2474 = vmatpush1.msra.mxu0 0.0
        %2475 = vmatprep.subr.mxu0 0.0
        %2476 = vmatpush1.msra.mxu0 0.0
        %2477 = vmatprep.subr.mxu0 0.0
        %2478 = vmatpush1.msra.mxu0 0.0
        %2479 = vmatprep.subr.mxu0 0.0
        %2480 = vmatpush1.msra.mxu0 0.0
        %2481 = vmatprep.subr.mxu0 0.0
        %2482 = vmatpush1.msra.mxu0 0.0
        %2483 = vmatprep.subr.mxu0 0.0
        %2484 = vmatpush1.msra.mxu0 0.0
        %2485 = vmatprep.subr.mxu0 0.0
        %2486 = vmatpush1.msra.mxu0 0.0
        %2487 = vmatprep.subr.mxu0 0.0
        %2488 = vmatpush1.msra.mxu0 0.0
        %2489 = vmatprep.subr.mxu0 0.0
        %2490 = vmatpush1.msra.mxu0 0.0
        %2491 = vmatprep.subr.mxu0 0.0
        %2492 = vmatpush1.msra.mxu0 0.0
        %2493 = vmatprep.subr.mxu0 0.0
        %2494 = vmatpush1.msra.mxu0 0.0
        %2495 = vmatprep.subr.mxu0 0.0
        %2496 = vmatpush1.msra.mxu0 0.0
        %2497 = vmatprep.subr.mxu0 0.0
        %2498 = vmatpush1.msra.mxu0 0.0
        %2499 = vmatprep.subr.mxu0 0.0
        %2500 = vmatpush1.msra.mxu0 0.0
        %2501 = vmatprep.subr.mxu0 0.0
        %2502 = vmatpush1.msra.mxu0 0.0
        %2503 = vmatprep.subr.mxu0 0.0
        %2504 = vmatpush1.msra.mxu0 0.0
        %2505 = vmatprep.subr.mxu0 0.0
        %2506 = vmatpush1.msra.mxu0 0.0
        %2507 = vmatprep.subr.mxu0 0.0
        %2508 = vmatpush1.msra.mxu0 0.0
        %2509 = vmatprep.subr.mxu0 0.0
        %2510 = vmatpush1.msra.mxu0 0.0
        %2511 = vmatprep.subr.mxu0 0.0
        %2512 = vmatpush1.msra.mxu0 0.0
        %2513 = vmatprep.subr.mxu0 0.0
        %2514 = vmatpush1.msra.mxu0 0.0
        %2515 = vmatprep.subr.mxu0 0.0
        %2516 = vmatpush1.msra.mxu0 0.0
        %2517 = vmatprep.subr.mxu0 0.0
        %2518 = vmatpush1.msra.mxu0 0.0
        %2519 = vmatprep.subr.mxu0 0.0
        %2520 = vmatpush1.msra.mxu0 0.0
        %2521 = vmatprep.mubr.f32.mxu0 0.0
        %2522 = vmatmul.mubr.f32.gmra.mrb[0].mxu0 %v2455
        %v2523 = vpop.f32.mrb[0].mxu0
        %v2524 = vadd.f32 0.0, %v2523
        %v2525 = vpop.f32.mrb[0].mxu0
        %v2526 = vadd.f32 0.0, %v2525
        %2527 = vdwg.mxu0
        %v2530 = vcombine.low %v2524, %v2526
        %v2532 = vunpack.c.l.s4 1966171168
        %v2533 = vunpack.c.0.s8 %v2532
        %v2534 = vlaneseq
        %v2535 = vshrl.u32 %v2534, 7
        %v2536 = vsub.s32 %v2533, %v2535
        %v2537 = vrot.slane %v2530, %v2536
        %v2538 = vcombine.high %v2537, %v2537
        %v2540 = vunpack.c.l.s4 1966171168
        %v2541 = vunpack.c.0.s8 %v2540
        %v2542 = vlaneseq
        %v2543 = vshrl.u32 %v2542, 7
        %v2544 = vsub.s32 %v2541, %v2543
        %v2545 = vrot.slane %v2537, %v2544
        %v2547 = vunpack.c.l.s4 1966171168
        %v2548 = vunpack.c.0.s8 %v2547
        %v2549 = vlaneseq
        %v2550 = vshrl.u32 %v2549, 7
        %v2551 = vsub.s32 %v2548, %v2550
        %v2552 = vrot.slane %v2538, %v2551
        %v2553 = vcombine.high %v2545, %v2545
        %v2554 = vcombine.high %v2552, %v2552
        %v2559 = vadd.f32 %v2420, %v2545
        %v2560 = vadd.f32 %v2422, %v2552
        %v2561 = vadd.f32 %v2424, %v2553
        %v2562 = vadd.f32 %v2426, %v2554
        %v2563 = vxor.u32 %v2559, 2147483648
        %v2564 = vxor.u32 %v2560, 2147483648
        %v2565 = vxor.u32 %v2561, 2147483648
        %v2566 = vxor.u32 %v2562, 2147483648
        %v2567 = vmul.f32 %v2563, 1.442695
        %v2568 = vpow.pop %v2567
        %v2569 = vmul.f32 %v2564, 1.442695
        %v2570 = vpow.pop %v2569
        %v2571 = vmul.f32 %v2565, 1.442695
        %v2572 = vpow.pop %v2571
        %v2573 = vmul.f32 %v2566, 1.442695
        %v2574 = vpow.pop %v2573
        %v2575 = vadd.f32 %v2568, 1.0
        %v2576 = vadd.f32 %v2570, 1.0
        %v2577 = vadd.f32 %v2572, 1.0
        %v2578 = vadd.f32 %v2574, 1.0
        %v2579 = vrcp.pop %v2575
        %v2580 = vmul.f32 1.0, %v2579
        %v2581 = vrcp.pop %v2576
        %v2582 = vmul.f32 1.0, %v2581
        %v2583 = vrcp.pop %v2577
        %v2584 = vmul.f32 1.0, %v2583
        %v2585 = vrcp.pop %v2578
        %v2586 = vmul.f32 1.0, %v2585
        %v2591 = vrot.slane %v2559, 1
        %v2592 = vrot.slane %v2560, 1
        %v2593 = vrot.slane %v2561, 1
        %v2594 = vrot.slane %v2562, 1
        %v2599 = vtanh.pop %v2591
        %v2600 = vtanh.pop %v2592
        %v2601 = vtanh.pop %v2593
        %v2602 = vtanh.pop %v2594
        %2603 = vrot.lane.b32.xlu0 %v2559, 64
        %v2604 = vpop.permute.xlu0 %2603
        %2605 = vrot.lane.b32.xlu0 %v2560, 64
        %v2606 = vpop.permute.xlu0 %2605
        %2607 = vrot.lane.b32.xlu0 %v2561, 64
        %v2608 = vpop.permute.xlu0 %2607
        %2609 = vrot.lane.b32.xlu0 %v2562, 64
        %v2610 = vpop.permute.xlu0 %2609
        %v2611 = vrot.slane %v2604, 1
        %v2612 = vrot.slane %v2606, 1
        %v2613 = vrot.slane %v2608, 1
        %v2614 = vrot.slane %v2610, 1
        %v2619 = vxor.u32 %v2611, 2147483648
        %v2620 = vxor.u32 %v2612, 2147483648
        %v2621 = vxor.u32 %v2613, 2147483648
        %v2622 = vxor.u32 %v2614, 2147483648
        %v2623 = vmul.f32 %v2619, 1.442695
        %v2624 = vpow.pop %v2623
        %v2625 = vmul.f32 %v2620, 1.442695
        %v2626 = vpow.pop %v2625
        %v2627 = vmul.f32 %v2621, 1.442695
        %v2628 = vpow.pop %v2627
        %v2629 = vmul.f32 %v2622, 1.442695
        %v2630 = vpow.pop %v2629
        %v2631 = vadd.f32 %v2624, 1.0
        %v2632 = vadd.f32 %v2626, 1.0
        %v2633 = vadd.f32 %v2628, 1.0
        %v2634 = vadd.f32 %v2630, 1.0
        %v2635 = vrcp.pop %v2631
        %v2636 = vmul.f32 1.0, %v2635
        %v2637 = vrcp.pop %v2632
        %v2638 = vmul.f32 1.0, %v2637
        %v2639 = vrcp.pop %v2633
        %v2640 = vmul.f32 1.0, %v2639
        %v2641 = vrcp.pop %v2634
        %v2642 = vmul.f32 1.0, %v2641
        %v2643 = vmul.f32 %v2580, %v2387
        %v2644 = vmul.f32 %v2582, %v2388
        %v2645 = vmul.f32 %v2584, %v2389
        %v2646 = vmul.f32 %v2586, %v2390
        %v2647 = vmul.f32 %v2580, %v2599
        %v2648 = vmul.f32 %v2582, %v2600
        %v2649 = vmul.f32 %v2584, %v2601
        %v2650 = vmul.f32 %v2586, %v2602
        %2655 = vrot.lane.b32.xlu0 %v2647, 64
        %v2656 = vpop.permute.xlu0 %2655
        %2657 = vrot.lane.b32.xlu0 %v2648, 64
        %v2658 = vpop.permute.xlu0 %2657
        %2659 = vrot.lane.b32.xlu0 %v2649, 64
        %v2660 = vpop.permute.xlu0 %2659
        %2661 = vrot.lane.b32.xlu0 %v2650, 64
        %v2662 = vpop.permute.xlu0 %2661
        %v2667 = vadd.f32 %v2643, %v2656
        %v2668 = vadd.f32 %v2644, %v2658
        %v2669 = vadd.f32 %v2645, %v2660
        %v2670 = vadd.f32 %v2646, %v2662
        %v2671 = vtanh.pop %v2667
        %v2672 = vtanh.pop %v2668
        %v2673 = vtanh.pop %v2669
        %v2674 = vtanh.pop %v2670
        %2679 = vrot.lane.b32.xlu0 %v2671, 64
        %v2680 = vpop.permute.xlu0 %2679
        %2681 = vrot.lane.b32.xlu0 %v2672, 64
        %v2682 = vpop.permute.xlu0 %2681
        %2683 = vrot.lane.b32.xlu0 %v2673, 64
        %v2684 = vpop.permute.xlu0 %2683
        %2685 = vrot.lane.b32.xlu0 %v2674, 64
        %v2686 = vpop.permute.xlu0 %2685
        %v2691 = vmul.f32 %v2636, %v2680
        %v2692 = vmul.f32 %v2638, %v2682
        %v2693 = vmul.f32 %v2640, %v2684
        %v2694 = vmul.f32 %v2642, %v2686
        %2695 = vst.msk [vmem:[#allocation5 + $0x6] sm:$0x1] %vm1014, %v2691
        %2696 = vst.msk [vmem:[#allocation5 + $0x16] sm:$0x1] %vm1014, %v2692
        %2697 = vst.msk [vmem:[#allocation5 + $0x26] sm:$0x1] %vm1014, %v2693
        %2698 = vst.msk [vmem:[#allocation5 + $0x36] sm:$0x1] %vm1014, %v2694
        %s2699 = scalar_lea.vmem [#allocation4], 7
        %v2700 = vld [vmem:[%s2699] ss:$8 sm:$0x3]
        %s2701 = scalar_lea.vmem [#allocation4], 39
        %v2702 = vld [vmem:[%s2701] ss:$8 sm:$0x3]
        %s2703 = scalar_lea.vmem [#allocation4], 71
        %v2704 = vld [vmem:[%s2703] ss:$8 sm:$0x3]
        %s2705 = scalar_lea.vmem [#allocation4], 103
        %v2706 = vld [vmem:[%s2705] ss:$8 sm:$0x3]
        %v2711 = vcombine.low %v2691, %v2692
        %v2712 = vcombine.low %v2693, %v2694
        %v2714 = vunpack.c.l.s4 1966171168
        %v2715 = vunpack.c.0.s8 %v2714
        %v2716 = vlaneseq
        %v2717 = vshrl.u32 %v2716, 7
        %v2718 = vsub.s32 %v2715, %v2717
        %v2719 = vrot.slane %v2711, %v2718
        %v2721 = vunpack.c.l.s4 1966171168
        %v2722 = vunpack.c.0.s8 %v2721
        %v2723 = vlaneseq
        %v2724 = vshrl.u32 %v2723, 7
        %v2725 = vsub.s32 %v2722, %v2724
        %v2726 = vrot.slane %v2712, %v2725
        %v2727 = vcombine.low %v2719, %v2726
        %v2729 = vunpack.c.l.s4 1966171168
        %v2730 = vunpack.c.0.s8 %v2729
        %v2731 = vlaneseq
        %v2732 = vshrl.u32 %v2731, 7
        %v2733 = vsub.s32 %v2730, %v2732
        %v2734 = vrot.slane %v2727, %v2733
        %v2735 = vsel %vm735, %v2734, 0
        %2737 = vmatprep.subr.mxu0 %v711
        %2738 = vmatpush1.msra.mxu0 %v710
        %2739 = vmatprep.subr.mxu0 %v713
        %2740 = vmatpush1.msra.mxu0 %v712
        %2741 = vmatprep.subr.mxu0 %v715
        %2742 = vmatpush1.msra.mxu0 %v714
        %2743 = vmatprep.subr.mxu0 %v717
        %2744 = vmatpush1.msra.mxu0 %v716
        %2745 = vmatprep.subr.mxu0 %v719
        %2746 = vmatpush1.msra.mxu0 %v718
        %2747 = vmatprep.subr.mxu0 %v721
        %2748 = vmatpush1.msra.mxu0 %v720
        %2749 = vmatprep.subr.mxu0 %v723
        %2750 = vmatpush1.msra.mxu0 %v722
        %2751 = vmatprep.subr.mxu0 %v725
        %2752 = vmatpush1.msra.mxu0 %v724
        %2753 = vmatprep.subr.mxu0 0.0
        %2754 = vmatpush1.msra.mxu0 0.0
        %2755 = vmatprep.subr.mxu0 0.0
        %2756 = vmatpush1.msra.mxu0 0.0
        %2757 = vmatprep.subr.mxu0 0.0
        %2758 = vmatpush1.msra.mxu0 0.0
        %2759 = vmatprep.subr.mxu0 0.0
        %2760 = vmatpush1.msra.mxu0 0.0
        %2761 = vmatprep.subr.mxu0 0.0
        %2762 = vmatpush1.msra.mxu0 0.0
        %2763 = vmatprep.subr.mxu0 0.0
        %2764 = vmatpush1.msra.mxu0 0.0
        %2765 = vmatprep.subr.mxu0 0.0
        %2766 = vmatpush1.msra.mxu0 0.0
        %2767 = vmatprep.subr.mxu0 0.0
        %2768 = vmatpush1.msra.mxu0 0.0
        %2769 = vmatprep.subr.mxu0 0.0
        %2770 = vmatpush1.msra.mxu0 0.0
        %2771 = vmatprep.subr.mxu0 0.0
        %2772 = vmatpush1.msra.mxu0 0.0
        %2773 = vmatprep.subr.mxu0 0.0
        %2774 = vmatpush1.msra.mxu0 0.0
        %2775 = vmatprep.subr.mxu0 0.0
        %2776 = vmatpush1.msra.mxu0 0.0
        %2777 = vmatprep.subr.mxu0 0.0
        %2778 = vmatpush1.msra.mxu0 0.0
        %2779 = vmatprep.subr.mxu0 0.0
        %2780 = vmatpush1.msra.mxu0 0.0
        %2781 = vmatprep.subr.mxu0 0.0
        %2782 = vmatpush1.msra.mxu0 0.0
        %2783 = vmatprep.subr.mxu0 0.0
        %2784 = vmatpush1.msra.mxu0 0.0
        %2785 = vmatprep.subr.mxu0 0.0
        %2786 = vmatpush1.msra.mxu0 0.0
        %2787 = vmatprep.subr.mxu0 0.0
        %2788 = vmatpush1.msra.mxu0 0.0
        %2789 = vmatprep.subr.mxu0 0.0
        %2790 = vmatpush1.msra.mxu0 0.0
        %2791 = vmatprep.subr.mxu0 0.0
        %2792 = vmatpush1.msra.mxu0 0.0
        %2793 = vmatprep.subr.mxu0 0.0
        %2794 = vmatpush1.msra.mxu0 0.0
        %2795 = vmatprep.subr.mxu0 0.0
        %2796 = vmatpush1.msra.mxu0 0.0
        %2797 = vmatprep.subr.mxu0 0.0
        %2798 = vmatpush1.msra.mxu0 0.0
        %2799 = vmatprep.subr.mxu0 0.0
        %2800 = vmatpush1.msra.mxu0 0.0
        %2801 = vmatprep.mubr.f32.mxu0 0.0
        %2802 = vmatmul.mubr.f32.gmra.mrb[0].mxu0 %v2735
        %v2803 = vpop.f32.mrb[0].mxu0
        %v2804 = vadd.f32 0.0, %v2803
        %v2805 = vpop.f32.mrb[0].mxu0
        %v2806 = vadd.f32 0.0, %v2805
        %2807 = vdwg.mxu0
        %v2810 = vcombine.low %v2804, %v2806
        %v2812 = vunpack.c.l.s4 1966171168
        %v2813 = vunpack.c.0.s8 %v2812
        %v2814 = vlaneseq
        %v2815 = vshrl.u32 %v2814, 7
        %v2816 = vsub.s32 %v2813, %v2815
        %v2817 = vrot.slane %v2810, %v2816
        %v2818 = vcombine.high %v2817, %v2817
        %v2820 = vunpack.c.l.s4 1966171168
        %v2821 = vunpack.c.0.s8 %v2820
        %v2822 = vlaneseq
        %v2823 = vshrl.u32 %v2822, 7
        %v2824 = vsub.s32 %v2821, %v2823
        %v2825 = vrot.slane %v2817, %v2824
        %v2827 = vunpack.c.l.s4 1966171168
        %v2828 = vunpack.c.0.s8 %v2827
        %v2829 = vlaneseq
        %v2830 = vshrl.u32 %v2829, 7
        %v2831 = vsub.s32 %v2828, %v2830
        %v2832 = vrot.slane %v2818, %v2831
        %v2833 = vcombine.high %v2825, %v2825
        %v2834 = vcombine.high %v2832, %v2832
        %v2839 = vadd.f32 %v2700, %v2825
        %v2840 = vadd.f32 %v2702, %v2832
        %v2841 = vadd.f32 %v2704, %v2833
        %v2842 = vadd.f32 %v2706, %v2834
        %v2843 = vxor.u32 %v2839, 2147483648
        %v2844 = vxor.u32 %v2840, 2147483648
        %v2845 = vxor.u32 %v2841, 2147483648
        %v2846 = vxor.u32 %v2842, 2147483648
        %v2847 = vmul.f32 %v2843, 1.442695
        %v2848 = vpow.pop %v2847
        %v2849 = vmul.f32 %v2844, 1.442695
        %v2850 = vpow.pop %v2849
        %v2851 = vmul.f32 %v2845, 1.442695
        %v2852 = vpow.pop %v2851
        %v2853 = vmul.f32 %v2846, 1.442695
        %v2854 = vpow.pop %v2853
        %v2855 = vadd.f32 %v2848, 1.0
        %v2856 = vadd.f32 %v2850, 1.0
        %v2857 = vadd.f32 %v2852, 1.0
        %v2858 = vadd.f32 %v2854, 1.0
        %v2859 = vrcp.pop %v2855
        %v2860 = vmul.f32 1.0, %v2859
        %v2861 = vrcp.pop %v2856
        %v2862 = vmul.f32 1.0, %v2861
        %v2863 = vrcp.pop %v2857
        %v2864 = vmul.f32 1.0, %v2863
        %v2865 = vrcp.pop %v2858
        %v2866 = vmul.f32 1.0, %v2865
        %v2871 = vrot.slane %v2839, 1
        %v2872 = vrot.slane %v2840, 1
        %v2873 = vrot.slane %v2841, 1
        %v2874 = vrot.slane %v2842, 1
        %v2879 = vtanh.pop %v2871
        %v2880 = vtanh.pop %v2872
        %v2881 = vtanh.pop %v2873
        %v2882 = vtanh.pop %v2874
        %2883 = vrot.lane.b32.xlu0 %v2839, 64
        %v2884 = vpop.permute.xlu0 %2883
        %2885 = vrot.lane.b32.xlu0 %v2840, 64
        %v2886 = vpop.permute.xlu0 %2885
        %2887 = vrot.lane.b32.xlu0 %v2841, 64
        %v2888 = vpop.permute.xlu0 %2887
        %2889 = vrot.lane.b32.xlu0 %v2842, 64
        %v2890 = vpop.permute.xlu0 %2889
        %v2891 = vrot.slane %v2884, 1
        %v2892 = vrot.slane %v2886, 1
        %v2893 = vrot.slane %v2888, 1
        %v2894 = vrot.slane %v2890, 1
        %v2899 = vxor.u32 %v2891, 2147483648
        %v2900 = vxor.u32 %v2892, 2147483648
        %v2901 = vxor.u32 %v2893, 2147483648
        %v2902 = vxor.u32 %v2894, 2147483648
        %v2903 = vmul.f32 %v2899, 1.442695
        %v2904 = vpow.pop %v2903
        %v2905 = vmul.f32 %v2900, 1.442695
        %v2906 = vpow.pop %v2905
        %v2907 = vmul.f32 %v2901, 1.442695
        %v2908 = vpow.pop %v2907
        %v2909 = vmul.f32 %v2902, 1.442695
        %v2910 = vpow.pop %v2909
        %v2911 = vadd.f32 %v2904, 1.0
        %v2912 = vadd.f32 %v2906, 1.0
        %v2913 = vadd.f32 %v2908, 1.0
        %v2914 = vadd.f32 %v2910, 1.0
        %v2915 = vrcp.pop %v2911
        %v2916 = vmul.f32 1.0, %v2915
        %v2917 = vrcp.pop %v2912
        %v2918 = vmul.f32 1.0, %v2917
        %v2919 = vrcp.pop %v2913
        %v2920 = vmul.f32 1.0, %v2919
        %v2921 = vrcp.pop %v2914
        %v2922 = vmul.f32 1.0, %v2921
        %v2923 = vmul.f32 %v2860, %v2667
        %v2924 = vmul.f32 %v2862, %v2668
        %v2925 = vmul.f32 %v2864, %v2669
        %v2926 = vmul.f32 %v2866, %v2670
        %v2927 = vmul.f32 %v2860, %v2879
        %v2928 = vmul.f32 %v2862, %v2880
        %v2929 = vmul.f32 %v2864, %v2881
        %v2930 = vmul.f32 %v2866, %v2882
        %2935 = vrot.lane.b32.xlu0 %v2927, 64
        %v2936 = vpop.permute.xlu0 %2935
        %2937 = vrot.lane.b32.xlu0 %v2928, 64
        %v2938 = vpop.permute.xlu0 %2937
        %2939 = vrot.lane.b32.xlu0 %v2929, 64
        %v2940 = vpop.permute.xlu0 %2939
        %2941 = vrot.lane.b32.xlu0 %v2930, 64
        %v2942 = vpop.permute.xlu0 %2941
        %v2947 = vadd.f32 %v2923, %v2936
        %v2948 = vadd.f32 %v2924, %v2938
        %v2949 = vadd.f32 %v2925, %v2940
        %v2950 = vadd.f32 %v2926, %v2942
        %v2951 = vtanh.pop %v2947
        %v2952 = vtanh.pop %v2948
        %v2953 = vtanh.pop %v2949
        %v2954 = vtanh.pop %v2950
        %2959 = vrot.lane.b32.xlu0 %v2951, 64
        %v2960 = vpop.permute.xlu0 %2959
        %2961 = vrot.lane.b32.xlu0 %v2952, 64
        %v2962 = vpop.permute.xlu0 %2961
        %2963 = vrot.lane.b32.xlu0 %v2953, 64
        %v2964 = vpop.permute.xlu0 %2963
        %2965 = vrot.lane.b32.xlu0 %v2954, 64
        %v2966 = vpop.permute.xlu0 %2965
        %v2971 = vmul.f32 %v2916, %v2960
        %v2972 = vmul.f32 %v2918, %v2962
        %v2973 = vmul.f32 %v2920, %v2964
        %v2974 = vmul.f32 %v2922, %v2966
        %2975 = vst.msk [vmem:[#allocation5 + $0x7] sm:$0x1] %vm1014, %v2971
        %2976 = vst.msk [vmem:[#allocation5 + $0x17] sm:$0x1] %vm1014, %v2972
        %2977 = vst.msk [vmem:[#allocation5 + $0x27] sm:$0x1] %vm1014, %v2973
        %2978 = vst.msk [vmem:[#allocation5 + $0x37] sm:$0x1] %vm1014, %v2974
        %s2979 = scalar_lea.vmem [#allocation4], 16
        %v2980 = vld [vmem:[%s2979] ss:$8 sm:$0x3]
        %s2981 = scalar_lea.vmem [#allocation4], 48
        %v2982 = vld [vmem:[%s2981] ss:$8 sm:$0x3]
        %s2983 = scalar_lea.vmem [#allocation4], 80
        %v2984 = vld [vmem:[%s2983] ss:$8 sm:$0x3]
        %s2985 = scalar_lea.vmem [#allocation4], 112
        %v2986 = vld [vmem:[%s2985] ss:$8 sm:$0x3]
        %v2991 = vcombine.low %v2971, %v2972
        %v2992 = vcombine.low %v2973, %v2974
        %v2994 = vunpack.c.l.s4 1966171168
        %v2995 = vunpack.c.0.s8 %v2994
        %v2996 = vlaneseq
        %v2997 = vshrl.u32 %v2996, 7
        %v2998 = vsub.s32 %v2995, %v2997
        %v2999 = vrot.slane %v2991, %v2998
        %v3001 = vunpack.c.l.s4 1966171168
        %v3002 = vunpack.c.0.s8 %v3001
        %v3003 = vlaneseq
        %v3004 = vshrl.u32 %v3003, 7
        %v3005 = vsub.s32 %v3002, %v3004
        %v3006 = vrot.slane %v2992, %v3005
        %v3007 = vcombine.low %v2999, %v3006
        %v3009 = vunpack.c.l.s4 1966171168
        %v3010 = vunpack.c.0.s8 %v3009
        %v3011 = vlaneseq
        %v3012 = vshrl.u32 %v3011, 7
        %v3013 = vsub.s32 %v3010, %v3012
        %v3014 = vrot.slane %v3007, %v3013
        %v3015 = vsel %vm735, %v3014, 0
        %3017 = vmatprep.subr.mxu0 %v711
        %3018 = vmatpush1.msra.mxu0 %v710
        %3019 = vmatprep.subr.mxu0 %v713
        %3020 = vmatpush1.msra.mxu0 %v712
        %3021 = vmatprep.subr.mxu0 %v715
        %3022 = vmatpush1.msra.mxu0 %v714
        %3023 = vmatprep.subr.mxu0 %v717
        %3024 = vmatpush1.msra.mxu0 %v716
        %3025 = vmatprep.subr.mxu0 %v719
        %3026 = vmatpush1.msra.mxu0 %v718
        %3027 = vmatprep.subr.mxu0 %v721
        %3028 = vmatpush1.msra.mxu0 %v720
        %3029 = vmatprep.subr.mxu0 %v723
        %3030 = vmatpush1.msra.mxu0 %v722
        %3031 = vmatprep.subr.mxu0 %v725
        %3032 = vmatpush1.msra.mxu0 %v724
        %3033 = vmatprep.subr.mxu0 0.0
        %3034 = vmatpush1.msra.mxu0 0.0
        %3035 = vmatprep.subr.mxu0 0.0
        %3036 = vmatpush1.msra.mxu0 0.0
        %3037 = vmatprep.subr.mxu0 0.0
        %3038 = vmatpush1.msra.mxu0 0.0
        %3039 = vmatprep.subr.mxu0 0.0
        %3040 = vmatpush1.msra.mxu0 0.0
        %3041 = vmatprep.subr.mxu0 0.0
        %3042 = vmatpush1.msra.mxu0 0.0
        %3043 = vmatprep.subr.mxu0 0.0
        %3044 = vmatpush1.msra.mxu0 0.0
        %3045 = vmatprep.subr.mxu0 0.0
        %3046 = vmatpush1.msra.mxu0 0.0
        %3047 = vmatprep.subr.mxu0 0.0
        %3048 = vmatpush1.msra.mxu0 0.0
        %3049 = vmatprep.subr.mxu0 0.0
        %3050 = vmatpush1.msra.mxu0 0.0
        %3051 = vmatprep.subr.mxu0 0.0
        %3052 = vmatpush1.msra.mxu0 0.0
        %3053 = vmatprep.subr.mxu0 0.0
        %3054 = vmatpush1.msra.mxu0 0.0
        %3055 = vmatprep.subr.mxu0 0.0
        %3056 = vmatpush1.msra.mxu0 0.0
        %3057 = vmatprep.subr.mxu0 0.0
        %3058 = vmatpush1.msra.mxu0 0.0
        %3059 = vmatprep.subr.mxu0 0.0
        %3060 = vmatpush1.msra.mxu0 0.0
        %3061 = vmatprep.subr.mxu0 0.0
        %3062 = vmatpush1.msra.mxu0 0.0
        %3063 = vmatprep.subr.mxu0 0.0
        %3064 = vmatpush1.msra.mxu0 0.0
        %3065 = vmatprep.subr.mxu0 0.0
        %3066 = vmatpush1.msra.mxu0 0.0
        %3067 = vmatprep.subr.mxu0 0.0
        %3068 = vmatpush1.msra.mxu0 0.0
        %3069 = vmatprep.subr.mxu0 0.0
        %3070 = vmatpush1.msra.mxu0 0.0
        %3071 = vmatprep.subr.mxu0 0.0
        %3072 = vmatpush1.msra.mxu0 0.0
        %3073 = vmatprep.subr.mxu0 0.0
        %3074 = vmatpush1.msra.mxu0 0.0
        %3075 = vmatprep.subr.mxu0 0.0
        %3076 = vmatpush1.msra.mxu0 0.0
        %3077 = vmatprep.subr.mxu0 0.0
        %3078 = vmatpush1.msra.mxu0 0.0
        %3079 = vmatprep.subr.mxu0 0.0
        %3080 = vmatpush1.msra.mxu0 0.0
        %3081 = vmatprep.mubr.f32.mxu0 0.0
        %3082 = vmatmul.mubr.f32.gmra.mrb[0].mxu0 %v3015
        %v3083 = vpop.f32.mrb[0].mxu0
        %v3084 = vadd.f32 0.0, %v3083
        %v3085 = vpop.f32.mrb[0].mxu0
        %v3086 = vadd.f32 0.0, %v3085
        %3087 = vdwg.mxu0
        %v3090 = vcombine.low %v3084, %v3086
        %v3092 = vunpack.c.l.s4 1966171168
        %v3093 = vunpack.c.0.s8 %v3092
        %v3094 = vlaneseq
        %v3095 = vshrl.u32 %v3094, 7
        %v3096 = vsub.s32 %v3093, %v3095
        %v3097 = vrot.slane %v3090, %v3096
        %v3098 = vcombine.high %v3097, %v3097
        %v3100 = vunpack.c.l.s4 1966171168
        %v3101 = vunpack.c.0.s8 %v3100
        %v3102 = vlaneseq
        %v3103 = vshrl.u32 %v3102, 7
        %v3104 = vsub.s32 %v3101, %v3103
        %v3105 = vrot.slane %v3097, %v3104
        %v3107 = vunpack.c.l.s4 1966171168
        %v3108 = vunpack.c.0.s8 %v3107
        %v3109 = vlaneseq
        %v3110 = vshrl.u32 %v3109, 7
        %v3111 = vsub.s32 %v3108, %v3110
        %v3112 = vrot.slane %v3098, %v3111
        %v3113 = vcombine.high %v3105, %v3105
        %v3114 = vcombine.high %v3112, %v3112
        %v3119 = vadd.f32 %v2980, %v3105
        %v3120 = vadd.f32 %v2982, %v3112
        %v3121 = vadd.f32 %v2984, %v3113
        %v3122 = vadd.f32 %v2986, %v3114
        %v3123 = vxor.u32 %v3119, 2147483648
        %v3124 = vxor.u32 %v3120, 2147483648
        %v3125 = vxor.u32 %v3121, 2147483648
        %v3126 = vxor.u32 %v3122, 2147483648
        %v3127 = vmul.f32 %v3123, 1.442695
        %v3128 = vpow.pop %v3127
        %v3129 = vmul.f32 %v3124, 1.442695
        %v3130 = vpow.pop %v3129
        %v3131 = vmul.f32 %v3125, 1.442695
        %v3132 = vpow.pop %v3131
        %v3133 = vmul.f32 %v3126, 1.442695
        %v3134 = vpow.pop %v3133
        %v3135 = vadd.f32 %v3128, 1.0
        %v3136 = vadd.f32 %v3130, 1.0
        %v3137 = vadd.f32 %v3132, 1.0
        %v3138 = vadd.f32 %v3134, 1.0
        %v3139 = vrcp.pop %v3135
        %v3140 = vmul.f32 1.0, %v3139
        %v3141 = vrcp.pop %v3136
        %v3142 = vmul.f32 1.0, %v3141
        %v3143 = vrcp.pop %v3137
        %v3144 = vmul.f32 1.0, %v3143
        %v3145 = vrcp.pop %v3138
        %v3146 = vmul.f32 1.0, %v3145
        %v3151 = vrot.slane %v3119, 1
        %v3152 = vrot.slane %v3120, 1
        %v3153 = vrot.slane %v3121, 1
        %v3154 = vrot.slane %v3122, 1
        %v3159 = vtanh.pop %v3151
        %v3160 = vtanh.pop %v3152
        %v3161 = vtanh.pop %v3153
        %v3162 = vtanh.pop %v3154
        %3163 = vrot.lane.b32.xlu0 %v3119, 64
        %v3164 = vpop.permute.xlu0 %3163
        %3165 = vrot.lane.b32.xlu0 %v3120, 64
        %v3166 = vpop.permute.xlu0 %3165
        %3167 = vrot.lane.b32.xlu0 %v3121, 64
        %v3168 = vpop.permute.xlu0 %3167
        %3169 = vrot.lane.b32.xlu0 %v3122, 64
        %v3170 = vpop.permute.xlu0 %3169
        %v3171 = vrot.slane %v3164, 1
        %v3172 = vrot.slane %v3166, 1
        %v3173 = vrot.slane %v3168, 1
        %v3174 = vrot.slane %v3170, 1
        %v3179 = vxor.u32 %v3171, 2147483648
        %v3180 = vxor.u32 %v3172, 2147483648
        %v3181 = vxor.u32 %v3173, 2147483648
        %v3182 = vxor.u32 %v3174, 2147483648
        %v3183 = vmul.f32 %v3179, 1.442695
        %v3184 = vpow.pop %v3183
        %v3185 = vmul.f32 %v3180, 1.442695
        %v3186 = vpow.pop %v3185
        %v3187 = vmul.f32 %v3181, 1.442695
        %v3188 = vpow.pop %v3187
        %v3189 = vmul.f32 %v3182, 1.442695
        %v3190 = vpow.pop %v3189
        %v3191 = vadd.f32 %v3184, 1.0
        %v3192 = vadd.f32 %v3186, 1.0
        %v3193 = vadd.f32 %v3188, 1.0
        %v3194 = vadd.f32 %v3190, 1.0
        %v3195 = vrcp.pop %v3191
        %v3196 = vmul.f32 1.0, %v3195
        %v3197 = vrcp.pop %v3192
        %v3198 = vmul.f32 1.0, %v3197
        %v3199 = vrcp.pop %v3193
        %v3200 = vmul.f32 1.0, %v3199
        %v3201 = vrcp.pop %v3194
        %v3202 = vmul.f32 1.0, %v3201
        %v3203 = vmul.f32 %v3140, %v2947
        %v3204 = vmul.f32 %v3142, %v2948
        %v3205 = vmul.f32 %v3144, %v2949
        %v3206 = vmul.f32 %v3146, %v2950
        %v3207 = vmul.f32 %v3140, %v3159
        %v3208 = vmul.f32 %v3142, %v3160
        %v3209 = vmul.f32 %v3144, %v3161
        %v3210 = vmul.f32 %v3146, %v3162
        %3215 = vrot.lane.b32.xlu0 %v3207, 64
        %v3216 = vpop.permute.xlu0 %3215
        %3217 = vrot.lane.b32.xlu0 %v3208, 64
        %v3218 = vpop.permute.xlu0 %3217
        %3219 = vrot.lane.b32.xlu0 %v3209, 64
        %v3220 = vpop.permute.xlu0 %3219
        %3221 = vrot.lane.b32.xlu0 %v3210, 64
        %v3222 = vpop.permute.xlu0 %3221
        %v3227 = vadd.f32 %v3203, %v3216
        %v3228 = vadd.f32 %v3204, %v3218
        %v3229 = vadd.f32 %v3205, %v3220
        %v3230 = vadd.f32 %v3206, %v3222
        %v3231 = vtanh.pop %v3227
        %v3232 = vtanh.pop %v3228
        %v3233 = vtanh.pop %v3229
        %v3234 = vtanh.pop %v3230
        %3239 = vrot.lane.b32.xlu0 %v3231, 64
        %v3240 = vpop.permute.xlu0 %3239
        %3241 = vrot.lane.b32.xlu0 %v3232, 64
        %v3242 = vpop.permute.xlu0 %3241
        %3243 = vrot.lane.b32.xlu0 %v3233, 64
        %v3244 = vpop.permute.xlu0 %3243
        %3245 = vrot.lane.b32.xlu0 %v3234, 64
        %v3246 = vpop.permute.xlu0 %3245
        %v3251 = vmul.f32 %v3196, %v3240
        %v3252 = vmul.f32 %v3198, %v3242
        %v3253 = vmul.f32 %v3200, %v3244
        %v3254 = vmul.f32 %v3202, %v3246
        %3255 = vst.msk [vmem:[#allocation5 + $0x8] sm:$0x1] %vm1014, %v3251
        %3256 = vst.msk [vmem:[#allocation5 + $0x18] sm:$0x1] %vm1014, %v3252
        %3257 = vst.msk [vmem:[#allocation5 + $0x28] sm:$0x1] %vm1014, %v3253
        %3258 = vst.msk [vmem:[#allocation5 + $0x38] sm:$0x1] %vm1014, %v3254
        %s3259 = scalar_lea.vmem [#allocation4], 17
        %v3260 = vld [vmem:[%s3259] ss:$8 sm:$0x3]
        %s3261 = scalar_lea.vmem [#allocation4], 49
        %v3262 = vld [vmem:[%s3261] ss:$8 sm:$0x3]
        %s3263 = scalar_lea.vmem [#allocation4], 81
        %v3264 = vld [vmem:[%s3263] ss:$8 sm:$0x3]
        %s3265 = scalar_lea.vmem [#allocation4], 113
        %v3266 = vld [vmem:[%s3265] ss:$8 sm:$0x3]
        %v3271 = vcombine.low %v3251, %v3252
        %v3272 = vcombine.low %v3253, %v3254
        %v3274 = vunpack.c.l.s4 1966171168
        %v3275 = vunpack.c.0.s8 %v3274
        %v3276 = vlaneseq
        %v3277 = vshrl.u32 %v3276, 7
        %v3278 = vsub.s32 %v3275, %v3277
        %v3279 = vrot.slane %v3271, %v3278
        %v3281 = vunpack.c.l.s4 1966171168
        %v3282 = vunpack.c.0.s8 %v3281
        %v3283 = vlaneseq
        %v3284 = vshrl.u32 %v3283, 7
        %v3285 = vsub.s32 %v3282, %v3284
        %v3286 = vrot.slane %v3272, %v3285
        %v3287 = vcombine.low %v3279, %v3286
        %v3289 = vunpack.c.l.s4 1966171168
        %v3290 = vunpack.c.0.s8 %v3289
        %v3291 = vlaneseq
        %v3292 = vshrl.u32 %v3291, 7
        %v3293 = vsub.s32 %v3290, %v3292
        %v3294 = vrot.slane %v3287, %v3293
        %v3295 = vsel %vm735, %v3294, 0
        %3297 = vmatprep.subr.mxu0 %v711
        %3298 = vmatpush1.msra.mxu0 %v710
        %3299 = vmatprep.subr.mxu0 %v713
        %3300 = vmatpush1.msra.mxu0 %v712
        %3301 = vmatprep.subr.mxu0 %v715
        %3302 = vmatpush1.msra.mxu0 %v714
        %3303 = vmatprep.subr.mxu0 %v717
        %3304 = vmatpush1.msra.mxu0 %v716
        %3305 = vmatprep.subr.mxu0 %v719
        %3306 = vmatpush1.msra.mxu0 %v718
        %3307 = vmatprep.subr.mxu0 %v721
        %3308 = vmatpush1.msra.mxu0 %v720
        %3309 = vmatprep.subr.mxu0 %v723
        %3310 = vmatpush1.msra.mxu0 %v722
        %3311 = vmatprep.subr.mxu0 %v725
        %3312 = vmatpush1.msra.mxu0 %v724
        %3313 = vmatprep.subr.mxu0 0.0
        %3314 = vmatpush1.msra.mxu0 0.0
        %3315 = vmatprep.subr.mxu0 0.0
        %3316 = vmatpush1.msra.mxu0 0.0
        %3317 = vmatprep.subr.mxu0 0.0
        %3318 = vmatpush1.msra.mxu0 0.0
        %3319 = vmatprep.subr.mxu0 0.0
        %3320 = vmatpush1.msra.mxu0 0.0
        %3321 = vmatprep.subr.mxu0 0.0
        %3322 = vmatpush1.msra.mxu0 0.0
        %3323 = vmatprep.subr.mxu0 0.0
        %3324 = vmatpush1.msra.mxu0 0.0
        %3325 = vmatprep.subr.mxu0 0.0
        %3326 = vmatpush1.msra.mxu0 0.0
        %3327 = vmatprep.subr.mxu0 0.0
        %3328 = vmatpush1.msra.mxu0 0.0
        %3329 = vmatprep.subr.mxu0 0.0
        %3330 = vmatpush1.msra.mxu0 0.0
        %3331 = vmatprep.subr.mxu0 0.0
        %3332 = vmatpush1.msra.mxu0 0.0
        %3333 = vmatprep.subr.mxu0 0.0
        %3334 = vmatpush1.msra.mxu0 0.0
        %3335 = vmatprep.subr.mxu0 0.0
        %3336 = vmatpush1.msra.mxu0 0.0
        %3337 = vmatprep.subr.mxu0 0.0
        %3338 = vmatpush1.msra.mxu0 0.0
        %3339 = vmatprep.subr.mxu0 0.0
        %3340 = vmatpush1.msra.mxu0 0.0
        %3341 = vmatprep.subr.mxu0 0.0
        %3342 = vmatpush1.msra.mxu0 0.0
        %3343 = vmatprep.subr.mxu0 0.0
        %3344 = vmatpush1.msra.mxu0 0.0
        %3345 = vmatprep.subr.mxu0 0.0
        %3346 = vmatpush1.msra.mxu0 0.0
        %3347 = vmatprep.subr.mxu0 0.0
        %3348 = vmatpush1.msra.mxu0 0.0
        %3349 = vmatprep.subr.mxu0 0.0
        %3350 = vmatpush1.msra.mxu0 0.0
        %3351 = vmatprep.subr.mxu0 0.0
        %3352 = vmatpush1.msra.mxu0 0.0
        %3353 = vmatprep.subr.mxu0 0.0
        %3354 = vmatpush1.msra.mxu0 0.0
        %3355 = vmatprep.subr.mxu0 0.0
        %3356 = vmatpush1.msra.mxu0 0.0
        %3357 = vmatprep.subr.mxu0 0.0
        %3358 = vmatpush1.msra.mxu0 0.0
        %3359 = vmatprep.subr.mxu0 0.0
        %3360 = vmatpush1.msra.mxu0 0.0
        %3361 = vmatprep.mubr.f32.mxu0 0.0
        %3362 = vmatmul.mubr.f32.gmra.mrb[0].mxu0 %v3295
        %v3363 = vpop.f32.mrb[0].mxu0
        %v3364 = vadd.f32 0.0, %v3363
        %v3365 = vpop.f32.mrb[0].mxu0
        %v3366 = vadd.f32 0.0, %v3365
        %3367 = vdwg.mxu0
        %v3370 = vcombine.low %v3364, %v3366
        %v3372 = vunpack.c.l.s4 1966171168
        %v3373 = vunpack.c.0.s8 %v3372
        %v3374 = vlaneseq
        %v3375 = vshrl.u32 %v3374, 7
        %v3376 = vsub.s32 %v3373, %v3375
        %v3377 = vrot.slane %v3370, %v3376
        %v3378 = vcombine.high %v3377, %v3377
        %v3380 = vunpack.c.l.s4 1966171168
        %v3381 = vunpack.c.0.s8 %v3380
        %v3382 = vlaneseq
        %v3383 = vshrl.u32 %v3382, 7
        %v3384 = vsub.s32 %v3381, %v3383
        %v3385 = vrot.slane %v3377, %v3384
        %v3387 = vunpack.c.l.s4 1966171168
        %v3388 = vunpack.c.0.s8 %v3387
        %v3389 = vlaneseq
        %v3390 = vshrl.u32 %v3389, 7
        %v3391 = vsub.s32 %v3388, %v3390
        %v3392 = vrot.slane %v3378, %v3391
        %v3393 = vcombine.high %v3385, %v3385
        %v3394 = vcombine.high %v3392, %v3392
        %v3399 = vadd.f32 %v3260, %v3385
        %v3400 = vadd.f32 %v3262, %v3392
        %v3401 = vadd.f32 %v3264, %v3393
        %v3402 = vadd.f32 %v3266, %v3394
        %v3403 = vxor.u32 %v3399, 2147483648
        %v3404 = vxor.u32 %v3400, 2147483648
        %v3405 = vxor.u32 %v3401, 2147483648
        %v3406 = vxor.u32 %v3402, 2147483648
        %v3407 = vmul.f32 %v3403, 1.442695
        %v3408 = vpow.pop %v3407
        %v3409 = vmul.f32 %v3404, 1.442695
        %v3410 = vpow.pop %v3409
        %v3411 = vmul.f32 %v3405, 1.442695
        %v3412 = vpow.pop %v3411
        %v3413 = vmul.f32 %v3406, 1.442695
        %v3414 = vpow.pop %v3413
        %v3415 = vadd.f32 %v3408, 1.0
        %v3416 = vadd.f32 %v3410, 1.0
        %v3417 = vadd.f32 %v3412, 1.0
        %v3418 = vadd.f32 %v3414, 1.0
        %v3419 = vrcp.pop %v3415
        %v3420 = vmul.f32 1.0, %v3419
        %v3421 = vrcp.pop %v3416
        %v3422 = vmul.f32 1.0, %v3421
        %v3423 = vrcp.pop %v3417
        %v3424 = vmul.f32 1.0, %v3423
        %v3425 = vrcp.pop %v3418
        %v3426 = vmul.f32 1.0, %v3425
        %v3431 = vrot.slane %v3399, 1
        %v3432 = vrot.slane %v3400, 1
        %v3433 = vrot.slane %v3401, 1
        %v3434 = vrot.slane %v3402, 1
        %v3439 = vtanh.pop %v3431
        %v3440 = vtanh.pop %v3432
        %v3441 = vtanh.pop %v3433
        %v3442 = vtanh.pop %v3434
        %3443 = vrot.lane.b32.xlu0 %v3399, 64
        %v3444 = vpop.permute.xlu0 %3443
        %3445 = vrot.lane.b32.xlu0 %v3400, 64
        %v3446 = vpop.permute.xlu0 %3445
        %3447 = vrot.lane.b32.xlu0 %v3401, 64
        %v3448 = vpop.permute.xlu0 %3447
        %3449 = vrot.lane.b32.xlu0 %v3402, 64
        %v3450 = vpop.permute.xlu0 %3449
        %v3451 = vrot.slane %v3444, 1
        %v3452 = vrot.slane %v3446, 1
        %v3453 = vrot.slane %v3448, 1
        %v3454 = vrot.slane %v3450, 1
        %v3459 = vxor.u32 %v3451, 2147483648
        %v3460 = vxor.u32 %v3452, 2147483648
        %v3461 = vxor.u32 %v3453, 2147483648
        %v3462 = vxor.u32 %v3454, 2147483648
        %v3463 = vmul.f32 %v3459, 1.442695
        %v3464 = vpow.pop %v3463
        %v3465 = vmul.f32 %v3460, 1.442695
        %v3466 = vpow.pop %v3465
        %v3467 = vmul.f32 %v3461, 1.442695
        %v3468 = vpow.pop %v3467
        %v3469 = vmul.f32 %v3462, 1.442695
        %v3470 = vpow.pop %v3469
        %v3471 = vadd.f32 %v3464, 1.0
        %v3472 = vadd.f32 %v3466, 1.0
        %v3473 = vadd.f32 %v3468, 1.0
        %v3474 = vadd.f32 %v3470, 1.0
        %v3475 = vrcp.pop %v3471
        %v3476 = vmul.f32 1.0, %v3475
        %v3477 = vrcp.pop %v3472
        %v3478 = vmul.f32 1.0, %v3477
        %v3479 = vrcp.pop %v3473
        %v3480 = vmul.f32 1.0, %v3479
        %v3481 = vrcp.pop %v3474
        %v3482 = vmul.f32 1.0, %v3481
        %v3483 = vmul.f32 %v3420, %v3227
        %v3484 = vmul.f32 %v3422, %v3228
        %v3485 = vmul.f32 %v3424, %v3229
        %v3486 = vmul.f32 %v3426, %v3230
        %v3487 = vmul.f32 %v3420, %v3439
        %v3488 = vmul.f32 %v3422, %v3440
        %v3489 = vmul.f32 %v3424, %v3441
        %v3490 = vmul.f32 %v3426, %v3442
        %3495 = vrot.lane.b32.xlu0 %v3487, 64
        %v3496 = vpop.permute.xlu0 %3495
        %3497 = vrot.lane.b32.xlu0 %v3488, 64
        %v3498 = vpop.permute.xlu0 %3497
        %3499 = vrot.lane.b32.xlu0 %v3489, 64
        %v3500 = vpop.permute.xlu0 %3499
        %3501 = vrot.lane.b32.xlu0 %v3490, 64
        %v3502 = vpop.permute.xlu0 %3501
        %v3507 = vadd.f32 %v3483, %v3496
        %v3508 = vadd.f32 %v3484, %v3498
        %v3509 = vadd.f32 %v3485, %v3500
        %v3510 = vadd.f32 %v3486, %v3502
        %v3511 = vtanh.pop %v3507
        %v3512 = vtanh.pop %v3508
        %v3513 = vtanh.pop %v3509
        %v3514 = vtanh.pop %v3510
        %3519 = vrot.lane.b32.xlu0 %v3511, 64
        %v3520 = vpop.permute.xlu0 %3519
        %3521 = vrot.lane.b32.xlu0 %v3512, 64
        %v3522 = vpop.permute.xlu0 %3521
        %3523 = vrot.lane.b32.xlu0 %v3513, 64
        %v3524 = vpop.permute.xlu0 %3523
        %3525 = vrot.lane.b32.xlu0 %v3514, 64
        %v3526 = vpop.permute.xlu0 %3525
        %v3531 = vmul.f32 %v3476, %v3520
        %v3532 = vmul.f32 %v3478, %v3522
        %v3533 = vmul.f32 %v3480, %v3524
        %v3534 = vmul.f32 %v3482, %v3526
        %3535 = vst.msk [vmem:[#allocation5 + $0x9] sm:$0x1] %vm1014, %v3531
        %3536 = vst.msk [vmem:[#allocation5 + $0x19] sm:$0x1] %vm1014, %v3532
        %3537 = vst.msk [vmem:[#allocation5 + $0x29] sm:$0x1] %vm1014, %v3533
        %3538 = vst.msk [vmem:[#allocation5 + $0x39] sm:$0x1] %vm1014, %v3534
        %s3539 = scalar_lea.vmem [#allocation4], 18
        %v3540 = vld [vmem:[%s3539] ss:$8 sm:$0x3]
        %s3541 = scalar_lea.vmem [#allocation4], 50
        %v3542 = vld [vmem:[%s3541] ss:$8 sm:$0x3]
        %s3543 = scalar_lea.vmem [#allocation4], 82
        %v3544 = vld [vmem:[%s3543] ss:$8 sm:$0x3]
        %s3545 = scalar_lea.vmem [#allocation4], 114
        %v3546 = vld [vmem:[%s3545] ss:$8 sm:$0x3]
        %v3551 = vcombine.low %v3531, %v3532
        %v3552 = vcombine.low %v3533, %v3534
        %v3554 = vunpack.c.l.s4 1966171168
        %v3555 = vunpack.c.0.s8 %v3554
        %v3556 = vlaneseq
        %v3557 = vshrl.u32 %v3556, 7
        %v3558 = vsub.s32 %v3555, %v3557
        %v3559 = vrot.slane %v3551, %v3558
        %v3561 = vunpack.c.l.s4 1966171168
        %v3562 = vunpack.c.0.s8 %v3561
        %v3563 = vlaneseq
        %v3564 = vshrl.u32 %v3563, 7
        %v3565 = vsub.s32 %v3562, %v3564
        %v3566 = vrot.slane %v3552, %v3565
        %v3567 = vcombine.low %v3559, %v3566
        %v3569 = vunpack.c.l.s4 1966171168
        %v3570 = vunpack.c.0.s8 %v3569
        %v3571 = vlaneseq
        %v3572 = vshrl.u32 %v3571, 7
        %v3573 = vsub.s32 %v3570, %v3572
        %v3574 = vrot.slane %v3567, %v3573
        %v3575 = vsel %vm735, %v3574, 0
        %3577 = vmatprep.subr.mxu0 %v711
        %3578 = vmatpush1.msra.mxu0 %v710
        %3579 = vmatprep.subr.mxu0 %v713
        %3580 = vmatpush1.msra.mxu0 %v712
        %3581 = vmatprep.subr.mxu0 %v715
        %3582 = vmatpush1.msra.mxu0 %v714
        %3583 = vmatprep.subr.mxu0 %v717
        %3584 = vmatpush1.msra.mxu0 %v716
        %3585 = vmatprep.subr.mxu0 %v719
        %3586 = vmatpush1.msra.mxu0 %v718
        %3587 = vmatprep.subr.mxu0 %v721
        %3588 = vmatpush1.msra.mxu0 %v720
        %3589 = vmatprep.subr.mxu0 %v723
        %3590 = vmatpush1.msra.mxu0 %v722
        %3591 = vmatprep.subr.mxu0 %v725
        %3592 = vmatpush1.msra.mxu0 %v724
        %3593 = vmatprep.subr.mxu0 0.0
        %3594 = vmatpush1.msra.mxu0 0.0
        %3595 = vmatprep.subr.mxu0 0.0
        %3596 = vmatpush1.msra.mxu0 0.0
        %3597 = vmatprep.subr.mxu0 0.0
        %3598 = vmatpush1.msra.mxu0 0.0
        %3599 = vmatprep.subr.mxu0 0.0
        %3600 = vmatpush1.msra.mxu0 0.0
        %3601 = vmatprep.subr.mxu0 0.0
        %3602 = vmatpush1.msra.mxu0 0.0
        %3603 = vmatprep.subr.mxu0 0.0
        %3604 = vmatpush1.msra.mxu0 0.0
        %3605 = vmatprep.subr.mxu0 0.0
        %3606 = vmatpush1.msra.mxu0 0.0
        %3607 = vmatprep.subr.mxu0 0.0
        %3608 = vmatpush1.msra.mxu0 0.0
        %3609 = vmatprep.subr.mxu0 0.0
        %3610 = vmatpush1.msra.mxu0 0.0
        %3611 = vmatprep.subr.mxu0 0.0
        %3612 = vmatpush1.msra.mxu0 0.0
        %3613 = vmatprep.subr.mxu0 0.0
        %3614 = vmatpush1.msra.mxu0 0.0
        %3615 = vmatprep.subr.mxu0 0.0
        %3616 = vmatpush1.msra.mxu0 0.0
        %3617 = vmatprep.subr.mxu0 0.0
        %3618 = vmatpush1.msra.mxu0 0.0
        %3619 = vmatprep.subr.mxu0 0.0
        %3620 = vmatpush1.msra.mxu0 0.0
        %3621 = vmatprep.subr.mxu0 0.0
        %3622 = vmatpush1.msra.mxu0 0.0
        %3623 = vmatprep.subr.mxu0 0.0
        %3624 = vmatpush1.msra.mxu0 0.0
        %3625 = vmatprep.subr.mxu0 0.0
        %3626 = vmatpush1.msra.mxu0 0.0
        %3627 = vmatprep.subr.mxu0 0.0
        %3628 = vmatpush1.msra.mxu0 0.0
        %3629 = vmatprep.subr.mxu0 0.0
        %3630 = vmatpush1.msra.mxu0 0.0
        %3631 = vmatprep.subr.mxu0 0.0
        %3632 = vmatpush1.msra.mxu0 0.0
        %3633 = vmatprep.subr.mxu0 0.0
        %3634 = vmatpush1.msra.mxu0 0.0
        %3635 = vmatprep.subr.mxu0 0.0
        %3636 = vmatpush1.msra.mxu0 0.0
        %3637 = vmatprep.subr.mxu0 0.0
        %3638 = vmatpush1.msra.mxu0 0.0
        %3639 = vmatprep.subr.mxu0 0.0
        %3640 = vmatpush1.msra.mxu0 0.0
        %3641 = vmatprep.mubr.f32.mxu0 0.0
        %3642 = vmatmul.mubr.f32.gmra.mrb[0].mxu0 %v3575
        %v3643 = vpop.f32.mrb[0].mxu0
        %v3644 = vadd.f32 0.0, %v3643
        %v3645 = vpop.f32.mrb[0].mxu0
        %v3646 = vadd.f32 0.0, %v3645
        %3647 = vdwg.mxu0
        %v3650 = vcombine.low %v3644, %v3646
        %v3652 = vunpack.c.l.s4 1966171168
        %v3653 = vunpack.c.0.s8 %v3652
        %v3654 = vlaneseq
        %v3655 = vshrl.u32 %v3654, 7
        %v3656 = vsub.s32 %v3653, %v3655
        %v3657 = vrot.slane %v3650, %v3656
        %v3658 = vcombine.high %v3657, %v3657
        %v3660 = vunpack.c.l.s4 1966171168
        %v3661 = vunpack.c.0.s8 %v3660
        %v3662 = vlaneseq
        %v3663 = vshrl.u32 %v3662, 7
        %v3664 = vsub.s32 %v3661, %v3663
        %v3665 = vrot.slane %v3657, %v3664
        %v3667 = vunpack.c.l.s4 1966171168
        %v3668 = vunpack.c.0.s8 %v3667
        %v3669 = vlaneseq
        %v3670 = vshrl.u32 %v3669, 7
        %v3671 = vsub.s32 %v3668, %v3670
        %v3672 = vrot.slane %v3658, %v3671
        %v3673 = vcombine.high %v3665, %v3665
        %v3674 = vcombine.high %v3672, %v3672
        %v3679 = vadd.f32 %v3540, %v3665
        %v3680 = vadd.f32 %v3542, %v3672
        %v3681 = vadd.f32 %v3544, %v3673
        %v3682 = vadd.f32 %v3546, %v3674
        %v3683 = vxor.u32 %v3679, 2147483648
        %v3684 = vxor.u32 %v3680, 2147483648
        %v3685 = vxor.u32 %v3681, 2147483648
        %v3686 = vxor.u32 %v3682, 2147483648
        %v3687 = vmul.f32 %v3683, 1.442695
        %v3688 = vpow.pop %v3687
        %v3689 = vmul.f32 %v3684, 1.442695
        %v3690 = vpow.pop %v3689
        %v3691 = vmul.f32 %v3685, 1.442695
        %v3692 = vpow.pop %v3691
        %v3693 = vmul.f32 %v3686, 1.442695
        %v3694 = vpow.pop %v3693
        %v3695 = vadd.f32 %v3688, 1.0
        %v3696 = vadd.f32 %v3690, 1.0
        %v3697 = vadd.f32 %v3692, 1.0
        %v3698 = vadd.f32 %v3694, 1.0
        %v3699 = vrcp.pop %v3695
        %v3700 = vmul.f32 1.0, %v3699
        %v3701 = vrcp.pop %v3696
        %v3702 = vmul.f32 1.0, %v3701
        %v3703 = vrcp.pop %v3697
        %v3704 = vmul.f32 1.0, %v3703
        %v3705 = vrcp.pop %v3698
        %v3706 = vmul.f32 1.0, %v3705
        %v3711 = vrot.slane %v3679, 1
        %v3712 = vrot.slane %v3680, 1
        %v3713 = vrot.slane %v3681, 1
        %v3714 = vrot.slane %v3682, 1
        %v3719 = vtanh.pop %v3711
        %v3720 = vtanh.pop %v3712
        %v3721 = vtanh.pop %v3713
        %v3722 = vtanh.pop %v3714
        %3723 = vrot.lane.b32.xlu0 %v3679, 64
        %v3724 = vpop.permute.xlu0 %3723
        %3725 = vrot.lane.b32.xlu0 %v3680, 64
        %v3726 = vpop.permute.xlu0 %3725
        %3727 = vrot.lane.b32.xlu0 %v3681, 64
        %v3728 = vpop.permute.xlu0 %3727
        %3729 = vrot.lane.b32.xlu0 %v3682, 64
        %v3730 = vpop.permute.xlu0 %3729
        %v3731 = vrot.slane %v3724, 1
        %v3732 = vrot.slane %v3726, 1
        %v3733 = vrot.slane %v3728, 1
        %v3734 = vrot.slane %v3730, 1
        %v3739 = vxor.u32 %v3731, 2147483648
        %v3740 = vxor.u32 %v3732, 2147483648
        %v3741 = vxor.u32 %v3733, 2147483648
        %v3742 = vxor.u32 %v3734, 2147483648
        %v3743 = vmul.f32 %v3739, 1.442695
        %v3744 = vpow.pop %v3743
        %v3745 = vmul.f32 %v3740, 1.442695
        %v3746 = vpow.pop %v3745
        %v3747 = vmul.f32 %v3741, 1.442695
        %v3748 = vpow.pop %v3747
        %v3749 = vmul.f32 %v3742, 1.442695
        %v3750 = vpow.pop %v3749
        %v3751 = vadd.f32 %v3744, 1.0
        %v3752 = vadd.f32 %v3746, 1.0
        %v3753 = vadd.f32 %v3748, 1.0
        %v3754 = vadd.f32 %v3750, 1.0
        %v3755 = vrcp.pop %v3751
        %v3756 = vmul.f32 1.0, %v3755
        %v3757 = vrcp.pop %v3752
        %v3758 = vmul.f32 1.0, %v3757
        %v3759 = vrcp.pop %v3753
        %v3760 = vmul.f32 1.0, %v3759
        %v3761 = vrcp.pop %v3754
        %v3762 = vmul.f32 1.0, %v3761
        %v3763 = vmul.f32 %v3700, %v3507
        %v3764 = vmul.f32 %v3702, %v3508
        %v3765 = vmul.f32 %v3704, %v3509
        %v3766 = vmul.f32 %v3706, %v3510
        %v3767 = vmul.f32 %v3700, %v3719
        %v3768 = vmul.f32 %v3702, %v3720
        %v3769 = vmul.f32 %v3704, %v3721
        %v3770 = vmul.f32 %v3706, %v3722
        %3775 = vrot.lane.b32.xlu0 %v3767, 64
        %v3776 = vpop.permute.xlu0 %3775
        %3777 = vrot.lane.b32.xlu0 %v3768, 64
        %v3778 = vpop.permute.xlu0 %3777
        %3779 = vrot.lane.b32.xlu0 %v3769, 64
        %v3780 = vpop.permute.xlu0 %3779
        %3781 = vrot.lane.b32.xlu0 %v3770, 64
        %v3782 = vpop.permute.xlu0 %3781
        %v3787 = vadd.f32 %v3763, %v3776
        %v3788 = vadd.f32 %v3764, %v3778
        %v3789 = vadd.f32 %v3765, %v3780
        %v3790 = vadd.f32 %v3766, %v3782
        %v3791 = vtanh.pop %v3787
        %v3792 = vtanh.pop %v3788
        %v3793 = vtanh.pop %v3789
        %v3794 = vtanh.pop %v3790
        %3799 = vrot.lane.b32.xlu0 %v3791, 64
        %v3800 = vpop.permute.xlu0 %3799
        %3801 = vrot.lane.b32.xlu0 %v3792, 64
        %v3802 = vpop.permute.xlu0 %3801
        %3803 = vrot.lane.b32.xlu0 %v3793, 64
        %v3804 = vpop.permute.xlu0 %3803
        %3805 = vrot.lane.b32.xlu0 %v3794, 64
        %v3806 = vpop.permute.xlu0 %3805
        %v3811 = vmul.f32 %v3756, %v3800
        %v3812 = vmul.f32 %v3758, %v3802
        %v3813 = vmul.f32 %v3760, %v3804
        %v3814 = vmul.f32 %v3762, %v3806
        %3815 = vst.msk [vmem:[#allocation5 + $0xa] sm:$0x1] %vm1014, %v3811
        %3816 = vst.msk [vmem:[#allocation5 + $0x1a] sm:$0x1] %vm1014, %v3812
        %3817 = vst.msk [vmem:[#allocation5 + $0x2a] sm:$0x1] %vm1014, %v3813
        %3818 = vst.msk [vmem:[#allocation5 + $0x3a] sm:$0x1] %vm1014, %v3814
        %s3819 = scalar_lea.vmem [#allocation4], 19
        %v3820 = vld [vmem:[%s3819] ss:$8 sm:$0x3]
        %s3821 = scalar_lea.vmem [#allocation4], 51
        %v3822 = vld [vmem:[%s3821] ss:$8 sm:$0x3]
        %s3823 = scalar_lea.vmem [#allocation4], 83
        %v3824 = vld [vmem:[%s3823] ss:$8 sm:$0x3]
        %s3825 = scalar_lea.vmem [#allocation4], 115
        %v3826 = vld [vmem:[%s3825] ss:$8 sm:$0x3]
        %v3831 = vcombine.low %v3811, %v3812
        %v3832 = vcombine.low %v3813, %v3814
        %v3834 = vunpack.c.l.s4 1966171168
        %v3835 = vunpack.c.0.s8 %v3834
        %v3836 = vlaneseq
        %v3837 = vshrl.u32 %v3836, 7
        %v3838 = vsub.s32 %v3835, %v3837
        %v3839 = vrot.slane %v3831, %v3838
        %v3841 = vunpack.c.l.s4 1966171168
        %v3842 = vunpack.c.0.s8 %v3841
        %v3843 = vlaneseq
        %v3844 = vshrl.u32 %v3843, 7
        %v3845 = vsub.s32 %v3842, %v3844
        %v3846 = vrot.slane %v3832, %v3845
        %v3847 = vcombine.low %v3839, %v3846
        %v3849 = vunpack.c.l.s4 1966171168
        %v3850 = vunpack.c.0.s8 %v3849
        %v3851 = vlaneseq
        %v3852 = vshrl.u32 %v3851, 7
        %v3853 = vsub.s32 %v3850, %v3852
        %v3854 = vrot.slane %v3847, %v3853
        %v3855 = vsel %vm735, %v3854, 0
        %3857 = vmatprep.subr.mxu0 %v711
        %3858 = vmatpush1.msra.mxu0 %v710
        %3859 = vmatprep.subr.mxu0 %v713
        %3860 = vmatpush1.msra.mxu0 %v712
        %3861 = vmatprep.subr.mxu0 %v715
        %3862 = vmatpush1.msra.mxu0 %v714
        %3863 = vmatprep.subr.mxu0 %v717
        %3864 = vmatpush1.msra.mxu0 %v716
        %3865 = vmatprep.subr.mxu0 %v719
        %3866 = vmatpush1.msra.mxu0 %v718
        %3867 = vmatprep.subr.mxu0 %v721
        %3868 = vmatpush1.msra.mxu0 %v720
        %3869 = vmatprep.subr.mxu0 %v723
        %3870 = vmatpush1.msra.mxu0 %v722
        %3871 = vmatprep.subr.mxu0 %v725
        %3872 = vmatpush1.msra.mxu0 %v724
        %3873 = vmatprep.subr.mxu0 0.0
        %3874 = vmatpush1.msra.mxu0 0.0
        %3875 = vmatprep.subr.mxu0 0.0
        %3876 = vmatpush1.msra.mxu0 0.0
        %3877 = vmatprep.subr.mxu0 0.0
        %3878 = vmatpush1.msra.mxu0 0.0
        %3879 = vmatprep.subr.mxu0 0.0
        %3880 = vmatpush1.msra.mxu0 0.0
        %3881 = vmatprep.subr.mxu0 0.0
        %3882 = vmatpush1.msra.mxu0 0.0
        %3883 = vmatprep.subr.mxu0 0.0
        %3884 = vmatpush1.msra.mxu0 0.0
        %3885 = vmatprep.subr.mxu0 0.0
        %3886 = vmatpush1.msra.mxu0 0.0
        %3887 = vmatprep.subr.mxu0 0.0
        %3888 = vmatpush1.msra.mxu0 0.0
        %3889 = vmatprep.subr.mxu0 0.0
        %3890 = vmatpush1.msra.mxu0 0.0
        %3891 = vmatprep.subr.mxu0 0.0
        %3892 = vmatpush1.msra.mxu0 0.0
        %3893 = vmatprep.subr.mxu0 0.0
        %3894 = vmatpush1.msra.mxu0 0.0
        %3895 = vmatprep.subr.mxu0 0.0
        %3896 = vmatpush1.msra.mxu0 0.0
        %3897 = vmatprep.subr.mxu0 0.0
        %3898 = vmatpush1.msra.mxu0 0.0
        %3899 = vmatprep.subr.mxu0 0.0
        %3900 = vmatpush1.msra.mxu0 0.0
        %3901 = vmatprep.subr.mxu0 0.0
        %3902 = vmatpush1.msra.mxu0 0.0
        %3903 = vmatprep.subr.mxu0 0.0
        %3904 = vmatpush1.msra.mxu0 0.0
        %3905 = vmatprep.subr.mxu0 0.0
        %3906 = vmatpush1.msra.mxu0 0.0
        %3907 = vmatprep.subr.mxu0 0.0
        %3908 = vmatpush1.msra.mxu0 0.0
        %3909 = vmatprep.subr.mxu0 0.0
        %3910 = vmatpush1.msra.mxu0 0.0
        %3911 = vmatprep.subr.mxu0 0.0
        %3912 = vmatpush1.msra.mxu0 0.0
        %3913 = vmatprep.subr.mxu0 0.0
        %3914 = vmatpush1.msra.mxu0 0.0
        %3915 = vmatprep.subr.mxu0 0.0
        %3916 = vmatpush1.msra.mxu0 0.0
        %3917 = vmatprep.subr.mxu0 0.0
        %3918 = vmatpush1.msra.mxu0 0.0
        %3919 = vmatprep.subr.mxu0 0.0
        %3920 = vmatpush1.msra.mxu0 0.0
        %3921 = vmatprep.mubr.f32.mxu0 0.0
        %3922 = vmatmul.mubr.f32.gmra.mrb[0].mxu0 %v3855
        %v3923 = vpop.f32.mrb[0].mxu0
        %v3924 = vadd.f32 0.0, %v3923
        %v3925 = vpop.f32.mrb[0].mxu0
        %v3926 = vadd.f32 0.0, %v3925
        %3927 = vdwg.mxu0
        %v3930 = vcombine.low %v3924, %v3926
        %v3932 = vunpack.c.l.s4 1966171168
        %v3933 = vunpack.c.0.s8 %v3932
        %v3934 = vlaneseq
        %v3935 = vshrl.u32 %v3934, 7
        %v3936 = vsub.s32 %v3933, %v3935
        %v3937 = vrot.slane %v3930, %v3936
        %v3938 = vcombine.high %v3937, %v3937
        %v3940 = vunpack.c.l.s4 1966171168
        %v3941 = vunpack.c.0.s8 %v3940
        %v3942 = vlaneseq
        %v3943 = vshrl.u32 %v3942, 7
        %v3944 = vsub.s32 %v3941, %v3943
        %v3945 = vrot.slane %v3937, %v3944
        %v3947 = vunpack.c.l.s4 1966171168
        %v3948 = vunpack.c.0.s8 %v3947
        %v3949 = vlaneseq
        %v3950 = vshrl.u32 %v3949, 7
        %v3951 = vsub.s32 %v3948, %v3950
        %v3952 = vrot.slane %v3938, %v3951
        %v3953 = vcombine.high %v3945, %v3945
        %v3954 = vcombine.high %v3952, %v3952
        %v3959 = vadd.f32 %v3820, %v3945
        %v3960 = vadd.f32 %v3822, %v3952
        %v3961 = vadd.f32 %v3824, %v3953
        %v3962 = vadd.f32 %v3826, %v3954
        %v3963 = vxor.u32 %v3959, 2147483648
        %v3964 = vxor.u32 %v3960, 2147483648
        %v3965 = vxor.u32 %v3961, 2147483648
        %v3966 = vxor.u32 %v3962, 2147483648
        %v3967 = vmul.f32 %v3963, 1.442695
        %v3968 = vpow.pop %v3967
        %v3969 = vmul.f32 %v3964, 1.442695
        %v3970 = vpow.pop %v3969
        %v3971 = vmul.f32 %v3965, 1.442695
        %v3972 = vpow.pop %v3971
        %v3973 = vmul.f32 %v3966, 1.442695
        %v3974 = vpow.pop %v3973
        %v3975 = vadd.f32 %v3968, 1.0
        %v3976 = vadd.f32 %v3970, 1.0
        %v3977 = vadd.f32 %v3972, 1.0
        %v3978 = vadd.f32 %v3974, 1.0
        %v3979 = vrcp.pop %v3975
        %v3980 = vmul.f32 1.0, %v3979
        %v3981 = vrcp.pop %v3976
        %v3982 = vmul.f32 1.0, %v3981
        %v3983 = vrcp.pop %v3977
        %v3984 = vmul.f32 1.0, %v3983
        %v3985 = vrcp.pop %v3978
        %v3986 = vmul.f32 1.0, %v3985
        %v3991 = vrot.slane %v3959, 1
        %v3992 = vrot.slane %v3960, 1
        %v3993 = vrot.slane %v3961, 1
        %v3994 = vrot.slane %v3962, 1
        %v3999 = vtanh.pop %v3991
        %v4000 = vtanh.pop %v3992
        %v4001 = vtanh.pop %v3993
        %v4002 = vtanh.pop %v3994
        %4003 = vrot.lane.b32.xlu0 %v3959, 64
        %v4004 = vpop.permute.xlu0 %4003
        %4005 = vrot.lane.b32.xlu0 %v3960, 64
        %v4006 = vpop.permute.xlu0 %4005
        %4007 = vrot.lane.b32.xlu0 %v3961, 64
        %v4008 = vpop.permute.xlu0 %4007
        %4009 = vrot.lane.b32.xlu0 %v3962, 64
        %v4010 = vpop.permute.xlu0 %4009
        %v4011 = vrot.slane %v4004, 1
        %v4012 = vrot.slane %v4006, 1
        %v4013 = vrot.slane %v4008, 1
        %v4014 = vrot.slane %v4010, 1
        %v4019 = vxor.u32 %v4011, 2147483648
        %v4020 = vxor.u32 %v4012, 2147483648
        %v4021 = vxor.u32 %v4013, 2147483648
        %v4022 = vxor.u32 %v4014, 2147483648
        %v4023 = vmul.f32 %v4019, 1.442695
        %v4024 = vpow.pop %v4023
        %v4025 = vmul.f32 %v4020, 1.442695
        %v4026 = vpow.pop %v4025
        %v4027 = vmul.f32 %v4021, 1.442695
        %v4028 = vpow.pop %v4027
        %v4029 = vmul.f32 %v4022, 1.442695
        %v4030 = vpow.pop %v4029
        %v4031 = vadd.f32 %v4024, 1.0
        %v4032 = vadd.f32 %v4026, 1.0
        %v4033 = vadd.f32 %v4028, 1.0
        %v4034 = vadd.f32 %v4030, 1.0
        %v4035 = vrcp.pop %v4031
        %v4036 = vmul.f32 1.0, %v4035
        %v4037 = vrcp.pop %v4032
        %v4038 = vmul.f32 1.0, %v4037
        %v4039 = vrcp.pop %v4033
        %v4040 = vmul.f32 1.0, %v4039
        %v4041 = vrcp.pop %v4034
        %v4042 = vmul.f32 1.0, %v4041
        %v4043 = vmul.f32 %v3980, %v3787
        %v4044 = vmul.f32 %v3982, %v3788
        %v4045 = vmul.f32 %v3984, %v3789
        %v4046 = vmul.f32 %v3986, %v3790
        %v4047 = vmul.f32 %v3980, %v3999
        %v4048 = vmul.f32 %v3982, %v4000
        %v4049 = vmul.f32 %v3984, %v4001
        %v4050 = vmul.f32 %v3986, %v4002
        %4055 = vrot.lane.b32.xlu0 %v4047, 64
        %v4056 = vpop.permute.xlu0 %4055
        %4057 = vrot.lane.b32.xlu0 %v4048, 64
        %v4058 = vpop.permute.xlu0 %4057
        %4059 = vrot.lane.b32.xlu0 %v4049, 64
        %v4060 = vpop.permute.xlu0 %4059
        %4061 = vrot.lane.b32.xlu0 %v4050, 64
        %v4062 = vpop.permute.xlu0 %4061
        %v4067 = vadd.f32 %v4043, %v4056
        %v4068 = vadd.f32 %v4044, %v4058
        %v4069 = vadd.f32 %v4045, %v4060
        %v4070 = vadd.f32 %v4046, %v4062
        %v4071 = vtanh.pop %v4067
        %v4072 = vtanh.pop %v4068
        %v4073 = vtanh.pop %v4069
        %v4074 = vtanh.pop %v4070
        %4079 = vrot.lane.b32.xlu0 %v4071, 64
        %v4080 = vpop.permute.xlu0 %4079
        %4081 = vrot.lane.b32.xlu0 %v4072, 64
        %v4082 = vpop.permute.xlu0 %4081
        %4083 = vrot.lane.b32.xlu0 %v4073, 64
        %v4084 = vpop.permute.xlu0 %4083
        %4085 = vrot.lane.b32.xlu0 %v4074, 64
        %v4086 = vpop.permute.xlu0 %4085
        %v4091 = vmul.f32 %v4036, %v4080
        %v4092 = vmul.f32 %v4038, %v4082
        %v4093 = vmul.f32 %v4040, %v4084
        %v4094 = vmul.f32 %v4042, %v4086
        %4095 = vst.msk [vmem:[#allocation5 + $0xb] sm:$0x1] %vm1014, %v4091
        %4096 = vst.msk [vmem:[#allocation5 + $0x1b] sm:$0x1] %vm1014, %v4092
        %4097 = vst.msk [vmem:[#allocation5 + $0x2b] sm:$0x1] %vm1014, %v4093
        %4098 = vst.msk [vmem:[#allocation5 + $0x3b] sm:$0x1] %vm1014, %v4094
        %s4099 = scalar_lea.vmem [#allocation4], 20
        %v4100 = vld [vmem:[%s4099] ss:$8 sm:$0x3]
        %s4101 = scalar_lea.vmem [#allocation4], 52
        %v4102 = vld [vmem:[%s4101] ss:$8 sm:$0x3]
        %s4103 = scalar_lea.vmem [#allocation4], 84
        %v4104 = vld [vmem:[%s4103] ss:$8 sm:$0x3]
        %s4105 = scalar_lea.vmem [#allocation4], 116
        %v4106 = vld [vmem:[%s4105] ss:$8 sm:$0x3]
        %v4111 = vcombine.low %v4091, %v4092
        %v4112 = vcombine.low %v4093, %v4094
        %v4114 = vunpack.c.l.s4 1966171168
        %v4115 = vunpack.c.0.s8 %v4114
        %v4116 = vlaneseq
        %v4117 = vshrl.u32 %v4116, 7
        %v4118 = vsub.s32 %v4115, %v4117
        %v4119 = vrot.slane %v4111, %v4118
        %v4121 = vunpack.c.l.s4 1966171168
        %v4122 = vunpack.c.0.s8 %v4121
        %v4123 = vlaneseq
        %v4124 = vshrl.u32 %v4123, 7
        %v4125 = vsub.s32 %v4122, %v4124
        %v4126 = vrot.slane %v4112, %v4125
        %v4127 = vcombine.low %v4119, %v4126
        %v4129 = vunpack.c.l.s4 1966171168
        %v4130 = vunpack.c.0.s8 %v4129
        %v4131 = vlaneseq
        %v4132 = vshrl.u32 %v4131, 7
        %v4133 = vsub.s32 %v4130, %v4132
        %v4134 = vrot.slane %v4127, %v4133
        %v4135 = vsel %vm735, %v4134, 0
        %4137 = vmatprep.subr.mxu0 %v711
        %4138 = vmatpush1.msra.mxu0 %v710
        %4139 = vmatprep.subr.mxu0 %v713
        %4140 = vmatpush1.msra.mxu0 %v712
        %4141 = vmatprep.subr.mxu0 %v715
        %4142 = vmatpush1.msra.mxu0 %v714
        %4143 = vmatprep.subr.mxu0 %v717
        %4144 = vmatpush1.msra.mxu0 %v716
        %4145 = vmatprep.subr.mxu0 %v719
        %4146 = vmatpush1.msra.mxu0 %v718
        %4147 = vmatprep.subr.mxu0 %v721
        %4148 = vmatpush1.msra.mxu0 %v720
        %4149 = vmatprep.subr.mxu0 %v723
        %4150 = vmatpush1.msra.mxu0 %v722
        %4151 = vmatprep.subr.mxu0 %v725
        %4152 = vmatpush1.msra.mxu0 %v724
        %4153 = vmatprep.subr.mxu0 0.0
        %4154 = vmatpush1.msra.mxu0 0.0
        %4155 = vmatprep.subr.mxu0 0.0
        %4156 = vmatpush1.msra.mxu0 0.0
        %4157 = vmatprep.subr.mxu0 0.0
        %4158 = vmatpush1.msra.mxu0 0.0
        %4159 = vmatprep.subr.mxu0 0.0
        %4160 = vmatpush1.msra.mxu0 0.0
        %4161 = vmatprep.subr.mxu0 0.0
        %4162 = vmatpush1.msra.mxu0 0.0
        %4163 = vmatprep.subr.mxu0 0.0
        %4164 = vmatpush1.msra.mxu0 0.0
        %4165 = vmatprep.subr.mxu0 0.0
        %4166 = vmatpush1.msra.mxu0 0.0
        %4167 = vmatprep.subr.mxu0 0.0
        %4168 = vmatpush1.msra.mxu0 0.0
        %4169 = vmatprep.subr.mxu0 0.0
        %4170 = vmatpush1.msra.mxu0 0.0
        %4171 = vmatprep.subr.mxu0 0.0
        %4172 = vmatpush1.msra.mxu0 0.0
        %4173 = vmatprep.subr.mxu0 0.0
        %4174 = vmatpush1.msra.mxu0 0.0
        %4175 = vmatprep.subr.mxu0 0.0
        %4176 = vmatpush1.msra.mxu0 0.0
        %4177 = vmatprep.subr.mxu0 0.0
        %4178 = vmatpush1.msra.mxu0 0.0
        %4179 = vmatprep.subr.mxu0 0.0
        %4180 = vmatpush1.msra.mxu0 0.0
        %4181 = vmatprep.subr.mxu0 0.0
        %4182 = vmatpush1.msra.mxu0 0.0
        %4183 = vmatprep.subr.mxu0 0.0
        %4184 = vmatpush1.msra.mxu0 0.0
        %4185 = vmatprep.subr.mxu0 0.0
        %4186 = vmatpush1.msra.mxu0 0.0
        %4187 = vmatprep.subr.mxu0 0.0
        %4188 = vmatpush1.msra.mxu0 0.0
        %4189 = vmatprep.subr.mxu0 0.0
        %4190 = vmatpush1.msra.mxu0 0.0
        %4191 = vmatprep.subr.mxu0 0.0
        %4192 = vmatpush1.msra.mxu0 0.0
        %4193 = vmatprep.subr.mxu0 0.0
        %4194 = vmatpush1.msra.mxu0 0.0
        %4195 = vmatprep.subr.mxu0 0.0
        %4196 = vmatpush1.msra.mxu0 0.0
        %4197 = vmatprep.subr.mxu0 0.0
        %4198 = vmatpush1.msra.mxu0 0.0
        %4199 = vmatprep.subr.mxu0 0.0
        %4200 = vmatpush1.msra.mxu0 0.0
        %4201 = vmatprep.mubr.f32.mxu0 0.0
        %4202 = vmatmul.mubr.f32.gmra.mrb[0].mxu0 %v4135
        %v4203 = vpop.f32.mrb[0].mxu0
        %v4204 = vadd.f32 0.0, %v4203
        %v4205 = vpop.f32.mrb[0].mxu0
        %v4206 = vadd.f32 0.0, %v4205
        %4207 = vdwg.mxu0
        %v4210 = vcombine.low %v4204, %v4206
        %v4212 = vunpack.c.l.s4 1966171168
        %v4213 = vunpack.c.0.s8 %v4212
        %v4214 = vlaneseq
        %v4215 = vshrl.u32 %v4214, 7
        %v4216 = vsub.s32 %v4213, %v4215
        %v4217 = vrot.slane %v4210, %v4216
        %v4218 = vcombine.high %v4217, %v4217
        %v4220 = vunpack.c.l.s4 1966171168
        %v4221 = vunpack.c.0.s8 %v4220
        %v4222 = vlaneseq
        %v4223 = vshrl.u32 %v4222, 7
        %v4224 = vsub.s32 %v4221, %v4223
        %v4225 = vrot.slane %v4217, %v4224
        %v4227 = vunpack.c.l.s4 1966171168
        %v4228 = vunpack.c.0.s8 %v4227
        %v4229 = vlaneseq
        %v4230 = vshrl.u32 %v4229, 7
        %v4231 = vsub.s32 %v4228, %v4230
        %v4232 = vrot.slane %v4218, %v4231
        %v4233 = vcombine.high %v4225, %v4225
        %v4234 = vcombine.high %v4232, %v4232
        %v4239 = vadd.f32 %v4100, %v4225
        %v4240 = vadd.f32 %v4102, %v4232
        %v4241 = vadd.f32 %v4104, %v4233
        %v4242 = vadd.f32 %v4106, %v4234
        %v4243 = vxor.u32 %v4239, 2147483648
        %v4244 = vxor.u32 %v4240, 2147483648
        %v4245 = vxor.u32 %v4241, 2147483648
        %v4246 = vxor.u32 %v4242, 2147483648
        %v4247 = vmul.f32 %v4243, 1.442695
        %v4248 = vpow.pop %v4247
        %v4249 = vmul.f32 %v4244, 1.442695
        %v4250 = vpow.pop %v4249
        %v4251 = vmul.f32 %v4245, 1.442695
        %v4252 = vpow.pop %v4251
        %v4253 = vmul.f32 %v4246, 1.442695
        %v4254 = vpow.pop %v4253
        %v4255 = vadd.f32 %v4248, 1.0
        %v4256 = vadd.f32 %v4250, 1.0
        %v4257 = vadd.f32 %v4252, 1.0
        %v4258 = vadd.f32 %v4254, 1.0
        %v4259 = vrcp.pop %v4255
        %v4260 = vmul.f32 1.0, %v4259
        %v4261 = vrcp.pop %v4256
        %v4262 = vmul.f32 1.0, %v4261
        %v4263 = vrcp.pop %v4257
        %v4264 = vmul.f32 1.0, %v4263
        %v4265 = vrcp.pop %v4258
        %v4266 = vmul.f32 1.0, %v4265
        %v4271 = vrot.slane %v4239, 1
        %v4272 = vrot.slane %v4240, 1
        %v4273 = vrot.slane %v4241, 1
        %v4274 = vrot.slane %v4242, 1
        %v4279 = vtanh.pop %v4271
        %v4280 = vtanh.pop %v4272
        %v4281 = vtanh.pop %v4273
        %v4282 = vtanh.pop %v4274
        %4283 = vrot.lane.b32.xlu0 %v4239, 64
        %v4284 = vpop.permute.xlu0 %4283
        %4285 = vrot.lane.b32.xlu0 %v4240, 64
        %v4286 = vpop.permute.xlu0 %4285
        %4287 = vrot.lane.b32.xlu0 %v4241, 64
        %v4288 = vpop.permute.xlu0 %4287
        %4289 = vrot.lane.b32.xlu0 %v4242, 64
        %v4290 = vpop.permute.xlu0 %4289
        %v4291 = vrot.slane %v4284, 1
        %v4292 = vrot.slane %v4286, 1
        %v4293 = vrot.slane %v4288, 1
        %v4294 = vrot.slane %v4290, 1
        %v4299 = vxor.u32 %v4291, 2147483648
        %v4300 = vxor.u32 %v4292, 2147483648
        %v4301 = vxor.u32 %v4293, 2147483648
        %v4302 = vxor.u32 %v4294, 2147483648
        %v4303 = vmul.f32 %v4299, 1.442695
        %v4304 = vpow.pop %v4303
        %v4305 = vmul.f32 %v4300, 1.442695
        %v4306 = vpow.pop %v4305
        %v4307 = vmul.f32 %v4301, 1.442695
        %v4308 = vpow.pop %v4307
        %v4309 = vmul.f32 %v4302, 1.442695
        %v4310 = vpow.pop %v4309
        %v4311 = vadd.f32 %v4304, 1.0
        %v4312 = vadd.f32 %v4306, 1.0
        %v4313 = vadd.f32 %v4308, 1.0
        %v4314 = vadd.f32 %v4310, 1.0
        %v4315 = vrcp.pop %v4311
        %v4316 = vmul.f32 1.0, %v4315
        %v4317 = vrcp.pop %v4312
        %v4318 = vmul.f32 1.0, %v4317
        %v4319 = vrcp.pop %v4313
        %v4320 = vmul.f32 1.0, %v4319
        %v4321 = vrcp.pop %v4314
        %v4322 = vmul.f32 1.0, %v4321
        %v4323 = vmul.f32 %v4260, %v4067
        %v4324 = vmul.f32 %v4262, %v4068
        %v4325 = vmul.f32 %v4264, %v4069
        %v4326 = vmul.f32 %v4266, %v4070
        %v4327 = vmul.f32 %v4260, %v4279
        %v4328 = vmul.f32 %v4262, %v4280
        %v4329 = vmul.f32 %v4264, %v4281
        %v4330 = vmul.f32 %v4266, %v4282
        %4335 = vrot.lane.b32.xlu0 %v4327, 64
        %v4336 = vpop.permute.xlu0 %4335
        %4337 = vrot.lane.b32.xlu0 %v4328, 64
        %v4338 = vpop.permute.xlu0 %4337
        %4339 = vrot.lane.b32.xlu0 %v4329, 64
        %v4340 = vpop.permute.xlu0 %4339
        %4341 = vrot.lane.b32.xlu0 %v4330, 64
        %v4342 = vpop.permute.xlu0 %4341
        %v4347 = vadd.f32 %v4323, %v4336
        %v4348 = vadd.f32 %v4324, %v4338
        %v4349 = vadd.f32 %v4325, %v4340
        %v4350 = vadd.f32 %v4326, %v4342
        %v4351 = vtanh.pop %v4347
        %v4352 = vtanh.pop %v4348
        %v4353 = vtanh.pop %v4349
        %v4354 = vtanh.pop %v4350
        %4359 = vrot.lane.b32.xlu0 %v4351, 64
        %v4360 = vpop.permute.xlu0 %4359
        %4361 = vrot.lane.b32.xlu0 %v4352, 64
        %v4362 = vpop.permute.xlu0 %4361
        %4363 = vrot.lane.b32.xlu0 %v4353, 64
        %v4364 = vpop.permute.xlu0 %4363
        %4365 = vrot.lane.b32.xlu0 %v4354, 64
        %v4366 = vpop.permute.xlu0 %4365
        %v4371 = vmul.f32 %v4316, %v4360
        %v4372 = vmul.f32 %v4318, %v4362
        %v4373 = vmul.f32 %v4320, %v4364
        %v4374 = vmul.f32 %v4322, %v4366
        %4375 = vst.msk [vmem:[#allocation5 + $0xc] sm:$0x1] %vm1014, %v4371
        %4376 = vst.msk [vmem:[#allocation5 + $0x1c] sm:$0x1] %vm1014, %v4372
        %4377 = vst.msk [vmem:[#allocation5 + $0x2c] sm:$0x1] %vm1014, %v4373
        %4378 = vst.msk [vmem:[#allocation5 + $0x3c] sm:$0x1] %vm1014, %v4374
        %s4379 = scalar_lea.vmem [#allocation4], 21
        %v4380 = vld [vmem:[%s4379] ss:$8 sm:$0x3]
        %s4381 = scalar_lea.vmem [#allocation4], 53
        %v4382 = vld [vmem:[%s4381] ss:$8 sm:$0x3]
        %s4383 = scalar_lea.vmem [#allocation4], 85
        %v4384 = vld [vmem:[%s4383] ss:$8 sm:$0x3]
        %s4385 = scalar_lea.vmem [#allocation4], 117
        %v4386 = vld [vmem:[%s4385] ss:$8 sm:$0x3]
        %v4391 = vcombine.low %v4371, %v4372
        %v4392 = vcombine.low %v4373, %v4374
        %v4394 = vunpack.c.l.s4 1966171168
        %v4395 = vunpack.c.0.s8 %v4394
        %v4396 = vlaneseq
        %v4397 = vshrl.u32 %v4396, 7
        %v4398 = vsub.s32 %v4395, %v4397
        %v4399 = vrot.slane %v4391, %v4398
        %v4401 = vunpack.c.l.s4 1966171168
        %v4402 = vunpack.c.0.s8 %v4401
        %v4403 = vlaneseq
        %v4404 = vshrl.u32 %v4403, 7
        %v4405 = vsub.s32 %v4402, %v4404
        %v4406 = vrot.slane %v4392, %v4405
        %v4407 = vcombine.low %v4399, %v4406
        %v4409 = vunpack.c.l.s4 1966171168
        %v4410 = vunpack.c.0.s8 %v4409
        %v4411 = vlaneseq
        %v4412 = vshrl.u32 %v4411, 7
        %v4413 = vsub.s32 %v4410, %v4412
        %v4414 = vrot.slane %v4407, %v4413
        %v4415 = vsel %vm735, %v4414, 0
        %4417 = vmatprep.subr.mxu0 %v711
        %4418 = vmatpush1.msra.mxu0 %v710
        %4419 = vmatprep.subr.mxu0 %v713
        %4420 = vmatpush1.msra.mxu0 %v712
        %4421 = vmatprep.subr.mxu0 %v715
        %4422 = vmatpush1.msra.mxu0 %v714
        %4423 = vmatprep.subr.mxu0 %v717
        %4424 = vmatpush1.msra.mxu0 %v716
        %4425 = vmatprep.subr.mxu0 %v719
        %4426 = vmatpush1.msra.mxu0 %v718
        %4427 = vmatprep.subr.mxu0 %v721
        %4428 = vmatpush1.msra.mxu0 %v720
        %4429 = vmatprep.subr.mxu0 %v723
        %4430 = vmatpush1.msra.mxu0 %v722
        %4431 = vmatprep.subr.mxu0 %v725
        %4432 = vmatpush1.msra.mxu0 %v724
        %4433 = vmatprep.subr.mxu0 0.0
        %4434 = vmatpush1.msra.mxu0 0.0
        %4435 = vmatprep.subr.mxu0 0.0
        %4436 = vmatpush1.msra.mxu0 0.0
        %4437 = vmatprep.subr.mxu0 0.0
        %4438 = vmatpush1.msra.mxu0 0.0
        %4439 = vmatprep.subr.mxu0 0.0
        %4440 = vmatpush1.msra.mxu0 0.0
        %4441 = vmatprep.subr.mxu0 0.0
        %4442 = vmatpush1.msra.mxu0 0.0
        %4443 = vmatprep.subr.mxu0 0.0
        %4444 = vmatpush1.msra.mxu0 0.0
        %4445 = vmatprep.subr.mxu0 0.0
        %4446 = vmatpush1.msra.mxu0 0.0
        %4447 = vmatprep.subr.mxu0 0.0
        %4448 = vmatpush1.msra.mxu0 0.0
        %4449 = vmatprep.subr.mxu0 0.0
        %4450 = vmatpush1.msra.mxu0 0.0
        %4451 = vmatprep.subr.mxu0 0.0
        %4452 = vmatpush1.msra.mxu0 0.0
        %4453 = vmatprep.subr.mxu0 0.0
        %4454 = vmatpush1.msra.mxu0 0.0
        %4455 = vmatprep.subr.mxu0 0.0
        %4456 = vmatpush1.msra.mxu0 0.0
        %4457 = vmatprep.subr.mxu0 0.0
        %4458 = vmatpush1.msra.mxu0 0.0
        %4459 = vmatprep.subr.mxu0 0.0
        %4460 = vmatpush1.msra.mxu0 0.0
        %4461 = vmatprep.subr.mxu0 0.0
        %4462 = vmatpush1.msra.mxu0 0.0
        %4463 = vmatprep.subr.mxu0 0.0
        %4464 = vmatpush1.msra.mxu0 0.0
        %4465 = vmatprep.subr.mxu0 0.0
        %4466 = vmatpush1.msra.mxu0 0.0
        %4467 = vmatprep.subr.mxu0 0.0
        %4468 = vmatpush1.msra.mxu0 0.0
        %4469 = vmatprep.subr.mxu0 0.0
        %4470 = vmatpush1.msra.mxu0 0.0
        %4471 = vmatprep.subr.mxu0 0.0
        %4472 = vmatpush1.msra.mxu0 0.0
        %4473 = vmatprep.subr.mxu0 0.0
        %4474 = vmatpush1.msra.mxu0 0.0
        %4475 = vmatprep.subr.mxu0 0.0
        %4476 = vmatpush1.msra.mxu0 0.0
        %4477 = vmatprep.subr.mxu0 0.0
        %4478 = vmatpush1.msra.mxu0 0.0
        %4479 = vmatprep.subr.mxu0 0.0
        %4480 = vmatpush1.msra.mxu0 0.0
        %4481 = vmatprep.mubr.f32.mxu0 0.0
        %4482 = vmatmul.mubr.f32.gmra.mrb[0].mxu0 %v4415
        %v4483 = vpop.f32.mrb[0].mxu0
        %v4484 = vadd.f32 0.0, %v4483
        %v4485 = vpop.f32.mrb[0].mxu0
        %v4486 = vadd.f32 0.0, %v4485
        %4487 = vdwg.mxu0
        %v4490 = vcombine.low %v4484, %v4486
        %v4492 = vunpack.c.l.s4 1966171168
        %v4493 = vunpack.c.0.s8 %v4492
        %v4494 = vlaneseq
        %v4495 = vshrl.u32 %v4494, 7
        %v4496 = vsub.s32 %v4493, %v4495
        %v4497 = vrot.slane %v4490, %v4496
        %v4498 = vcombine.high %v4497, %v4497
        %v4500 = vunpack.c.l.s4 1966171168
        %v4501 = vunpack.c.0.s8 %v4500
        %v4502 = vlaneseq
        %v4503 = vshrl.u32 %v4502, 7
        %v4504 = vsub.s32 %v4501, %v4503
        %v4505 = vrot.slane %v4497, %v4504
        %v4507 = vunpack.c.l.s4 1966171168
        %v4508 = vunpack.c.0.s8 %v4507
        %v4509 = vlaneseq
        %v4510 = vshrl.u32 %v4509, 7
        %v4511 = vsub.s32 %v4508, %v4510
        %v4512 = vrot.slane %v4498, %v4511
        %v4513 = vcombine.high %v4505, %v4505
        %v4514 = vcombine.high %v4512, %v4512
        %v4519 = vadd.f32 %v4380, %v4505
        %v4520 = vadd.f32 %v4382, %v4512
        %v4521 = vadd.f32 %v4384, %v4513
        %v4522 = vadd.f32 %v4386, %v4514
        %v4523 = vxor.u32 %v4519, 2147483648
        %v4524 = vxor.u32 %v4520, 2147483648
        %v4525 = vxor.u32 %v4521, 2147483648
        %v4526 = vxor.u32 %v4522, 2147483648
        %v4527 = vmul.f32 %v4523, 1.442695
        %v4528 = vpow.pop %v4527
        %v4529 = vmul.f32 %v4524, 1.442695
        %v4530 = vpow.pop %v4529
        %v4531 = vmul.f32 %v4525, 1.442695
        %v4532 = vpow.pop %v4531
        %v4533 = vmul.f32 %v4526, 1.442695
        %v4534 = vpow.pop %v4533
        %v4535 = vadd.f32 %v4528, 1.0
        %v4536 = vadd.f32 %v4530, 1.0
        %v4537 = vadd.f32 %v4532, 1.0
        %v4538 = vadd.f32 %v4534, 1.0
        %v4539 = vrcp.pop %v4535
        %v4540 = vmul.f32 1.0, %v4539
        %v4541 = vrcp.pop %v4536
        %v4542 = vmul.f32 1.0, %v4541
        %v4543 = vrcp.pop %v4537
        %v4544 = vmul.f32 1.0, %v4543
        %v4545 = vrcp.pop %v4538
        %v4546 = vmul.f32 1.0, %v4545
        %v4551 = vrot.slane %v4519, 1
        %v4552 = vrot.slane %v4520, 1
        %v4553 = vrot.slane %v4521, 1
        %v4554 = vrot.slane %v4522, 1
        %v4559 = vtanh.pop %v4551
        %v4560 = vtanh.pop %v4552
        %v4561 = vtanh.pop %v4553
        %v4562 = vtanh.pop %v4554
        %4563 = vrot.lane.b32.xlu0 %v4519, 64
        %v4564 = vpop.permute.xlu0 %4563
        %4565 = vrot.lane.b32.xlu0 %v4520, 64
        %v4566 = vpop.permute.xlu0 %4565
        %4567 = vrot.lane.b32.xlu0 %v4521, 64
        %v4568 = vpop.permute.xlu0 %4567
        %4569 = vrot.lane.b32.xlu0 %v4522, 64
        %v4570 = vpop.permute.xlu0 %4569
        %v4571 = vrot.slane %v4564, 1
        %v4572 = vrot.slane %v4566, 1
        %v4573 = vrot.slane %v4568, 1
        %v4574 = vrot.slane %v4570, 1
        %v4579 = vxor.u32 %v4571, 2147483648
        %v4580 = vxor.u32 %v4572, 2147483648
        %v4581 = vxor.u32 %v4573, 2147483648
        %v4582 = vxor.u32 %v4574, 2147483648
        %v4583 = vmul.f32 %v4579, 1.442695
        %v4584 = vpow.pop %v4583
        %v4585 = vmul.f32 %v4580, 1.442695
        %v4586 = vpow.pop %v4585
        %v4587 = vmul.f32 %v4581, 1.442695
        %v4588 = vpow.pop %v4587
        %v4589 = vmul.f32 %v4582, 1.442695
        %v4590 = vpow.pop %v4589
        %v4591 = vadd.f32 %v4584, 1.0
        %v4592 = vadd.f32 %v4586, 1.0
        %v4593 = vadd.f32 %v4588, 1.0
        %v4594 = vadd.f32 %v4590, 1.0
        %v4595 = vrcp.pop %v4591
        %v4596 = vmul.f32 1.0, %v4595
        %v4597 = vrcp.pop %v4592
        %v4598 = vmul.f32 1.0, %v4597
        %v4599 = vrcp.pop %v4593
        %v4600 = vmul.f32 1.0, %v4599
        %v4601 = vrcp.pop %v4594
        %v4602 = vmul.f32 1.0, %v4601
        %v4603 = vmul.f32 %v4540, %v4347
        %v4604 = vmul.f32 %v4542, %v4348
        %v4605 = vmul.f32 %v4544, %v4349
        %v4606 = vmul.f32 %v4546, %v4350
        %v4607 = vmul.f32 %v4540, %v4559
        %v4608 = vmul.f32 %v4542, %v4560
        %v4609 = vmul.f32 %v4544, %v4561
        %v4610 = vmul.f32 %v4546, %v4562
        %4615 = vrot.lane.b32.xlu0 %v4607, 64
        %v4616 = vpop.permute.xlu0 %4615
        %4617 = vrot.lane.b32.xlu0 %v4608, 64
        %v4618 = vpop.permute.xlu0 %4617
        %4619 = vrot.lane.b32.xlu0 %v4609, 64
        %v4620 = vpop.permute.xlu0 %4619
        %4621 = vrot.lane.b32.xlu0 %v4610, 64
        %v4622 = vpop.permute.xlu0 %4621
        %v4627 = vadd.f32 %v4603, %v4616
        %v4628 = vadd.f32 %v4604, %v4618
        %v4629 = vadd.f32 %v4605, %v4620
        %v4630 = vadd.f32 %v4606, %v4622
        %v4631 = vtanh.pop %v4627
        %v4632 = vtanh.pop %v4628
        %v4633 = vtanh.pop %v4629
        %v4634 = vtanh.pop %v4630
        %4639 = vrot.lane.b32.xlu0 %v4631, 64
        %v4640 = vpop.permute.xlu0 %4639
        %4641 = vrot.lane.b32.xlu0 %v4632, 64
        %v4642 = vpop.permute.xlu0 %4641
        %4643 = vrot.lane.b32.xlu0 %v4633, 64
        %v4644 = vpop.permute.xlu0 %4643
        %4645 = vrot.lane.b32.xlu0 %v4634, 64
        %v4646 = vpop.permute.xlu0 %4645
        %v4651 = vmul.f32 %v4596, %v4640
        %v4652 = vmul.f32 %v4598, %v4642
        %v4653 = vmul.f32 %v4600, %v4644
        %v4654 = vmul.f32 %v4602, %v4646
        %4655 = vst.msk [vmem:[#allocation5 + $0xd] sm:$0x1] %vm1014, %v4651
        %4656 = vst.msk [vmem:[#allocation5 + $0x1d] sm:$0x1] %vm1014, %v4652
        %4657 = vst.msk [vmem:[#allocation5 + $0x2d] sm:$0x1] %vm1014, %v4653
        %4658 = vst.msk [vmem:[#allocation5 + $0x3d] sm:$0x1] %vm1014, %v4654
        %s4659 = scalar_lea.vmem [#allocation4], 22
        %v4660 = vld [vmem:[%s4659] ss:$8 sm:$0x3]
        %s4661 = scalar_lea.vmem [#allocation4], 54
        %v4662 = vld [vmem:[%s4661] ss:$8 sm:$0x3]
        %s4663 = scalar_lea.vmem [#allocation4], 86
        %v4664 = vld [vmem:[%s4663] ss:$8 sm:$0x3]
        %s4665 = scalar_lea.vmem [#allocation4], 118
        %v4666 = vld [vmem:[%s4665] ss:$8 sm:$0x3]
        %v4671 = vcombine.low %v4651, %v4652
        %v4672 = vcombine.low %v4653, %v4654
        %v4674 = vunpack.c.l.s4 1966171168
        %v4675 = vunpack.c.0.s8 %v4674
        %v4676 = vlaneseq
        %v4677 = vshrl.u32 %v4676, 7
        %v4678 = vsub.s32 %v4675, %v4677
        %v4679 = vrot.slane %v4671, %v4678
        %v4681 = vunpack.c.l.s4 1966171168
        %v4682 = vunpack.c.0.s8 %v4681
        %v4683 = vlaneseq
        %v4684 = vshrl.u32 %v4683, 7
        %v4685 = vsub.s32 %v4682, %v4684
        %v4686 = vrot.slane %v4672, %v4685
        %v4687 = vcombine.low %v4679, %v4686
        %v4689 = vunpack.c.l.s4 1966171168
        %v4690 = vunpack.c.0.s8 %v4689
        %v4691 = vlaneseq
        %v4692 = vshrl.u32 %v4691, 7
        %v4693 = vsub.s32 %v4690, %v4692
        %v4694 = vrot.slane %v4687, %v4693
        %v4695 = vsel %vm735, %v4694, 0
        %4697 = vmatprep.subr.mxu0 %v711
        %4698 = vmatpush1.msra.mxu0 %v710
        %4699 = vmatprep.subr.mxu0 %v713
        %4700 = vmatpush1.msra.mxu0 %v712
        %4701 = vmatprep.subr.mxu0 %v715
        %4702 = vmatpush1.msra.mxu0 %v714
        %4703 = vmatprep.subr.mxu0 %v717
        %4704 = vmatpush1.msra.mxu0 %v716
        %4705 = vmatprep.subr.mxu0 %v719
        %4706 = vmatpush1.msra.mxu0 %v718
        %4707 = vmatprep.subr.mxu0 %v721
        %4708 = vmatpush1.msra.mxu0 %v720
        %4709 = vmatprep.subr.mxu0 %v723
        %4710 = vmatpush1.msra.mxu0 %v722
        %4711 = vmatprep.subr.mxu0 %v725
        %4712 = vmatpush1.msra.mxu0 %v724
        %4713 = vmatprep.subr.mxu0 0.0
        %4714 = vmatpush1.msra.mxu0 0.0
        %4715 = vmatprep.subr.mxu0 0.0
        %4716 = vmatpush1.msra.mxu0 0.0
        %4717 = vmatprep.subr.mxu0 0.0
        %4718 = vmatpush1.msra.mxu0 0.0
        %4719 = vmatprep.subr.mxu0 0.0
        %4720 = vmatpush1.msra.mxu0 0.0
        %4721 = vmatprep.subr.mxu0 0.0
        %4722 = vmatpush1.msra.mxu0 0.0
        %4723 = vmatprep.subr.mxu0 0.0
        %4724 = vmatpush1.msra.mxu0 0.0
        %4725 = vmatprep.subr.mxu0 0.0
        %4726 = vmatpush1.msra.mxu0 0.0
        %4727 = vmatprep.subr.mxu0 0.0
        %4728 = vmatpush1.msra.mxu0 0.0
        %4729 = vmatprep.subr.mxu0 0.0
        %4730 = vmatpush1.msra.mxu0 0.0
        %4731 = vmatprep.subr.mxu0 0.0
        %4732 = vmatpush1.msra.mxu0 0.0
        %4733 = vmatprep.subr.mxu0 0.0
        %4734 = vmatpush1.msra.mxu0 0.0
        %4735 = vmatprep.subr.mxu0 0.0
        %4736 = vmatpush1.msra.mxu0 0.0
        %4737 = vmatprep.subr.mxu0 0.0
        %4738 = vmatpush1.msra.mxu0 0.0
        %4739 = vmatprep.subr.mxu0 0.0
        %4740 = vmatpush1.msra.mxu0 0.0
        %4741 = vmatprep.subr.mxu0 0.0
        %4742 = vmatpush1.msra.mxu0 0.0
        %4743 = vmatprep.subr.mxu0 0.0
        %4744 = vmatpush1.msra.mxu0 0.0
        %4745 = vmatprep.subr.mxu0 0.0
        %4746 = vmatpush1.msra.mxu0 0.0
        %4747 = vmatprep.subr.mxu0 0.0
        %4748 = vmatpush1.msra.mxu0 0.0
        %4749 = vmatprep.subr.mxu0 0.0
        %4750 = vmatpush1.msra.mxu0 0.0
        %4751 = vmatprep.subr.mxu0 0.0
        %4752 = vmatpush1.msra.mxu0 0.0
        %4753 = vmatprep.subr.mxu0 0.0
        %4754 = vmatpush1.msra.mxu0 0.0
        %4755 = vmatprep.subr.mxu0 0.0
        %4756 = vmatpush1.msra.mxu0 0.0
        %4757 = vmatprep.subr.mxu0 0.0
        %4758 = vmatpush1.msra.mxu0 0.0
        %4759 = vmatprep.subr.mxu0 0.0
        %4760 = vmatpush1.msra.mxu0 0.0
        %4761 = vmatprep.mubr.f32.mxu0 0.0
        %4762 = vmatmul.mubr.f32.gmra.mrb[0].mxu0 %v4695
        %v4763 = vpop.f32.mrb[0].mxu0
        %v4764 = vadd.f32 0.0, %v4763
        %v4765 = vpop.f32.mrb[0].mxu0
        %v4766 = vadd.f32 0.0, %v4765
        %4767 = vdwg.mxu0
        %v4770 = vcombine.low %v4764, %v4766
        %v4772 = vunpack.c.l.s4 1966171168
        %v4773 = vunpack.c.0.s8 %v4772
        %v4774 = vlaneseq
        %v4775 = vshrl.u32 %v4774, 7
        %v4776 = vsub.s32 %v4773, %v4775
        %v4777 = vrot.slane %v4770, %v4776
        %v4778 = vcombine.high %v4777, %v4777
        %v4780 = vunpack.c.l.s4 1966171168
        %v4781 = vunpack.c.0.s8 %v4780
        %v4782 = vlaneseq
        %v4783 = vshrl.u32 %v4782, 7
        %v4784 = vsub.s32 %v4781, %v4783
        %v4785 = vrot.slane %v4777, %v4784
        %v4787 = vunpack.c.l.s4 1966171168
        %v4788 = vunpack.c.0.s8 %v4787
        %v4789 = vlaneseq
        %v4790 = vshrl.u32 %v4789, 7
        %v4791 = vsub.s32 %v4788, %v4790
        %v4792 = vrot.slane %v4778, %v4791
        %v4793 = vcombine.high %v4785, %v4785
        %v4794 = vcombine.high %v4792, %v4792
        %v4799 = vadd.f32 %v4660, %v4785
        %v4800 = vadd.f32 %v4662, %v4792
        %v4801 = vadd.f32 %v4664, %v4793
        %v4802 = vadd.f32 %v4666, %v4794
        %v4803 = vxor.u32 %v4799, 2147483648
        %v4804 = vxor.u32 %v4800, 2147483648
        %v4805 = vxor.u32 %v4801, 2147483648
        %v4806 = vxor.u32 %v4802, 2147483648
        %v4807 = vmul.f32 %v4803, 1.442695
        %v4808 = vpow.pop %v4807
        %v4809 = vmul.f32 %v4804, 1.442695
        %v4810 = vpow.pop %v4809
        %v4811 = vmul.f32 %v4805, 1.442695
        %v4812 = vpow.pop %v4811
        %v4813 = vmul.f32 %v4806, 1.442695
        %v4814 = vpow.pop %v4813
        %v4815 = vadd.f32 %v4808, 1.0
        %v4816 = vadd.f32 %v4810, 1.0
        %v4817 = vadd.f32 %v4812, 1.0
        %v4818 = vadd.f32 %v4814, 1.0
        %v4819 = vrcp.pop %v4815
        %v4820 = vmul.f32 1.0, %v4819
        %v4821 = vrcp.pop %v4816
        %v4822 = vmul.f32 1.0, %v4821
        %v4823 = vrcp.pop %v4817
        %v4824 = vmul.f32 1.0, %v4823
        %v4825 = vrcp.pop %v4818
        %v4826 = vmul.f32 1.0, %v4825
        %v4831 = vrot.slane %v4799, 1
        %v4832 = vrot.slane %v4800, 1
        %v4833 = vrot.slane %v4801, 1
        %v4834 = vrot.slane %v4802, 1
        %v4839 = vtanh.pop %v4831
        %v4840 = vtanh.pop %v4832
        %v4841 = vtanh.pop %v4833
        %v4842 = vtanh.pop %v4834
        %4843 = vrot.lane.b32.xlu0 %v4799, 64
        %v4844 = vpop.permute.xlu0 %4843
        %4845 = vrot.lane.b32.xlu0 %v4800, 64
        %v4846 = vpop.permute.xlu0 %4845
        %4847 = vrot.lane.b32.xlu0 %v4801, 64
        %v4848 = vpop.permute.xlu0 %4847
        %4849 = vrot.lane.b32.xlu0 %v4802, 64
        %v4850 = vpop.permute.xlu0 %4849
        %v4851 = vrot.slane %v4844, 1
        %v4852 = vrot.slane %v4846, 1
        %v4853 = vrot.slane %v4848, 1
        %v4854 = vrot.slane %v4850, 1
        %v4859 = vxor.u32 %v4851, 2147483648
        %v4860 = vxor.u32 %v4852, 2147483648
        %v4861 = vxor.u32 %v4853, 2147483648
        %v4862 = vxor.u32 %v4854, 2147483648
        %v4863 = vmul.f32 %v4859, 1.442695
        %v4864 = vpow.pop %v4863
        %v4865 = vmul.f32 %v4860, 1.442695
        %v4866 = vpow.pop %v4865
        %v4867 = vmul.f32 %v4861, 1.442695
        %v4868 = vpow.pop %v4867
        %v4869 = vmul.f32 %v4862, 1.442695
        %v4870 = vpow.pop %v4869
        %v4871 = vadd.f32 %v4864, 1.0
        %v4872 = vadd.f32 %v4866, 1.0
        %v4873 = vadd.f32 %v4868, 1.0
        %v4874 = vadd.f32 %v4870, 1.0
        %v4875 = vrcp.pop %v4871
        %v4876 = vmul.f32 1.0, %v4875
        %v4877 = vrcp.pop %v4872
        %v4878 = vmul.f32 1.0, %v4877
        %v4879 = vrcp.pop %v4873
        %v4880 = vmul.f32 1.0, %v4879
        %v4881 = vrcp.pop %v4874
        %v4882 = vmul.f32 1.0, %v4881
        %v4883 = vmul.f32 %v4820, %v4627
        %v4884 = vmul.f32 %v4822, %v4628
        %v4885 = vmul.f32 %v4824, %v4629
        %v4886 = vmul.f32 %v4826, %v4630
        %v4887 = vmul.f32 %v4820, %v4839
        %v4888 = vmul.f32 %v4822, %v4840
        %v4889 = vmul.f32 %v4824, %v4841
        %v4890 = vmul.f32 %v4826, %v4842
        %4895 = vrot.lane.b32.xlu0 %v4887, 64
        %v4896 = vpop.permute.xlu0 %4895
        %4897 = vrot.lane.b32.xlu0 %v4888, 64
        %v4898 = vpop.permute.xlu0 %4897
        %4899 = vrot.lane.b32.xlu0 %v4889, 64
        %v4900 = vpop.permute.xlu0 %4899
        %4901 = vrot.lane.b32.xlu0 %v4890, 64
        %v4902 = vpop.permute.xlu0 %4901
        %v4907 = vadd.f32 %v4883, %v4896
        %v4908 = vadd.f32 %v4884, %v4898
        %v4909 = vadd.f32 %v4885, %v4900
        %v4910 = vadd.f32 %v4886, %v4902
        %v4911 = vtanh.pop %v4907
        %v4912 = vtanh.pop %v4908
        %v4913 = vtanh.pop %v4909
        %v4914 = vtanh.pop %v4910
        %4919 = vrot.lane.b32.xlu0 %v4911, 64
        %v4920 = vpop.permute.xlu0 %4919
        %4921 = vrot.lane.b32.xlu0 %v4912, 64
        %v4922 = vpop.permute.xlu0 %4921
        %4923 = vrot.lane.b32.xlu0 %v4913, 64
        %v4924 = vpop.permute.xlu0 %4923
        %4925 = vrot.lane.b32.xlu0 %v4914, 64
        %v4926 = vpop.permute.xlu0 %4925
        %v4931 = vmul.f32 %v4876, %v4920
        %v4932 = vmul.f32 %v4878, %v4922
        %v4933 = vmul.f32 %v4880, %v4924
        %v4934 = vmul.f32 %v4882, %v4926
        %4935 = vst.msk [vmem:[#allocation5 + $0xe] sm:$0x1] %vm1014, %v4931
        %4936 = vst.msk [vmem:[#allocation5 + $0x1e] sm:$0x1] %vm1014, %v4932
        %4937 = vst.msk [vmem:[#allocation5 + $0x2e] sm:$0x1] %vm1014, %v4933
        %4938 = vst.msk [vmem:[#allocation5 + $0x3e] sm:$0x1] %vm1014, %v4934
        %s4939 = scalar_lea.vmem [#allocation4], 23
        %v4940 = vld [vmem:[%s4939] ss:$8 sm:$0x3]
        %s4941 = scalar_lea.vmem [#allocation4], 55
        %v4942 = vld [vmem:[%s4941] ss:$8 sm:$0x3]
        %s4943 = scalar_lea.vmem [#allocation4], 87
        %v4944 = vld [vmem:[%s4943] ss:$8 sm:$0x3]
        %s4945 = scalar_lea.vmem [#allocation4], 119
        %v4946 = vld [vmem:[%s4945] ss:$8 sm:$0x3]
        %v4951 = vcombine.low %v4931, %v4932
        %v4952 = vcombine.low %v4933, %v4934
        %v4954 = vunpack.c.l.s4 1966171168
        %v4955 = vunpack.c.0.s8 %v4954
        %v4956 = vlaneseq
        %v4957 = vshrl.u32 %v4956, 7
        %v4958 = vsub.s32 %v4955, %v4957
        %v4959 = vrot.slane %v4951, %v4958
        %v4961 = vunpack.c.l.s4 1966171168
        %v4962 = vunpack.c.0.s8 %v4961
        %v4963 = vlaneseq
        %v4964 = vshrl.u32 %v4963, 7
        %v4965 = vsub.s32 %v4962, %v4964
        %v4966 = vrot.slane %v4952, %v4965
        %v4967 = vcombine.low %v4959, %v4966
        %v4969 = vunpack.c.l.s4 1966171168
        %v4970 = vunpack.c.0.s8 %v4969
        %v4971 = vlaneseq
        %v4972 = vshrl.u32 %v4971, 7
        %v4973 = vsub.s32 %v4970, %v4972
        %v4974 = vrot.slane %v4967, %v4973
        %v4975 = vsel %vm735, %v4974, 0
        %4977 = vmatprep.subr.mxu0 %v711
        %4978 = vmatpush1.msra.mxu0 %v710
        %4979 = vmatprep.subr.mxu0 %v713
        %4980 = vmatpush1.msra.mxu0 %v712
        %4981 = vmatprep.subr.mxu0 %v715
        %4982 = vmatpush1.msra.mxu0 %v714
        %4983 = vmatprep.subr.mxu0 %v717
        %4984 = vmatpush1.msra.mxu0 %v716
        %4985 = vmatprep.subr.mxu0 %v719
        %4986 = vmatpush1.msra.mxu0 %v718
        %4987 = vmatprep.subr.mxu0 %v721
        %4988 = vmatpush1.msra.mxu0 %v720
        %4989 = vmatprep.subr.mxu0 %v723
        %4990 = vmatpush1.msra.mxu0 %v722
        %4991 = vmatprep.subr.mxu0 %v725
        %4992 = vmatpush1.msra.mxu0 %v724
        %4993 = vmatprep.subr.mxu0 0.0
        %4994 = vmatpush1.msra.mxu0 0.0
        %4995 = vmatprep.subr.mxu0 0.0
        %4996 = vmatpush1.msra.mxu0 0.0
        %4997 = vmatprep.subr.mxu0 0.0
        %4998 = vmatpush1.msra.mxu0 0.0
        %4999 = vmatprep.subr.mxu0 0.0
        %5000 = vmatpush1.msra.mxu0 0.0
        %5001 = vmatprep.subr.mxu0 0.0
        %5002 = vmatpush1.msra.mxu0 0.0
        %5003 = vmatprep.subr.mxu0 0.0
        %5004 = vmatpush1.msra.mxu0 0.0
        %5005 = vmatprep.subr.mxu0 0.0
        %5006 = vmatpush1.msra.mxu0 0.0
        %5007 = vmatprep.subr.mxu0 0.0
        %5008 = vmatpush1.msra.mxu0 0.0
        %5009 = vmatprep.subr.mxu0 0.0
        %5010 = vmatpush1.msra.mxu0 0.0
        %5011 = vmatprep.subr.mxu0 0.0
        %5012 = vmatpush1.msra.mxu0 0.0
        %5013 = vmatprep.subr.mxu0 0.0
        %5014 = vmatpush1.msra.mxu0 0.0
        %5015 = vmatprep.subr.mxu0 0.0
        %5016 = vmatpush1.msra.mxu0 0.0
        %5017 = vmatprep.subr.mxu0 0.0
        %5018 = vmatpush1.msra.mxu0 0.0
        %5019 = vmatprep.subr.mxu0 0.0
        %5020 = vmatpush1.msra.mxu0 0.0
        %5021 = vmatprep.subr.mxu0 0.0
        %5022 = vmatpush1.msra.mxu0 0.0
        %5023 = vmatprep.subr.mxu0 0.0
        %5024 = vmatpush1.msra.mxu0 0.0
        %5025 = vmatprep.subr.mxu0 0.0
        %5026 = vmatpush1.msra.mxu0 0.0
        %5027 = vmatprep.subr.mxu0 0.0
        %5028 = vmatpush1.msra.mxu0 0.0
        %5029 = vmatprep.subr.mxu0 0.0
        %5030 = vmatpush1.msra.mxu0 0.0
        %5031 = vmatprep.subr.mxu0 0.0
        %5032 = vmatpush1.msra.mxu0 0.0
        %5033 = vmatprep.subr.mxu0 0.0
        %5034 = vmatpush1.msra.mxu0 0.0
        %5035 = vmatprep.subr.mxu0 0.0
        %5036 = vmatpush1.msra.mxu0 0.0
        %5037 = vmatprep.subr.mxu0 0.0
        %5038 = vmatpush1.msra.mxu0 0.0
        %5039 = vmatprep.subr.mxu0 0.0
        %5040 = vmatpush1.msra.mxu0 0.0
        %5041 = vmatprep.mubr.f32.mxu0 0.0
        %5042 = vmatmul.mubr.f32.gmra.mrb[0].mxu0 %v4975
        %v5043 = vpop.f32.mrb[0].mxu0
        %v5044 = vadd.f32 0.0, %v5043
        %v5045 = vpop.f32.mrb[0].mxu0
        %v5046 = vadd.f32 0.0, %v5045
        %5047 = vdwg.mxu0
        %v5050 = vcombine.low %v5044, %v5046
        %v5052 = vunpack.c.l.s4 1966171168
        %v5053 = vunpack.c.0.s8 %v5052
        %v5054 = vlaneseq
        %v5055 = vshrl.u32 %v5054, 7
        %v5056 = vsub.s32 %v5053, %v5055
        %v5057 = vrot.slane %v5050, %v5056
        %v5058 = vcombine.high %v5057, %v5057
        %v5060 = vunpack.c.l.s4 1966171168
        %v5061 = vunpack.c.0.s8 %v5060
        %v5062 = vlaneseq
        %v5063 = vshrl.u32 %v5062, 7
        %v5064 = vsub.s32 %v5061, %v5063
        %v5065 = vrot.slane %v5057, %v5064
        %v5067 = vunpack.c.l.s4 1966171168
        %v5068 = vunpack.c.0.s8 %v5067
        %v5069 = vlaneseq
        %v5070 = vshrl.u32 %v5069, 7
        %v5071 = vsub.s32 %v5068, %v5070
        %v5072 = vrot.slane %v5058, %v5071
        %v5073 = vcombine.high %v5065, %v5065
        %v5074 = vcombine.high %v5072, %v5072
        %v5079 = vadd.f32 %v4940, %v5065
        %v5080 = vadd.f32 %v4942, %v5072
        %v5081 = vadd.f32 %v4944, %v5073
        %v5082 = vadd.f32 %v4946, %v5074
        %v5083 = vxor.u32 %v5079, 2147483648
        %v5084 = vxor.u32 %v5080, 2147483648
        %v5085 = vxor.u32 %v5081, 2147483648
        %v5086 = vxor.u32 %v5082, 2147483648
        %v5087 = vmul.f32 %v5083, 1.442695
        %v5088 = vpow.pop %v5087
        %v5089 = vmul.f32 %v5084, 1.442695
        %v5090 = vpow.pop %v5089
        %v5091 = vmul.f32 %v5085, 1.442695
        %v5092 = vpow.pop %v5091
        %v5093 = vmul.f32 %v5086, 1.442695
        %v5094 = vpow.pop %v5093
        %v5095 = vadd.f32 %v5088, 1.0
        %v5096 = vadd.f32 %v5090, 1.0
        %v5097 = vadd.f32 %v5092, 1.0
        %v5098 = vadd.f32 %v5094, 1.0
        %v5099 = vrcp.pop %v5095
        %v5100 = vmul.f32 1.0, %v5099
        %v5101 = vrcp.pop %v5096
        %v5102 = vmul.f32 1.0, %v5101
        %v5103 = vrcp.pop %v5097
        %v5104 = vmul.f32 1.0, %v5103
        %v5105 = vrcp.pop %v5098
        %v5106 = vmul.f32 1.0, %v5105
        %v5111 = vrot.slane %v5079, 1
        %v5112 = vrot.slane %v5080, 1
        %v5113 = vrot.slane %v5081, 1
        %v5114 = vrot.slane %v5082, 1
        %v5119 = vtanh.pop %v5111
        %v5120 = vtanh.pop %v5112
        %v5121 = vtanh.pop %v5113
        %v5122 = vtanh.pop %v5114
        %5123 = vrot.lane.b32.xlu0 %v5079, 64
        %v5124 = vpop.permute.xlu0 %5123
        %5125 = vrot.lane.b32.xlu0 %v5080, 64
        %v5126 = vpop.permute.xlu0 %5125
        %5127 = vrot.lane.b32.xlu0 %v5081, 64
        %v5128 = vpop.permute.xlu0 %5127
        %5129 = vrot.lane.b32.xlu0 %v5082, 64
        %v5130 = vpop.permute.xlu0 %5129
        %v5131 = vrot.slane %v5124, 1
        %v5132 = vrot.slane %v5126, 1
        %v5133 = vrot.slane %v5128, 1
        %v5134 = vrot.slane %v5130, 1
        %v5139 = vxor.u32 %v5131, 2147483648
        %v5140 = vxor.u32 %v5132, 2147483648
        %v5141 = vxor.u32 %v5133, 2147483648
        %v5142 = vxor.u32 %v5134, 2147483648
        %v5143 = vmul.f32 %v5139, 1.442695
        %v5144 = vpow.pop %v5143
        %v5145 = vmul.f32 %v5140, 1.442695
        %v5146 = vpow.pop %v5145
        %v5147 = vmul.f32 %v5141, 1.442695
        %v5148 = vpow.pop %v5147
        %v5149 = vmul.f32 %v5142, 1.442695
        %v5150 = vpow.pop %v5149
        %v5151 = vadd.f32 %v5144, 1.0
        %v5152 = vadd.f32 %v5146, 1.0
        %v5153 = vadd.f32 %v5148, 1.0
        %v5154 = vadd.f32 %v5150, 1.0
        %v5155 = vrcp.pop %v5151
        %v5156 = vmul.f32 1.0, %v5155
        %v5157 = vrcp.pop %v5152
        %v5158 = vmul.f32 1.0, %v5157
        %v5159 = vrcp.pop %v5153
        %v5160 = vmul.f32 1.0, %v5159
        %v5161 = vrcp.pop %v5154
        %v5162 = vmul.f32 1.0, %v5161
        %v5163 = vmul.f32 %v5100, %v4907
        %v5164 = vmul.f32 %v5102, %v4908
        %v5165 = vmul.f32 %v5104, %v4909
        %v5166 = vmul.f32 %v5106, %v4910
        %v5167 = vmul.f32 %v5100, %v5119
        %v5168 = vmul.f32 %v5102, %v5120
        %v5169 = vmul.f32 %v5104, %v5121
        %v5170 = vmul.f32 %v5106, %v5122
        %5175 = vrot.lane.b32.xlu0 %v5167, 64
        %v5176 = vpop.permute.xlu0 %5175
        %5177 = vrot.lane.b32.xlu0 %v5168, 64
        %v5178 = vpop.permute.xlu0 %5177
        %5179 = vrot.lane.b32.xlu0 %v5169, 64
        %v5180 = vpop.permute.xlu0 %5179
        %5181 = vrot.lane.b32.xlu0 %v5170, 64
        %v5182 = vpop.permute.xlu0 %5181
        %v5187 = vadd.f32 %v5163, %v5176
        %v5188 = vadd.f32 %v5164, %v5178
        %v5189 = vadd.f32 %v5165, %v5180
        %v5190 = vadd.f32 %v5166, %v5182
        %v5191 = vtanh.pop %v5187
        %v5192 = vtanh.pop %v5188
        %v5193 = vtanh.pop %v5189
        %v5194 = vtanh.pop %v5190
        %5199 = vrot.lane.b32.xlu0 %v5191, 64
        %v5200 = vpop.permute.xlu0 %5199
        %5201 = vrot.lane.b32.xlu0 %v5192, 64
        %v5202 = vpop.permute.xlu0 %5201
        %5203 = vrot.lane.b32.xlu0 %v5193, 64
        %v5204 = vpop.permute.xlu0 %5203
        %5205 = vrot.lane.b32.xlu0 %v5194, 64
        %v5206 = vpop.permute.xlu0 %5205
        %v5211 = vmul.f32 %v5156, %v5200
        %v5212 = vmul.f32 %v5158, %v5202
        %v5213 = vmul.f32 %v5160, %v5204
        %v5214 = vmul.f32 %v5162, %v5206
        %5215 = vst.msk [vmem:[#allocation5 + $0xf] sm:$0x1] %vm1014, %v5211
        %5216 = vst.msk [vmem:[#allocation5 + $0x1f] sm:$0x1] %vm1014, %v5212
        %5217 = vst.msk [vmem:[#allocation5 + $0x2f] sm:$0x1] %vm1014, %v5213
        %5218 = vst.msk [vmem:[#allocation5 + $0x3f] sm:$0x1] %vm1014, %v5214
        %v5223 = vcombine.low %v5211, %v5212
        %v5224 = vcombine.low %v5213, %v5214
        %v5226 = vunpack.c.l.s4 1966171168
        %v5227 = vunpack.c.0.s8 %v5226
        %v5228 = vlaneseq
        %v5229 = vshrl.u32 %v5228, 7
        %v5230 = vsub.s32 %v5227, %v5229
        %v5231 = vrot.slane %v5223, %v5230
        %v5233 = vunpack.c.l.s4 1966171168
        %v5234 = vunpack.c.0.s8 %v5233
        %v5235 = vlaneseq
        %v5236 = vshrl.u32 %v5235, 7
        %v5237 = vsub.s32 %v5234, %v5236
        %v5238 = vrot.slane %v5224, %v5237
        %v5239 = vcombine.low %v5231, %v5238
        %v5241 = vunpack.c.l.s4 1966171168
        %v5242 = vunpack.c.0.s8 %v5241
        %v5243 = vlaneseq
        %v5244 = vshrl.u32 %v5243, 7
        %v5245 = vsub.s32 %v5242, %v5244
        %v5246 = vrot.slane %v5239, %v5245
        %vm5248 = vcmask 519168
        %5249 = vst.msk [vmem:[#allocation2] sm:$0xf] %vm5248, %v5246
        %v5254 = vcombine.low %v5187, %v5188
        %v5255 = vcombine.low %v5189, %v5190
        %v5257 = vunpack.c.l.s4 1966171168
        %v5258 = vunpack.c.0.s8 %v5257
        %v5259 = vlaneseq
        %v5260 = vshrl.u32 %v5259, 7
        %v5261 = vsub.s32 %v5258, %v5260
        %v5262 = vrot.slane %v5254, %v5261
        %v5264 = vunpack.c.l.s4 1966171168
        %v5265 = vunpack.c.0.s8 %v5264
        %v5266 = vlaneseq
        %v5267 = vshrl.u32 %v5266, 7
        %v5268 = vsub.s32 %v5265, %v5267
        %v5269 = vrot.slane %v5255, %v5268
        %v5270 = vcombine.low %v5262, %v5269
        %v5272 = vunpack.c.l.s4 1966171168
        %v5273 = vunpack.c.0.s8 %v5272
        %v5274 = vlaneseq
        %v5275 = vshrl.u32 %v5274, 7
        %v5276 = vsub.s32 %v5273, %v5275
        %v5277 = vrot.slane %v5270, %v5276
        %5278 = vrot.lane.b32.xlu0 %v5277, 64
        %v5279 = vpop.permute.xlu0 %5278
        %5281 = vst.msk [vmem:[#allocation3] sm:$0xf] %vm5248, %v5279
        %v5282 = vld [vmem:[#allocation5] sm:$0xff]
        %v5283 = vld [vmem:[#allocation5 + $0x8] sm:$0xff]
        %v5284 = vld [vmem:[#allocation5 + $0x10] sm:$0xff]
        %v5285 = vld [vmem:[#allocation5 + $0x18] sm:$0xff]
        %v5286 = vld [vmem:[#allocation5 + $0x20] sm:$0xff]
        %v5287 = vld [vmem:[#allocation5 + $0x28] sm:$0xff]
        %v5288 = vld [vmem:[#allocation5 + $0x30] sm:$0xff]
        %v5289 = vld [vmem:[#allocation5 + $0x38] sm:$0xff]
        %5294 = vrot.lane.b32.xlu0 %v5286, 96
        %v5295 = vpop.permute.xlu0 %5294
        %5296 = vrot.lane.b32.xlu0 %v5287, 96
        %v5297 = vpop.permute.xlu0 %5296
        %5298 = vrot.lane.b32.xlu0 %v5288, 96
        %v5299 = vpop.permute.xlu0 %5298
        %5300 = vrot.lane.b32.xlu0 %v5289, 96
        %v5301 = vpop.permute.xlu0 %5300
        %v5306 = vsub.f32 %v5282, %v5295
        %v5307 = vsub.f32 %v5283, %v5297
        %v5308 = vsub.f32 %v5284, %v5299
        %v5309 = vsub.f32 %v5285, %v5301
        %5314 = vrot.lane.b32.xlu0 %v5282, 96
        %v5315 = vpop.permute.xlu0 %5314
        %5316 = vrot.lane.b32.xlu0 %v5283, 96
        %v5317 = vpop.permute.xlu0 %5316
        %5318 = vrot.lane.b32.xlu0 %v5284, 96
        %v5319 = vpop.permute.xlu0 %5318
        %5320 = vrot.lane.b32.xlu0 %v5285, 96
        %v5321 = vpop.permute.xlu0 %5320
        %v5326 = vadd.f32 %v5286, %v5315
        %v5327 = vadd.f32 %v5287, %v5317
        %v5328 = vadd.f32 %v5288, %v5319
        %v5329 = vadd.f32 %v5289, %v5321
        %v5330 = vld [vmem:[%s5] sm:$0xff]
        %v5331 = vld [vmem:[%s5 + $0x8] sm:$0xff]
        %v5332 = vld [vmem:[%s5 + $0x10] sm:$0xff]
        %v5333 = vld [vmem:[%s5 + $0x18] sm:$0xff]
        %v5334 = vld [vmem:[%s6] sm:$0x1]
        %v5336 = vlaneseq
        %v5337 = vshrl.u32 %v5336, 7
        %v5338 = vsub.s32 0, %v5337
        %v5339 = vrot.slane %v5334, %v5338
        %vm5341 = vcmask 261120
        %v5343 = vsel %vm5341, %v5306, 0
        %v5346 = vsel %vm5341, %v5307, 0
        %v5349 = vsel %vm5341, %v5308, 0
        %v5352 = vsel %vm5341, %v5309, 0
        %5354 = vmatprep.subr.mxu0 0.0
        %5355 = vmatpush1.msra.mxu0 %v5330
        %5356 = vmatprep.subr.mxu0 0.0
        %5357 = vmatpush1.msra.mxu0 %v5331
        %5358 = vmatprep.subr.mxu0 0.0
        %5359 = vmatpush1.msra.mxu0 %v5332
        %5360 = vmatprep.subr.mxu0 0.0
        %5361 = vmatpush1.msra.mxu0 %v5333
        %5362 = vmatprep.subr.mxu0 0.0
        %5363 = vmatpush1.msra.mxu0 0.0
        %5364 = vmatprep.subr.mxu0 0.0
        %5365 = vmatpush1.msra.mxu0 0.0
        %5366 = vmatprep.subr.mxu0 0.0
        %5367 = vmatpush1.msra.mxu0 0.0
        %5368 = vmatprep.subr.mxu0 0.0
        %5369 = vmatpush1.msra.mxu0 0.0
        %5370 = vmatprep.subr.mxu0 0.0
        %5371 = vmatpush1.msra.mxu0 0.0
        %5372 = vmatprep.subr.mxu0 0.0
        %5373 = vmatpush1.msra.mxu0 0.0
        %5374 = vmatprep.subr.mxu0 0.0
        %5375 = vmatpush1.msra.mxu0 0.0
        %5376 = vmatprep.subr.mxu0 0.0
        %5377 = vmatpush1.msra.mxu0 0.0
        %5378 = vmatprep.subr.mxu0 0.0
        %5379 = vmatpush1.msra.mxu0 0.0
        %5380 = vmatprep.subr.mxu0 0.0
        %5381 = vmatpush1.msra.mxu0 0.0
        %5382 = vmatprep.subr.mxu0 0.0
        %5383 = vmatpush1.msra.mxu0 0.0
        %5384 = vmatprep.subr.mxu0 0.0
        %5385 = vmatpush1.msra.mxu0 0.0
        %5386 = vmatprep.subr.mxu0 0.0
        %5387 = vmatpush1.msra.mxu0 0.0
        %5388 = vmatprep.subr.mxu0 0.0
        %5389 = vmatpush1.msra.mxu0 0.0
        %5390 = vmatprep.subr.mxu0 0.0
        %5391 = vmatpush1.msra.mxu0 0.0
        %5392 = vmatprep.subr.mxu0 0.0
        %5393 = vmatpush1.msra.mxu0 0.0
        %5394 = vmatprep.subr.mxu0 0.0
        %5395 = vmatpush1.msra.mxu0 0.0
        %5396 = vmatprep.subr.mxu0 0.0
        %5397 = vmatpush1.msra.mxu0 0.0
        %5398 = vmatprep.subr.mxu0 0.0
        %5399 = vmatpush1.msra.mxu0 0.0
        %5400 = vmatprep.subr.mxu0 0.0
        %5401 = vmatpush1.msra.mxu0 0.0
        %5402 = vmatprep.subr.mxu0 0.0
        %5403 = vmatpush1.msra.mxu0 0.0
        %5404 = vmatprep.subr.mxu0 0.0
        %5405 = vmatpush1.msra.mxu0 0.0
        %5406 = vmatprep.subr.mxu0 0.0
        %5407 = vmatpush1.msra.mxu0 0.0
        %5408 = vmatprep.subr.mxu0 0.0
        %5409 = vmatpush1.msra.mxu0 0.0
        %5410 = vmatprep.subr.mxu0 0.0
        %5411 = vmatpush1.msra.mxu0 0.0
        %5412 = vmatprep.subr.mxu0 0.0
        %5413 = vmatpush1.msra.mxu0 0.0
        %5414 = vmatprep.subr.mxu0 0.0
        %5415 = vmatpush1.msra.mxu0 0.0
        %5416 = vmatprep.subr.mxu0 0.0
        %5417 = vmatpush1.msra.mxu0 0.0
        %5418 = vmatprep.mubr.f32.mxu0 0.0
        %5419 = vmatmul.mubr.f32.gmra.mrb[0].mxu0 %v5343
        %v5420 = vpop.f32.mrb[0].mxu0
        %v5421 = vadd.f32 %v5339, %v5420
        %v5422 = vpop.f32.mrb[0].mxu0
        %5423 = vmatprep.mubr.f32.mxu0 0.0
        %5424 = vmatmul.mubr.f32.gmra.mrb[0].mxu0 %v5346
        %v5425 = vpop.f32.mrb[0].mxu0
        %v5426 = vadd.f32 %v5339, %v5425
        %v5427 = vpop.f32.mrb[0].mxu0
        %5428 = vmatprep.mubr.f32.mxu0 0.0
        %5429 = vmatmul.mubr.f32.gmra.mrb[0].mxu0 %v5349
        %v5430 = vpop.f32.mrb[0].mxu0
        %v5431 = vadd.f32 %v5339, %v5430
        %v5432 = vpop.f32.mrb[0].mxu0
        %5433 = vmatprep.mubr.f32.mxu0 0.0
        %5434 = vmatmul.mubr.f32.gmra.mrb[0].mxu0 %v5352
        %v5435 = vpop.f32.mrb[0].mxu0
        %v5436 = vadd.f32 %v5339, %v5435
        %v5437 = vpop.f32.mrb[0].mxu0
        %5438 = vdwg.mxu0
        %v5439 = vld [vmem:[%s7] sm:$0xff]
        %v5440 = vld [vmem:[%s7 + $0x8] sm:$0xff]
        %v5441 = vld [vmem:[%s7 + $0x10] sm:$0xff]
        %v5442 = vld [vmem:[%s7 + $0x18] sm:$0xff]
        %v5443 = vld [vmem:[%s8] sm:$0x1]
        %v5445 = vlaneseq
        %v5446 = vshrl.u32 %v5445, 7
        %v5447 = vsub.s32 0, %v5446
        %v5448 = vrot.slane %v5443, %v5447
        %v5451 = vsel %vm5341, %v5326, 0
        %v5454 = vsel %vm5341, %v5327, 0
        %v5457 = vsel %vm5341, %v5328, 0
        %v5460 = vsel %vm5341, %v5329, 0
        %5462 = vmatprep.subr.mxu0 0.0
        %5463 = vmatpush1.msra.mxu0 %v5439
        %5464 = vmatprep.subr.mxu0 0.0
        %5465 = vmatpush1.msra.mxu0 %v5440
        %5466 = vmatprep.subr.mxu0 0.0
        %5467 = vmatpush1.msra.mxu0 %v5441
        %5468 = vmatprep.subr.mxu0 0.0
        %5469 = vmatpush1.msra.mxu0 %v5442
        %5470 = vmatprep.subr.mxu0 0.0
        %5471 = vmatpush1.msra.mxu0 0.0
        %5472 = vmatprep.subr.mxu0 0.0
        %5473 = vmatpush1.msra.mxu0 0.0
        %5474 = vmatprep.subr.mxu0 0.0
        %5475 = vmatpush1.msra.mxu0 0.0
        %5476 = vmatprep.subr.mxu0 0.0
        %5477 = vmatpush1.msra.mxu0 0.0
        %5478 = vmatprep.subr.mxu0 0.0
        %5479 = vmatpush1.msra.mxu0 0.0
        %5480 = vmatprep.subr.mxu0 0.0
        %5481 = vmatpush1.msra.mxu0 0.0
        %5482 = vmatprep.subr.mxu0 0.0
        %5483 = vmatpush1.msra.mxu0 0.0
        %5484 = vmatprep.subr.mxu0 0.0
        %5485 = vmatpush1.msra.mxu0 0.0
        %5486 = vmatprep.subr.mxu0 0.0
        %5487 = vmatpush1.msra.mxu0 0.0
        %5488 = vmatprep.subr.mxu0 0.0
        %5489 = vmatpush1.msra.mxu0 0.0
        %5490 = vmatprep.subr.mxu0 0.0
        %5491 = vmatpush1.msra.mxu0 0.0
        %5492 = vmatprep.subr.mxu0 0.0
        %5493 = vmatpush1.msra.mxu0 0.0
        %5494 = vmatprep.subr.mxu0 0.0
        %5495 = vmatpush1.msra.mxu0 0.0
        %5496 = vmatprep.subr.mxu0 0.0
        %5497 = vmatpush1.msra.mxu0 0.0
        %5498 = vmatprep.subr.mxu0 0.0
        %5499 = vmatpush1.msra.mxu0 0.0
        %5500 = vmatprep.subr.mxu0 0.0
        %5501 = vmatpush1.msra.mxu0 0.0
        %5502 = vmatprep.subr.mxu0 0.0
        %5503 = vmatpush1.msra.mxu0 0.0
        %5504 = vmatprep.subr.mxu0 0.0
        %5505 = vmatpush1.msra.mxu0 0.0
        %5506 = vmatprep.subr.mxu0 0.0
        %5507 = vmatpush1.msra.mxu0 0.0
        %5508 = vmatprep.subr.mxu0 0.0
        %5509 = vmatpush1.msra.mxu0 0.0
        %5510 = vmatprep.subr.mxu0 0.0
        %5511 = vmatpush1.msra.mxu0 0.0
        %5512 = vmatprep.subr.mxu0 0.0
        %5513 = vmatpush1.msra.mxu0 0.0
        %5514 = vmatprep.subr.mxu0 0.0
        %5515 = vmatpush1.msra.mxu0 0.0
        %5516 = vmatprep.subr.mxu0 0.0
        %5517 = vmatpush1.msra.mxu0 0.0
        %5518 = vmatprep.subr.mxu0 0.0
        %5519 = vmatpush1.msra.mxu0 0.0
        %5520 = vmatprep.subr.mxu0 0.0
        %5521 = vmatpush1.msra.mxu0 0.0
        %5522 = vmatprep.subr.mxu0 0.0
        %5523 = vmatpush1.msra.mxu0 0.0
        %5524 = vmatprep.subr.mxu0 0.0
        %5525 = vmatpush1.msra.mxu0 0.0
        %5526 = vmatprep.mubr.f32.mxu0 0.0
        %5527 = vmatmul.mubr.f32.gmra.mrb[0].mxu0 %v5451
        %v5528 = vpop.f32.mrb[0].mxu0
        %v5529 = vadd.f32 %v5448, %v5528
        %v5530 = vpop.f32.mrb[0].mxu0
        %5531 = vmatprep.mubr.f32.mxu0 0.0
        %5532 = vmatmul.mubr.f32.gmra.mrb[0].mxu0 %v5454
        %v5533 = vpop.f32.mrb[0].mxu0
        %v5534 = vadd.f32 %v5448, %v5533
        %v5535 = vpop.f32.mrb[0].mxu0
        %5536 = vmatprep.mubr.f32.mxu0 0.0
        %5537 = vmatmul.mubr.f32.gmra.mrb[0].mxu0 %v5457
        %v5538 = vpop.f32.mrb[0].mxu0
        %v5539 = vadd.f32 %v5448, %v5538
        %v5540 = vpop.f32.mrb[0].mxu0
        %5541 = vmatprep.mubr.f32.mxu0 0.0
        %5542 = vmatmul.mubr.f32.gmra.mrb[0].mxu0 %v5460
        %v5543 = vpop.f32.mrb[0].mxu0
        %v5544 = vadd.f32 %v5448, %v5543
        %v5545 = vpop.f32.mrb[0].mxu0
        %5546 = vdwg.mxu0
        %5547 = vst.msk [vmem:[%s494] sm:$0xff] %vm528, %v5421
        %5548 = vst.msk [vmem:[%s494 + $0x8] sm:$0xff] %vm528, %v5426
        %5549 = vst.msk [vmem:[%s494 + $0x10] sm:$0xff] %vm528, %v5431
        %5550 = vst.msk [vmem:[%s494 + $0x18] sm:$0xff] %vm528, %v5436
        %5551 = vst.msk [vmem:[%s500] sm:$0xff] %vm528, %v5529
        %5552 = vst.msk [vmem:[%s500 + $0x8] sm:$0xff] %vm528, %v5534
        %5553 = vst.msk [vmem:[%s500 + $0x10] sm:$0xff] %vm528, %v5539
        %5554 = vst.msk [vmem:[%s500 + $0x18] sm:$0xff] %vm528, %v5544
        %s5555 = sand.u32 %s247, 1
        %s5556 = sand.u32 %s247, 1
        %s5557 = smul.addr %s5556, 32
        %s5558 = scalar_lea.vmem [#allocation8], %s5557
        %s5559 = sand.u32 %s275, 1
        %s5560 = sand.u32 %s275, 1
        %s5561 = smul.addr %s5560, 32
        %s5562 = scalar_lea.vmem [#allocation9], %s5561
        // Predicated region
        $region137: #{complex_lstm_forward.1} parent=123 // pred_check
          %p5563 = pneg %p257
        $region138: #{complex_lstm_forward.1} parent=123 // pred_check_branch
          %5565 = sbr.rel (%p5563) target = $region140
        $region139: #{complex_lstm_forward.1} parent=123 // pred_region
          %s5566 = smul.u32 2, %s26
          %s5567 = smul.u32 2, %s27
          %s5568 = smul.addr %s5566, 4
          %s5569 = sadd.s32 %s5567, %s5568
          %s5570 = smul.addr %s5569, 8
          %s5571 = scalar_lea.vmem %s9, %s5570
          // Predicated region
          $region141: #{complex_lstm_forward.1} parent=139 // pred_check
            _
          $region142: #{complex_lstm_forward.1} parent=139 // pred_check_branch
            %5573 = sbr.rel (0) target = $region144
          $region143: #{complex_lstm_forward.1} parent=139 // pred_region
            // Predicated region
            $region145: #{complex_lstm_forward.1} parent=143 // pred_check
              _
            $region146: #{complex_lstm_forward.1} parent=143 // pred_check_branch
              %5575 = sbr.rel (0) target = $region148
            $region147: #{complex_lstm_forward.1} parent=143 // pred_region
              // Predicated region
              $region160: #{complex_lstm_forward.1} parent=147 // pred_check
                _
              $region161: #{complex_lstm_forward.1} parent=147 // pred_check_branch
                %5596 = sbr.rel (0) target = $region163
              $region162: #{complex_lstm_forward.1} parent=147 // pred_region
                loop: start=0, step=1, limit=1
                $region164: #{complex_lstm_forward.1} parent=162 // loop_pre_header
                  _
                $region165: #{complex_lstm_forward.1} parent=162 // loop_header
                  %s5598 = sphi 0, %s5602
                  %p5599 = scmp.ge.s32.totalorder %s5598, 1
                  %s5603 = sphi %s5558, %s5558
                  %s5604 = sphi %s5571, %s5571
                $region166: #{complex_lstm_forward.1} parent=162 // loop_header_branch
                  %5601 = sbr.rel (%p5599) target = $region170
                $region167: #{complex_lstm_forward.1} parent=162 // loop_body
                  %v5605 = vld [vmem:[%s5603] sm:$0xff]
                  %5606 = vst [vmem:[%s5604] sm:$0xff] %v5605
                  %v5607 = vld [vmem:[%s5603 + $0x8] sm:$0xff]
                  %5608 = vst [vmem:[%s5604 + $0x8] sm:$0xff] %v5607
                  %v5609 = vld [vmem:[%s5603 + $0x10] sm:$0xff]
                  %5610 = vst [vmem:[%s5604 + $0x20] sm:$0xff] %v5609
                  %v5611 = vld [vmem:[%s5603 + $0x18] sm:$0xff]
                  %5612 = vst [vmem:[%s5604 + $0x28] sm:$0xff] %v5611
                $region168: #{complex_lstm_forward.1} parent=162 // loop_footer
                  %s5602 = sadd.s32 1, %s5598
                $region169: #{complex_lstm_forward.1} parent=162 // loop_footer_branch
                  %5597 = sbr.rel target = $region165
                $region170: #{complex_lstm_forward.1} parent=162 // loop_exit
                  _
              $region163: #{complex_lstm_forward.1} parent=147 // pred_fallthru
                _
              // Predicated region
              $region171: #{complex_lstm_forward.1} parent=147 // pred_check
                _
              $region172: #{complex_lstm_forward.1} parent=147 // pred_check_branch
                %5614 = sbr.rel target = $region174
              $region173: #{complex_lstm_forward.1} parent=147 // pred_region
                _
              $region174: #{complex_lstm_forward.1} parent=147 // pred_fallthru
                _
            $region148: #{complex_lstm_forward.1} parent=143 // pred_fallthru
              _
            // Predicated region
            $region149: #{complex_lstm_forward.1} parent=143 // pred_check
              _
            $region150: #{complex_lstm_forward.1} parent=143 // pred_check_branch
              %5577 = sbr.rel target = $region152
            $region151: #{complex_lstm_forward.1} parent=143 // pred_region
              loop: start=0, step=1, limit=1
              $region153: #{complex_lstm_forward.1} parent=151 // loop_pre_header
                _
              $region154: #{complex_lstm_forward.1} parent=151 // loop_header
                %s5580 = sphi 0, %s5584
                %p5581 = scmp.ge.s32.totalorder %s5580, 1
                %s5585 = sphi %s5558, %s5558
                %s5586 = sphi %s5571, %s5571
              $region155: #{complex_lstm_forward.1} parent=151 // loop_header_branch
                %5583 = sbr.rel (%p5581) target = $region159
              $region156: #{complex_lstm_forward.1} parent=151 // loop_body
                %v5587 = vld [vmem:[%s5585] sm:$0xff]
                %5588 = vst [vmem:[%s5586] sm:$0xff] %v5587
                %v5589 = vld [vmem:[%s5585 + $0x8] sm:$0xff]
                %5590 = vst [vmem:[%s5586 + $0x8] sm:$0xff] %v5589
                %v5591 = vld [vmem:[%s5585 + $0x10] sm:$0xff]
                %5592 = vst [vmem:[%s5586 + $0x20] sm:$0xff] %v5591
                %v5593 = vld [vmem:[%s5585 + $0x18] sm:$0xff]
                %5594 = vst [vmem:[%s5586 + $0x28] sm:$0xff] %v5593
              $region157: #{complex_lstm_forward.1} parent=151 // loop_footer
                %s5584 = sadd.s32 1, %s5580
              $region158: #{complex_lstm_forward.1} parent=151 // loop_footer_branch
                %5579 = sbr.rel target = $region154
              $region159: #{complex_lstm_forward.1} parent=151 // loop_exit
                _
            $region152: #{complex_lstm_forward.1} parent=143 // pred_fallthru
              _
          $region144: #{complex_lstm_forward.1} parent=139 // pred_fallthru
            _
          %5615 = vnop
        $region140: #{complex_lstm_forward.1} parent=123 // pred_fallthru
          _
        // Predicated region
        $region175: #{complex_lstm_forward.1} parent=123 // pred_check
          %p5616 = pneg %p285
        $region176: #{complex_lstm_forward.1} parent=123 // pred_check_branch
          %5618 = sbr.rel (%p5616) target = $region178
        $region177: #{complex_lstm_forward.1} parent=123 // pred_region
          %s5619 = smul.u32 2, %s26
          %s5620 = smul.u32 2, %s27
          %s5621 = smul.addr %s5619, 4
          %s5622 = sadd.s32 %s5620, %s5621
          %s5623 = smul.addr %s5622, 8
          %s5624 = scalar_lea.vmem %s10, %s5623
          // Predicated region
          $region179: #{complex_lstm_forward.1} parent=177 // pred_check
            _
          $region180: #{complex_lstm_forward.1} parent=177 // pred_check_branch
            %5626 = sbr.rel (0) target = $region182
          $region181: #{complex_lstm_forward.1} parent=177 // pred_region
            // Predicated region
            $region183: #{complex_lstm_forward.1} parent=181 // pred_check
              _
            $region184: #{complex_lstm_forward.1} parent=181 // pred_check_branch
              %5628 = sbr.rel (0) target = $region186
            $region185: #{complex_lstm_forward.1} parent=181 // pred_region
              // Predicated region
              $region198: #{complex_lstm_forward.1} parent=185 // pred_check
                _
              $region199: #{complex_lstm_forward.1} parent=185 // pred_check_branch
                %5649 = sbr.rel (0) target = $region201
              $region200: #{complex_lstm_forward.1} parent=185 // pred_region
                loop: start=0, step=1, limit=1
                $region202: #{complex_lstm_forward.1} parent=200 // loop_pre_header
                  _
                $region203: #{complex_lstm_forward.1} parent=200 // loop_header
                  %s5651 = sphi 0, %s5655
                  %p5652 = scmp.ge.s32.totalorder %s5651, 1
                  %s5656 = sphi %s5562, %s5562
                  %s5657 = sphi %s5624, %s5624
                $region204: #{complex_lstm_forward.1} parent=200 // loop_header_branch
                  %5654 = sbr.rel (%p5652) target = $region208
                $region205: #{complex_lstm_forward.1} parent=200 // loop_body
                  %v5658 = vld [vmem:[%s5656] sm:$0xff]
                  %5659 = vst [vmem:[%s5657] sm:$0xff] %v5658
                  %v5660 = vld [vmem:[%s5656 + $0x8] sm:$0xff]
                  %5661 = vst [vmem:[%s5657 + $0x8] sm:$0xff] %v5660
                  %v5662 = vld [vmem:[%s5656 + $0x10] sm:$0xff]
                  %5663 = vst [vmem:[%s5657 + $0x20] sm:$0xff] %v5662
                  %v5664 = vld [vmem:[%s5656 + $0x18] sm:$0xff]
                  %5665 = vst [vmem:[%s5657 + $0x28] sm:$0xff] %v5664
                $region206: #{complex_lstm_forward.1} parent=200 // loop_footer
                  %s5655 = sadd.s32 1, %s5651
                $region207: #{complex_lstm_forward.1} parent=200 // loop_footer_branch
                  %5650 = sbr.rel target = $region203
                $region208: #{complex_lstm_forward.1} parent=200 // loop_exit
                  _
              $region201: #{complex_lstm_forward.1} parent=185 // pred_fallthru
                _
              // Predicated region
              $region209: #{complex_lstm_forward.1} parent=185 // pred_check
                _
              $region210: #{complex_lstm_forward.1} parent=185 // pred_check_branch
                %5667 = sbr.rel target = $region212
              $region211: #{complex_lstm_forward.1} parent=185 // pred_region
                _
              $region212: #{complex_lstm_forward.1} parent=185 // pred_fallthru
                _
            $region186: #{complex_lstm_forward.1} parent=181 // pred_fallthru
              _
            // Predicated region
            $region187: #{complex_lstm_forward.1} parent=181 // pred_check
              _
            $region188: #{complex_lstm_forward.1} parent=181 // pred_check_branch
              %5630 = sbr.rel target = $region190
            $region189: #{complex_lstm_forward.1} parent=181 // pred_region
              loop: start=0, step=1, limit=1
              $region191: #{complex_lstm_forward.1} parent=189 // loop_pre_header
                _
              $region192: #{complex_lstm_forward.1} parent=189 // loop_header
                %s5633 = sphi 0, %s5637
                %p5634 = scmp.ge.s32.totalorder %s5633, 1
                %s5638 = sphi %s5562, %s5562
                %s5639 = sphi %s5624, %s5624
              $region193: #{complex_lstm_forward.1} parent=189 // loop_header_branch
                %5636 = sbr.rel (%p5634) target = $region197
              $region194: #{complex_lstm_forward.1} parent=189 // loop_body
                %v5640 = vld [vmem:[%s5638] sm:$0xff]
                %5641 = vst [vmem:[%s5639] sm:$0xff] %v5640
                %v5642 = vld [vmem:[%s5638 + $0x8] sm:$0xff]
                %5643 = vst [vmem:[%s5639 + $0x8] sm:$0xff] %v5642
                %v5644 = vld [vmem:[%s5638 + $0x10] sm:$0xff]
                %5645 = vst [vmem:[%s5639 + $0x20] sm:$0xff] %v5644
                %v5646 = vld [vmem:[%s5638 + $0x18] sm:$0xff]
                %5647 = vst [vmem:[%s5639 + $0x28] sm:$0xff] %v5646
              $region195: #{complex_lstm_forward.1} parent=189 // loop_footer
                %s5637 = sadd.s32 1, %s5633
              $region196: #{complex_lstm_forward.1} parent=189 // loop_footer_branch
                %5632 = sbr.rel target = $region192
              $region197: #{complex_lstm_forward.1} parent=189 // loop_exit
                _
            $region190: #{complex_lstm_forward.1} parent=181 // pred_fallthru
              _
          $region182: #{complex_lstm_forward.1} parent=177 // pred_fallthru
            _
          %5668 = vnop
        $region178: #{complex_lstm_forward.1} parent=123 // pred_fallthru
          _
      $region124: #{complex_lstm_forward.1} parent=5 // pred_fallthru
        _
      %p5669 = scmp.le.s32.totalorder 2, %s17
      // Predicated region
      $region213: #{complex_lstm_forward.1} parent=5 // pred_check
        %p5670 = pneg %p5669
      $region214: #{complex_lstm_forward.1} parent=5 // pred_check_branch
        %5672 = sbr.rel (%p5670) target = $region216
      $region215: #{complex_lstm_forward.1} parent=5 // pred_region
        %s5673 = ssub.s32 %s17, 2
        // Predicated region
        $region217: #{complex_lstm_forward.1} parent=215 // pred_check
          %p5674 = pneg %p263
        $region218: #{complex_lstm_forward.1} parent=215 // pred_check_branch
          %5676 = sbr.rel (%p5674) target = $region220
        $region219: #{complex_lstm_forward.1} parent=215 // pred_region
          %s5677 = sand.u32 %s248, 1
          %s5678 = sand.u32 %s248, 1
          %s5679 = smul.addr %s5678, 32
          %s5680 = scalar_lea.vmem [#allocation8], %s5679
        $region220: #{complex_lstm_forward.1} parent=215 // pred_fallthru
          _
        // Predicated region
        $region221: #{complex_lstm_forward.1} parent=215 // pred_check
          %p5681 = pneg %p291
        $region222: #{complex_lstm_forward.1} parent=215 // pred_check_branch
          %5683 = sbr.rel (%p5681) target = $region224
        $region223: #{complex_lstm_forward.1} parent=215 // pred_region
          %s5684 = sand.u32 %s276, 1
          %s5685 = sand.u32 %s276, 1
          %s5686 = smul.addr %s5685, 32
          %s5687 = scalar_lea.vmem [#allocation9], %s5686
        $region224: #{complex_lstm_forward.1} parent=215 // pred_fallthru
          _
      $region216: #{complex_lstm_forward.1} parent=5 // pred_fallthru
        _
    $region6: #{complex_lstm_forward.1} parent=1 // loop_footer
      %s21 = sadd.s32 1, %s17
    $region7: #{complex_lstm_forward.1} parent=1 // loop_footer_branch
      %16 = sbr.rel target = $region3
    $region8: #{complex_lstm_forward.1} parent=1 // loop_exit
      _

</llo_original>
